<compile_context>
chip_gen: v5e
topology: v5e:2x2
jax: 0.10.0
libtpu: 0.0.40
codegen_flags: <defaults>
</compile_context>

<pallas_src>
import functools

import jax
import jax.numpy as jnp
from jax.experimental import pallas as pl
from jax.experimental.pallas import tpu as pltpu


def _ssa_kernel(H, W, N, x_ref, w1_ref, w2_ref, bias_ref, mw1_ref, mb1_ref,
                mw2_ref, mb2_ref, sa_ref, out_ref, patch_ref):
    C = x_ref.shape[0]
    L = x_ref.shape[1]                       # B_TILE * N (lane axis, dense)
    B_TILE = L // N
    x = x_ref[...]                           # (C, L)

    # ---- per-lane, per-image coordinates (static, computed once) ------------
    lane = jax.lax.broadcasted_iota(jnp.int32, (1, L), 1)

    def imod(a, m):
        if m & (m - 1) == 0:                 # power of two -> bitwise AND
            return a & (m - 1)
        q = jnp.floor((a.astype(jnp.float32) + 0.5) * (1.0 / m)).astype(jnp.int32)
        return a - q * m

    p = imod(lane, N)                        # per-image flattened pixel index
    wc = imod(p, W)                          # per-image column index

    # 3x3 taps: lane-roll amount (over the whole folded block) + float border
    # mask based on per-image coordinates (None == fully valid).  The masks
    # zero exactly the lanes that would otherwise pick up data from the
    # neighboring image (or block wrap-around).
    taps = []
    for kh in range(3):
        for kw in range(3):
            dh, dw = kh - 1, kw - 1
            shift = (-(dh * W + dw)) % L
            conds = []
            if dh < 0:
                conds.append(p >= (-dh) * W)
            if dh > 0:
                conds.append(p < (H - dh) * W)
            if dw < 0:
                conds.append(wc >= -dw)
            if dw > 0:
                conds.append(wc < W - dw)
            if conds:
                m = conds[0]
                for c in conds[1:]:
                    m = m & c
                maskf = m.astype(jnp.float32)
            else:
                maskf = None
            taps.append((shift, maskf))

    def shifted(v, shift, maskf):
        r = pltpu.roll(v, shift, 1) if shift != 0 else v
        return r if maskf is None else r * maskf

    def conv3x3(v, w_ref_, bcol):
        # im2col patch built tap-by-tap into VMEM scratch (low vreg pressure),
        # then one lane-wide MXU matmul (C, 9C) @ (9C, B_TILE*N).  BN scale is
        # pre-folded into w_ref_, BN shift + conv bias into bcol.
        for k, (s, m) in enumerate(taps):
            patch_ref[k * C:(k + 1) * C, :] = shifted(v, s, m).astype(patch_ref.dtype)
        return jnp.dot(w_ref_[...], patch_ref[...],
                       preferred_element_type=jnp.float32) + bcol

    bias = bias_ref[...]                     # (C, 2): [bn1-folded, bn2-folded]

    # ---- conv1 -> bn1 -> relu ------------------------------------------------
    h1 = jnp.maximum(conv3x3(x, w1_ref, bias[:, 0:1]), 0.0)
    # ---- conv1 applied again (as in the PyTorch forward) -> bn2 ---------------
    x1 = conv3x3(h1, w2_ref, bias[:, 1:2])

    # ---- Spectral attention: per-image pooled columns, batched shared MLP ----
    cols = []
    for b in range(B_TILE):                  # avg columns, then max columns
        sl = x1[:, b * N:(b + 1) * N]        # lane-aligned static slice
        cols.append(jnp.mean(sl, axis=1, keepdims=True))
    for b in range(B_TILE):
        sl = x1[:, b * N:(b + 1) * N]
        cols.append(jnp.max(sl, axis=1, keepdims=True))
    v = jnp.concatenate(cols, axis=1)        # (C, 2*B_TILE)

    hmlp = jnp.maximum(
        jnp.dot(mw1_ref[...], v, preferred_element_type=jnp.float32)
        + mb1_ref[...], 0.0)                 # (ch, 2*B_TILE)
    omlp = jax.nn.sigmoid(
        jnp.dot(mw2_ref[...], hmlp, preferred_element_type=jnp.float32)
        + mb2_ref[...])                      # (C, 2*B_TILE)
    spe = jax.nn.sigmoid(omlp[:, :B_TILE] + omlp[:, B_TILE:])   # (C, B_TILE)

    # Broadcast each image's per-channel gate across that image's lanes.
    spe_full = jnp.zeros_like(x1)
    for b in range(B_TILE):
        mb = ((lane >= b * N) & (lane < (b + 1) * N)).astype(jnp.float32)
        spe_full = spe_full + mb * spe[:, b:b + 1]
    x2 = x1 * spe_full

    # ---- Spatial attention: 3x3 conv (2 -> 1 channels) on the VPU ------------
    ch_avg = jnp.mean(x2, axis=0, keepdims=True)           # (1, L)
    ch_max = jnp.max(x2, axis=0, keepdims=True)            # (1, L)
    rowsel = jax.lax.broadcasted_iota(jnp.int32, (2, L), 0) == 0
    am = jnp.where(rowsel, ch_avg, ch_max)                 # (2, L): [avg; max]
    sa = sa_ref[...]                                       # (2, 10): W | [sab;0]
    acc = jnp.zeros((2, L), jnp.float32)
    for k, (s, m) in enumerate(taps):
        acc = acc + sa[:, k:k + 1] * shifted(am, s, m)
    spa = jax.nn.sigmoid(jnp.sum(acc, axis=0, keepdims=True) + sa[0:1, 9:10])
    x3 = x2 * spa

    # ---- residual + relu (lane-dense unmasked store) --------------------------
    out_ref[...] = jnp.maximum(x3 * x1 + x, 0.0)


def init_params(key, C):
    ch = max(C // 8, 1)
    ks = jax.random.split(key, 10)
    p = {
        # conv1 weight in HWIO layout (kh, kw, Cin, Cout), bias (C,)
        'w1': jax.random.normal(ks[0], (3, 3, C, C), jnp.float32) * 0.1,
        'b1': jax.random.normal(ks[1], (C,), jnp.float32) * 0.1,
        # BatchNorm params; running stats at PyTorch defaults (mean=0, var=1)
        'bn1_gamma': 1.0 + 0.05 * jax.random.normal(ks[2], (C,), jnp.float32),
        'bn1_beta': 0.05 * jax.random.normal(ks[3], (C,), jnp.float32),
        'bn1_mean': jnp.zeros((C,), jnp.float32),
        'bn1_var': jnp.ones((C,), jnp.float32),
        'bn2_gamma': 1.0 + 0.05 * jax.random.normal(ks[4], (C,), jnp.float32),
        'bn2_beta': 0.05 * jax.random.normal(ks[5], (C,), jnp.float32),
        'bn2_mean': jnp.zeros((C,), jnp.float32),
        'bn2_var': jnp.ones((C,), jnp.float32),
        # Spectral_attention SharedMLP: Linear(C, C//8), Linear(C//8, C)
        'mw1': jax.random.normal(ks[6], (C, ch), jnp.float32) * 0.2,
        'mb1': 0.05 * jax.random.normal(ks[7], (ch,), jnp.float32),
        'mw2': jax.random.normal(ks[8], (ch, C), jnp.float32) * 0.2,
        'mb2': 0.05 * jax.random.normal(ks[9], (C,), jnp.float32),
        # Spatial_attention conv: 2 -> 1, 3x3, pad 1 (HWIO), scalar bias
        'saw': jax.random.normal(jax.random.fold_in(key, 100), (3, 3, 2, 1),
                                 jnp.float32) * 0.2,
        'sab': jnp.float32(0.03),
    }
    return p


def ssa_forward(x_nchw, p, *, b_tile=None, conv_dtype=jnp.float32):
    B, C, H, W = x_nchw.shape
    N = H * W
    ch = p['mw1'].shape[1]
    eps = 1e-3

    if b_tile is None:
        # >= 2 grid steps when B >= 2 keeps both v7x TensorCores busy
        # ("parallel" grid axis); cap so the f32 im2col scratch stays < ~5 MiB,
        # well under every generation's scoped-VMEM default.
        b_tile = max(1, min(pl.cdiv(B, 2), 32))
    num_tiles = pl.cdiv(B, b_tile)
    Bp = num_tiles * b_tile
    L_TILE = b_tile * N

    # Layout/alignment guards for the roll-based im2col (see review notes).
    assert C % 8 == 0, "channel count must be a multiple of 8 (sublane tiling)"
    assert L_TILE % 128 == 0, "b_tile * H * W must be a multiple of 128 (lane tiling)"
    assert p['w1'].shape[2] == p['w1'].shape[3] == C, "conv1 applied twice needs Cin == Cout"

    xf = x_nchw.astype(jnp.float32)
    if Bp != B:
        xf = jnp.pad(xf, ((0, Bp - B), (0, 0), (0, 0), (0, 0)))
    # (Bp, C, H, W) -> (C, Bp*N); lane index = b*N + h*W + w (batch folded
    # into the lane axis so the kernel is fully lane-dense).
    xl = jnp.transpose(xf.reshape(Bp, C, N), (1, 0, 2)).reshape(C, Bp * N)

    # Fold eval-mode BN (scale/shift) directly into the conv weights & biases.
    bn1s = p['bn1_gamma'] / jnp.sqrt(p['bn1_var'] + eps)
    bn1b = p['bn1_beta'] - p['bn1_mean'] * bn1s
    bn2s = p['bn2_gamma'] / jnp.sqrt(p['bn2_var'] + eps)
    bn2b = p['bn2_beta'] - p['bn2_mean'] * bn2s

    # conv1 HWIO (3,3,Cin,Cout) -> im2col weight matrix (Cout, 9*Cin),
    # element [co, k*C + ci] = w[kh, kw, ci, co] with k = kh*3 + kw.
    w1m = jnp.transpose(p['w1'].reshape(9 * C, C))                 # (C, 9C)
    w_bn1 = (bn1s[:, None] * w1m).astype(conv_dtype)
    w_bn2 = (bn2s[:, None] * w1m).astype(conv_dtype)
    bias = jnp.stack([bn1s * p['b1'] + bn1b,
                      bn2s * p['b1'] + bn2b], axis=1)              # (C, 2)

    mw1t = jnp.transpose(p['mw1'])                                 # (ch, C)
    mb1c = p['mb1'].reshape(ch, 1)
    mw2t = jnp.transpose(p['mw2'])                                 # (C, ch)
    mb2c = p['mb2'].reshape(C, 1)
    saw_cm = jnp.transpose(p['saw'].reshape(9, 2))                 # (2, 9) channel-major
    sab_col = jnp.array([1.0, 0.0], jnp.float32).reshape(2, 1) * p['sab']
    sa = jnp.concatenate([saw_cm, sab_col], axis=1)                # (2, 10)

    kernel = pl.pallas_call(
        functools.partial(_ssa_kernel, H, W, N),
        out_shape=jax.ShapeDtypeStruct((C, Bp * N), jnp.float32),
        grid_spec=pltpu.PrefetchScalarGridSpec(
            num_scalar_prefetch=0,
            grid=(num_tiles,),
            in_specs=[
                pl.BlockSpec((C, L_TILE), lambda g: (0, g)),       # x (lane-folded batch)
                pl.BlockSpec((C, 9 * C), lambda g: (0, 0)),        # conv W, bn1-folded
                pl.BlockSpec((C, 9 * C), lambda g: (0, 0)),        # conv W, bn2-folded
                pl.BlockSpec((C, 2), lambda g: (0, 0)),            # folded conv biases
                pl.BlockSpec((ch, C), lambda g: (0, 0)),           # mlp W1^T
                pl.BlockSpec((ch, 1), lambda g: (0, 0)),           # mlp b1
                pl.BlockSpec((C, ch), lambda g: (0, 0)),           # mlp W2^T
                pl.BlockSpec((C, 1), lambda g: (0, 0)),            # mlp b2
                pl.BlockSpec((2, 10), lambda g: (0, 0)),           # spatial conv W | bias
            ],
            out_specs=pl.BlockSpec((C, L_TILE), lambda g: (0, g)),
            scratch_shapes=[pltpu.VMEM((9 * C, L_TILE), conv_dtype)],  # im2col patch
        ),
        compiler_params=pltpu.CompilerParams(dimension_semantics=("parallel",)),
    )
    out = kernel(xl, w_bn1, w_bn2, bias, mw1t, mb1c, mw2t, mb2c, sa)
    out = out.reshape(C, Bp, N).transpose(1, 0, 2)[:B].reshape(B, C, H, W)
    return out


def reference_forward(x_nchw, p):
    """Pure-JAX reference mirroring the PyTorch forward (eval-mode BN)."""
    eps = 1e-3
    x = jnp.transpose(x_nchw, (0, 2, 3, 1)).astype(jnp.float32)

    def conv(inp, w, b):
        return jax.lax.conv_general_dilated(
            inp, w, (1, 1), ((1, 1), (1, 1)),
            dimension_numbers=('NHWC', 'HWIO', 'NHWC')) + b

    def bn(inp, g, bta, m, v):
        return (inp - m) / jnp.sqrt(v + eps) * g + bta

    y = jax.nn.relu(bn(conv(x, p['w1'], p['b1']),
                       p['bn1_gamma'], p['bn1_beta'], p['bn1_mean'], p['bn1_var']))
    x1 = bn(conv(y, p['w1'], p['b1']),
            p['bn2_gamma'], p['bn2_beta'], p['bn2_mean'], p['bn2_var'])

    avg = jnp.mean(x1, axis=(1, 2))
    mx = jnp.max(x1, axis=(1, 2))

    def mlp(v):
        h = jax.nn.relu(v @ p['mw1'] + p['mb1'])
        return jax.nn.sigmoid(h @ p['mw2'] + p['mb2'])

    spe = jax.nn.sigmoid(mlp(avg) + mlp(mx))                      # (B, C)
    x2 = x1 * spe[:, None, None, :]

    sp_in = jnp.concatenate([jnp.mean(x2, axis=3, keepdims=True),
                             jnp.max(x2, axis=3, keepdims=True)], axis=3)
    spa = jax.nn.sigmoid(conv(sp_in, p['saw'], p['sab']))
    x3 = x2 * spa
    out = jax.nn.relu(x3 * x1 + x)
    return jnp.transpose(out, (0, 3, 1, 2))


if __name__ == "__main__":
    key = jax.random.PRNGKey(0)
    B, C, H, W = 8, 16, 16, 16          # in_chanels == out_chanel == 16
    kx, kp = jax.random.split(key)
    x = jax.random.normal(kx, (B, C, H, W), jnp.float32)
    params = init_params(kp, C)

    # f32 matmul operands: bit-accurate vs the pure-JAX reference.
    out = ssa_forward(x, params)                     # b_tile=4 -> grid=(2,)
    jax.block_until_ready(out)
    ref = reference_forward(x, params)
    max_err = float(jnp.max(jnp.abs(out - ref)))
    assert jnp.allclose(out, ref, atol=5e-4, rtol=1e-3), f"max_err={max_err}"

    # bf16 matmul operands (f32 accumulation): ~2x MXU throughput on v6e/v7x.
    # Loose sanity bound — two chained bf16 convs exceed the strict 5e-4 atol.
    out_bf16 = ssa_forward(x, params, conv_dtype=jnp.bfloat16)
    jax.block_until_ready(out_bf16)
    err_bf16 = float(jnp.max(jnp.abs(out_bf16 - ref)))
    assert jnp.isfinite(err_bf16) and err_bf16 < 0.5, f"bf16 max_err={err_bf16}"

    print("KERNEL_OK")
</pallas_src>

<mosaic_0001>
module attributes {stable_mosaic.version = 11 : i64} {
  func.func @_ssa_kernel(%arg0: i32, %arg1: memref<16x1024xf32, #tpu.memory_space<vmem>>, %arg2: memref<16x144xf32, #tpu.memory_space<vmem>>, %arg3: memref<16x144xf32, #tpu.memory_space<vmem>>, %arg4: memref<16x2xf32, #tpu.memory_space<vmem>>, %arg5: memref<2x16xf32, #tpu.memory_space<vmem>>, %arg6: memref<2x1xf32, #tpu.memory_space<vmem>>, %arg7: memref<16x2xf32, #tpu.memory_space<vmem>>, %arg8: memref<16x1xf32, #tpu.memory_space<vmem>>, %arg9: memref<2x10xf32, #tpu.memory_space<vmem>>, %arg10: memref<16x1024xf32, #tpu.memory_space<vmem>>, %arg11: memref<144x1024xf32, #tpu.memory_space<vmem>>) attributes {dimension_semantics = [#tpu.dimension_semantics<parallel>], iteration_bounds = array<i64: 2>, scalar_prefetch = 0 : i64, scratch_operands = 1 : i64, tpu.core_type = #tpu.core_type<tc>, window_params = [{transform_indices = @transform_0, window_bounds = array<i64: 16, 1024>}, {pipeline_mode = #tpu.pipeline_mode<synchronous>, transform_indices = @transform_1, window_bounds = array<i64: 16, 144>}, {pipeline_mode = #tpu.pipeline_mode<synchronous>, transform_indices = @transform_2, window_bounds = array<i64: 16, 144>}, {pipeline_mode = #tpu.pipeline_mode<synchronous>, transform_indices = @transform_3, window_bounds = array<i64: 16, 2>}, {pipeline_mode = #tpu.pipeline_mode<synchronous>, transform_indices = @transform_4, window_bounds = array<i64: 2, 16>}, {pipeline_mode = #tpu.pipeline_mode<synchronous>, transform_indices = @transform_5, window_bounds = array<i64: 2, 1>}, {pipeline_mode = #tpu.pipeline_mode<synchronous>, transform_indices = @transform_6, window_bounds = array<i64: 16, 2>}, {pipeline_mode = #tpu.pipeline_mode<synchronous>, transform_indices = @transform_7, window_bounds = array<i64: 16, 1>}, {pipeline_mode = #tpu.pipeline_mode<synchronous>, transform_indices = @transform_8, window_bounds = array<i64: 2, 10>}, {transform_indices = @transform_9, window_bounds = array<i64: 16, 1024>}]} {
    %c0 = arith.constant 0 : index
    %c0_0 = arith.constant 0 : index
    %0 = vector.load %arg1[%c0, %c0_0] : memref<16x1024xf32, #tpu.memory_space<vmem>>, vector<16x1024xf32>
    %1 = tpu.iota {dimensions = array<i32: 1>} : vector<1x1024xi32>
    %c255_i32 = arith.constant 255 : i32
    %2 = vector.broadcast %c255_i32 : i32 to vector<1x1024xi32>
    %3 = arith.andi %1, %2 : vector<1x1024xi32>
    %c15_i32 = arith.constant 15 : i32
    %4 = vector.broadcast %c15_i32 : i32 to vector<1x1024xi32>
    %5 = arith.andi %3, %4 : vector<1x1024xi32>
    %c16_i32 = arith.constant 16 : i32
    %6 = vector.broadcast %c16_i32 : i32 to vector<1x1024xi32>
    %7 = arith.cmpi sge, %3, %6 : vector<1x1024xi32>
    %c1_i32 = arith.constant 1 : i32
    %8 = vector.broadcast %c1_i32 : i32 to vector<1x1024xi32>
    %9 = arith.cmpi sge, %5, %8 : vector<1x1024xi32>
    %10 = arith.andi %7, %9 : vector<1x1024xi1>
    %11 = arith.extui %10 : vector<1x1024xi1> to vector<1x1024xi32>
    %12 = arith.sitofp %11 : vector<1x1024xi32> to vector<1x1024xf32>
    %c16_i32_1 = arith.constant 16 : i32
    %13 = vector.broadcast %c16_i32_1 : i32 to vector<1x1024xi32>
    %14 = arith.cmpi sge, %3, %13 : vector<1x1024xi32>
    %15 = arith.extui %14 : vector<1x1024xi1> to vector<1x1024xi32>
    %16 = arith.sitofp %15 : vector<1x1024xi32> to vector<1x1024xf32>
    %c16_i32_2 = arith.constant 16 : i32
    %17 = vector.broadcast %c16_i32_2 : i32 to vector<1x1024xi32>
    %18 = arith.cmpi sge, %3, %17 : vector<1x1024xi32>
    %c15_i32_3 = arith.constant 15 : i32
    %19 = vector.broadcast %c15_i32_3 : i32 to vector<1x1024xi32>
    %20 = arith.cmpi slt, %5, %19 : vector<1x1024xi32>
    %21 = arith.andi %18, %20 : vector<1x1024xi1>
    %22 = arith.extui %21 : vector<1x1024xi1> to vector<1x1024xi32>
    %23 = arith.sitofp %22 : vector<1x1024xi32> to vector<1x1024xf32>
    %c1_i32_4 = arith.constant 1 : i32
    %24 = vector.broadcast %c1_i32_4 : i32 to vector<1x1024xi32>
    %25 = arith.cmpi sge, %5, %24 : vector<1x1024xi32>
    %26 = arith.extui %25 : vector<1x1024xi1> to vector<1x1024xi32>
    %27 = arith.sitofp %26 : vector<1x1024xi32> to vector<1x1024xf32>
    %c15_i32_5 = arith.constant 15 : i32
    %28 = vector.broadcast %c15_i32_5 : i32 to vector<1x1024xi32>
    %29 = arith.cmpi slt, %5, %28 : vector<1x1024xi32>
    %30 = arith.extui %29 : vector<1x1024xi1> to vector<1x1024xi32>
    %31 = arith.sitofp %30 : vector<1x1024xi32> to vector<1x1024xf32>
    %c240_i32 = arith.constant 240 : i32
    %32 = vector.broadcast %c240_i32 : i32 to vector<1x1024xi32>
    %33 = arith.cmpi slt, %3, %32 : vector<1x1024xi32>
    %c1_i32_6 = arith.constant 1 : i32
    %34 = vector.broadcast %c1_i32_6 : i32 to vector<1x1024xi32>
    %35 = arith.cmpi sge, %5, %34 : vector<1x1024xi32>
    %36 = arith.andi %33, %35 : vector<1x1024xi1>
    %37 = arith.extui %36 : vector<1x1024xi1> to vector<1x1024xi32>
    %38 = arith.sitofp %37 : vector<1x1024xi32> to vector<1x1024xf32>
    %c240_i32_7 = arith.constant 240 : i32
    %39 = vector.broadcast %c240_i32_7 : i32 to vector<1x1024xi32>
    %40 = arith.cmpi slt, %3, %39 : vector<1x1024xi32>
    %41 = arith.extui %40 : vector<1x1024xi1> to vector<1x1024xi32>
    %42 = arith.sitofp %41 : vector<1x1024xi32> to vector<1x1024xf32>
    %c240_i32_8 = arith.constant 240 : i32
    %43 = vector.broadcast %c240_i32_8 : i32 to vector<1x1024xi32>
    %44 = arith.cmpi slt, %3, %43 : vector<1x1024xi32>
    %c15_i32_9 = arith.constant 15 : i32
    %45 = vector.broadcast %c15_i32_9 : i32 to vector<1x1024xi32>
    %46 = arith.cmpi slt, %5, %45 : vector<1x1024xi32>
    %47 = arith.andi %44, %46 : vector<1x1024xi1>
    %48 = arith.extui %47 : vector<1x1024xi1> to vector<1x1024xi32>
    %49 = arith.sitofp %48 : vector<1x1024xi32> to vector<1x1024xf32>
    %c0_10 = arith.constant 0 : index
    %c0_11 = arith.constant 0 : index
    %50 = vector.load %arg4[%c0_10, %c0_11] : memref<16x2xf32, #tpu.memory_space<vmem>>, vector<16x2xf32>
    %51 = vector.extract_strided_slice %50 {offsets = [0, 0], sizes = [16, 1], strides = [1, 1]} : vector<16x2xf32> to vector<16x1xf32>
    %c17_i32 = arith.constant 17 : i32
    %52 = tpu.dynamic_rotate %0 by %c17_i32 dim 1 : vector<16x1024xf32>, i32 -> vector<16x1024xf32>
    %53 = vector.broadcast %12 : vector<1x1024xf32> to vector<16x1024xf32>
    %54 = arith.mulf %52, %53 : vector<16x1024xf32>
    %c0_12 = arith.constant 0 : index
    %c0_13 = arith.constant 0 : index
    %55 = vector.load %arg11[%c0_12, %c0_13] : memref<144x1024xf32, #tpu.memory_space<vmem>>, vector<16x1024xf32>
    tpu.vector_store %arg11[%c0_12, %c0_13], %54 {strides = array<i32>} : memref<144x1024xf32, #tpu.memory_space<vmem>>, vector<16x1024xf32>,
    %c16_i32_14 = arith.constant 16 : i32
    %56 = tpu.dynamic_rotate %0 by %c16_i32_14 dim 1 : vector<16x1024xf32>, i32 -> vector<16x1024xf32>
    %57 = vector.broadcast %16 : vector<1x1024xf32> to vector<16x1024xf32>
    %58 = arith.mulf %56, %57 : vector<16x1024xf32>
    %c16 = arith.constant 16 : index
    %c0_15 = arith.constant 0 : index
    %59 = vector.load %arg11[%c16, %c0_15] : memref<144x1024xf32, #tpu.memory_space<vmem>>, vector<16x1024xf32>
    tpu.vector_store %arg11[%c16, %c0_15], %58 {strides = array<i32>} : memref<144x1024xf32, #tpu.memory_space<vmem>>, vector<16x1024xf32>,
    %c15_i32_16 = arith.constant 15 : i32
    %60 = tpu.dynamic_rotate %0 by %c15_i32_16 dim 1 : vector<16x1024xf32>, i32 -> vector<16x1024xf32>
    %61 = vector.broadcast %23 : vector<1x1024xf32> to vector<16x1024xf32>
    %62 = arith.mulf %60, %61 : vector<16x1024xf32>
    %c32 = arith.constant 32 : index
    %c0_17 = arith.constant 0 : index
    %63 = vector.load %arg11[%c32, %c0_17] : memref<144x1024xf32, #tpu.memory_space<vmem>>, vector<16x1024xf32>
    tpu.vector_store %arg11[%c32, %c0_17], %62 {strides = array<i32>} : memref<144x1024xf32, #tpu.memory_space<vmem>>, vector<16x1024xf32>,
    %c1_i32_18 = arith.constant 1 : i32
    %64 = tpu.dynamic_rotate %0 by %c1_i32_18 dim 1 : vector<16x1024xf32>, i32 -> vector<16x1024xf32>
    %65 = vector.broadcast %27 : vector<1x1024xf32> to vector<16x1024xf32>
    %66 = arith.mulf %64, %65 : vector<16x1024xf32>
    %c48 = arith.constant 48 : index
    %c0_19 = arith.constant 0 : index
    %67 = vector.load %arg11[%c48, %c0_19] : memref<144x1024xf32, #tpu.memory_space<vmem>>, vector<16x1024xf32>
    tpu.vector_store %arg11[%c48, %c0_19], %66 {strides = array<i32>} : memref<144x1024xf32, #tpu.memory_space<vmem>>, vector<16x1024xf32>,
    %c64 = arith.constant 64 : index
    %c0_20 = arith.constant 0 : index
    %68 = vector.load %arg11[%c64, %c0_20] : memref<144x1024xf32, #tpu.memory_space<vmem>>, vector<16x1024xf32>
    tpu.vector_store %arg11[%c64, %c0_20], %0 {strides = array<i32>} : memref<144x1024xf32, #tpu.memory_space<vmem>>, vector<16x1024xf32>,
    %c1023_i32 = arith.constant 1023 : i32
    %69 = tpu.dynamic_rotate %0 by %c1023_i32 dim 1 : vector<16x1024xf32>, i32 -> vector<16x1024xf32>
    %70 = vector.broadcast %31 : vector<1x1024xf32> to vector<16x1024xf32>
    %71 = arith.mulf %69, %70 : vector<16x1024xf32>
    %c80 = arith.constant 80 : index
    %c0_21 = arith.constant 0 : index
    %72 = vector.load %arg11[%c80, %c0_21] : memref<144x1024xf32, #tpu.memory_space<vmem>>, vector<16x1024xf32>
    tpu.vector_store %arg11[%c80, %c0_21], %71 {strides = array<i32>} : memref<144x1024xf32, #tpu.memory_space<vmem>>, vector<16x1024xf32>,
    %c1009_i32 = arith.constant 1009 : i32
    %73 = tpu.dynamic_rotate %0 by %c1009_i32 dim 1 : vector<16x1024xf32>, i32 -> vector<16x1024xf32>
    %74 = vector.broadcast %38 : vector<1x1024xf32> to vector<16x1024xf32>
    %75 = arith.mulf %73, %74 : vector<16x1024xf32>
    %c96 = arith.constant 96 : index
    %c0_22 = arith.constant 0 : index
    %76 = vector.load %arg11[%c96, %c0_22] : memref<144x1024xf32, #tpu.memory_space<vmem>>, vector<16x1024xf32>
    tpu.vector_store %arg11[%c96, %c0_22], %75 {strides = array<i32>} : memref<144x1024xf32, #tpu.memory_space<vmem>>, vector<16x1024xf32>,
    %c1008_i32 = arith.constant 1008 : i32
    %77 = tpu.dynamic_rotate %0 by %c1008_i32 dim 1 : vector<16x1024xf32>, i32 -> vector<16x1024xf32>
    %78 = vector.broadcast %42 : vector<1x1024xf32> to vector<16x1024xf32>
    %79 = arith.mulf %77, %78 : vector<16x1024xf32>
    %c112 = arith.constant 112 : index
    %c0_23 = arith.constant 0 : index
    %80 = vector.load %arg11[%c112, %c0_23] : memref<144x1024xf32, #tpu.memory_space<vmem>>, vector<16x1024xf32>
    tpu.vector_store %arg11[%c112, %c0_23], %79 {strides = array<i32>} : memref<144x1024xf32, #tpu.memory_space<vmem>>, vector<16x1024xf32>,
    %c1007_i32 = arith.constant 1007 : i32
    %81 = tpu.dynamic_rotate %0 by %c1007_i32 dim 1 : vector<16x1024xf32>, i32 -> vector<16x1024xf32>
    %82 = vector.broadcast %49 : vector<1x1024xf32> to vector<16x1024xf32>
    %83 = arith.mulf %81, %82 : vector<16x1024xf32>
    %c128 = arith.constant 128 : index
    %c0_24 = arith.constant 0 : index
    %84 = vector.load %arg11[%c128, %c0_24] : memref<144x1024xf32, #tpu.memory_space<vmem>>, vector<16x1024xf32>
    tpu.vector_store %arg11[%c128, %c0_24], %83 {strides = array<i32>} : memref<144x1024xf32, #tpu.memory_space<vmem>>, vector<16x1024xf32>,
    %c0_25 = arith.constant 0 : index
    %c0_26 = arith.constant 0 : index
    %85 = vector.load %arg2[%c0_25, %c0_26] : memref<16x144xf32, #tpu.memory_space<vmem>>, vector<16x144xf32>
    %c0_27 = arith.constant 0 : index
    %c0_28 = arith.constant 0 : index
    %86 = vector.load %arg11[%c0_27, %c0_28] : memref<144x1024xf32, #tpu.memory_space<vmem>>, vector<144x1024xf32>
    %cst = arith.constant dense<0.000000e+00> : vector<16x1024xf32>
    %87 = tpu.matmul %85, %86, %cst {dimension_numbers = #tpu.dot_dimension_numbers<[1], [0], [0], [1], [0, 0, 1, 1], [], []>} : vector<16x144xf32>, vector<144x1024xf32>, vector<16x1024xf32> -> vector<16x1024xf32>
    %88 = vector.broadcast %51 : vector<16x1xf32> to vector<16x1024xf32>
    %89 = arith.addf %87, %88 : vector<16x1024xf32>
    %cst_29 = arith.constant 0.000000e+00 : f32
    %90 = vector.broadcast %cst_29 : f32 to vector<16x1024xf32>
    %91 = arith.maximumf %89, %90 : vector<16x1024xf32>
    %92 = vector.extract_strided_slice %50 {offsets = [0, 1], sizes = [16, 1], strides = [1, 1]} : vector<16x2xf32> to vector<16x1xf32>
    %c17_i32_30 = arith.constant 17 : i32
    %93 = tpu.dynamic_rotate %91 by %c17_i32_30 dim 1 : vector<16x1024xf32>, i32 -> vector<16x1024xf32>
    %94 = vector.broadcast %12 : vector<1x1024xf32> to vector<16x1024xf32>
    %95 = arith.mulf %93, %94 : vector<16x1024xf32>
    %c0_31 = arith.constant 0 : index
    %c0_32 = arith.constant 0 : index
    %96 = vector.load %arg11[%c0_31, %c0_32] : memref<144x1024xf32, #tpu.memory_space<vmem>>, vector<16x1024xf32>
    tpu.vector_store %arg11[%c0_31, %c0_32], %95 {strides = array<i32>} : memref<144x1024xf32, #tpu.memory_space<vmem>>, vector<16x1024xf32>,
    %c16_i32_33 = arith.constant 16 : i32
    %97 = tpu.dynamic_rotate %91 by %c16_i32_33 dim 1 : vector<16x1024xf32>, i32 -> vector<16x1024xf32>
    %98 = vector.broadcast %16 : vector<1x1024xf32> to vector<16x1024xf32>
    %99 = arith.mulf %97, %98 : vector<16x1024xf32>
    %c16_34 = arith.constant 16 : index
    %c0_35 = arith.constant 0 : index
    %100 = vector.load %arg11[%c16_34, %c0_35] : memref<144x1024xf32, #tpu.memory_space<vmem>>, vector<16x1024xf32>
    tpu.vector_store %arg11[%c16_34, %c0_35], %99 {strides = array<i32>} : memref<144x1024xf32, #tpu.memory_space<vmem>>, vector<16x1024xf32>,
    %c15_i32_36 = arith.constant 15 : i32
    %101 = tpu.dynamic_rotate %91 by %c15_i32_36 dim 1 : vector<16x1024xf32>, i32 -> vector<16x1024xf32>
    %102 = vector.broadcast %23 : vector<1x1024xf32> to vector<16x1024xf32>
    %103 = arith.mulf %101, %102 : vector<16x1024xf32>
    %c32_37 = arith.constant 32 : index
    %c0_38 = arith.constant 0 : index
    %104 = vector.load %arg11[%c32_37, %c0_38] : memref<144x1024xf32, #tpu.memory_space<vmem>>, vector<16x1024xf32>
    tpu.vector_store %arg11[%c32_37, %c0_38], %103 {strides = array<i32>} : memref<144x1024xf32, #tpu.memory_space<vmem>>, vector<16x1024xf32>,
    %c1_i32_39 = arith.constant 1 : i32
    %105 = tpu.dynamic_rotate %91 by %c1_i32_39 dim 1 : vector<16x1024xf32>, i32 -> vector<16x1024xf32>
    %106 = vector.broadcast %27 : vector<1x1024xf32> to vector<16x1024xf32>
    %107 = arith.mulf %105, %106 : vector<16x1024xf32>
    %c48_40 = arith.constant 48 : index
    %c0_41 = arith.constant 0 : index
    %108 = vector.load %arg11[%c48_40, %c0_41] : memref<144x1024xf32, #tpu.memory_space<vmem>>, vector<16x1024xf32>
    tpu.vector_store %arg11[%c48_40, %c0_41], %107 {strides = array<i32>} : memref<144x1024xf32, #tpu.memory_space<vmem>>, vector<16x1024xf32>,
    %c64_42 = arith.constant 64 : index
    %c0_43 = arith.constant 0 : index
    %109 = vector.load %arg11[%c64_42, %c0_43] : memref<144x1024xf32, #tpu.memory_space<vmem>>, vector<16x1024xf32>
    tpu.vector_store %arg11[%c64_42, %c0_43], %91 {strides = array<i32>} : memref<144x1024xf32, #tpu.memory_space<vmem>>, vector<16x1024xf32>,
    %c1023_i32_44 = arith.constant 1023 : i32
    %110 = tpu.dynamic_rotate %91 by %c1023_i32_44 dim 1 : vector<16x1024xf32>, i32 -> vector<16x1024xf32>
    %111 = vector.broadcast %31 : vector<1x1024xf32> to vector<16x1024xf32>
    %112 = arith.mulf %110, %111 : vector<16x1024xf32>
    %c80_45 = arith.constant 80 : index
    %c0_46 = arith.constant 0 : index
    %113 = vector.load %arg11[%c80_45, %c0_46] : memref<144x1024xf32, #tpu.memory_space<vmem>>, vector<16x1024xf32>
    tpu.vector_store %arg11[%c80_45, %c0_46], %112 {strides = array<i32>} : memref<144x1024xf32, #tpu.memory_space<vmem>>, vector<16x1024xf32>,
    %c1009_i32_47 = arith.constant 1009 : i32
    %114 = tpu.dynamic_rotate %91 by %c1009_i32_47 dim 1 : vector<16x1024xf32>, i32 -> vector<16x1024xf32>
    %115 = vector.broadcast %38 : vector<1x1024xf32> to vector<16x1024xf32>
    %116 = arith.mulf %114, %115 : vector<16x1024xf32>
    %c96_48 = arith.constant 96 : index
    %c0_49 = arith.constant 0 : index
    %117 = vector.load %arg11[%c96_48, %c0_49] : memref<144x1024xf32, #tpu.memory_space<vmem>>, vector<16x1024xf32>
    tpu.vector_store %arg11[%c96_48, %c0_49], %116 {strides = array<i32>} : memref<144x1024xf32, #tpu.memory_space<vmem>>, vector<16x1024xf32>,
    %c1008_i32_50 = arith.constant 1008 : i32
    %118 = tpu.dynamic_rotate %91 by %c1008_i32_50 dim 1 : vector<16x1024xf32>, i32 -> vector<16x1024xf32>
    %119 = vector.broadcast %42 : vector<1x1024xf32> to vector<16x1024xf32>
    %120 = arith.mulf %118, %119 : vector<16x1024xf32>
    %c112_51 = arith.constant 112 : index
    %c0_52 = arith.constant 0 : index
    %121 = vector.load %arg11[%c112_51, %c0_52] : memref<144x1024xf32, #tpu.memory_space<vmem>>, vector<16x1024xf32>
    tpu.vector_store %arg11[%c112_51, %c0_52], %120 {strides = array<i32>} : memref<144x1024xf32, #tpu.memory_space<vmem>>, vector<16x1024xf32>,
    %c1007_i32_53 = arith.constant 1007 : i32
    %122 = tpu.dynamic_rotate %91 by %c1007_i32_53 dim 1 : vector<16x1024xf32>, i32 -> vector<16x1024xf32>
    %123 = vector.broadcast %49 : vector<1x1024xf32> to vector<16x1024xf32>
    %124 = arith.mulf %122, %123 : vector<16x1024xf32>
    %c128_54 = arith.constant 128 : index
    %c0_55 = arith.constant 0 : index
    %125 = vector.load %arg11[%c128_54, %c0_55] : memref<144x1024xf32, #tpu.memory_space<vmem>>, vector<16x1024xf32>
    tpu.vector_store %arg11[%c128_54, %c0_55], %124 {strides = array<i32>} : memref<144x1024xf32, #tpu.memory_space<vmem>>, vector<16x1024xf32>,
    %c0_56 = arith.constant 0 : index
    %c0_57 = arith.constant 0 : index
    %126 = vector.load %arg3[%c0_56, %c0_57] : memref<16x144xf32, #tpu.memory_space<vmem>>, vector<16x144xf32>
    %c0_58 = arith.constant 0 : index
    %c0_59 = arith.constant 0 : index
    %127 = vector.load %arg11[%c0_58, %c0_59] : memref<144x1024xf32, #tpu.memory_space<vmem>>, vector<144x1024xf32>
    %cst_60 = arith.constant dense<0.000000e+00> : vector<16x1024xf32>
    %128 = tpu.matmul %126, %127, %cst_60 {dimension_numbers = #tpu.dot_dimension_numbers<[1], [0], [0], [1], [0, 0, 1, 1], [], []>} : vector<16x144xf32>, vector<144x1024xf32>, vector<16x1024xf32> -> vector<16x1024xf32>
    %129 = vector.broadcast %92 : vector<16x1xf32> to vector<16x1024xf32>
    %130 = arith.addf %128, %129 : vector<16x1024xf32>
    %131 = vector.extract_strided_slice %130 {offsets = [0, 0], sizes = [16, 256], strides = [1, 1]} : vector<16x1024xf32> to vector<16x256xf32>
    %cst_61 = arith.constant dense<0.000000e+00> : vector<16xf32>
    %132 = vector.multi_reduction <add>, %131, %cst_61 [1] : vector<16x256xf32> to vector<16xf32>
    %133 = vector.shape_cast %132 : vector<16xf32> to vector<16x1xf32>
    %cst_62 = arith.constant 2.560000e+02 : f32
    %134 = vector.broadcast %cst_62 : f32 to vector<16x1xf32>
    %135 = arith.divf %133, %134 : vector<16x1xf32>
    %136 = vector.extract_strided_slice %130 {offsets = [0, 256], sizes = [16, 256], strides = [1, 1]} : vector<16x1024xf32> to vector<16x256xf32>
    %cst_63 = arith.constant dense<0.000000e+00> : vector<16xf32>
    %137 = vector.multi_reduction <add>, %136, %cst_63 [1] : vector<16x256xf32> to vector<16xf32>
    %138 = vector.shape_cast %137 : vector<16xf32> to vector<16x1xf32>
    %cst_64 = arith.constant 2.560000e+02 : f32
    %139 = vector.broadcast %cst_64 : f32 to vector<16x1xf32>
    %140 = arith.divf %138, %139 : vector<16x1xf32>
    %141 = vector.extract_strided_slice %130 {offsets = [0, 512], sizes = [16, 256], strides = [1, 1]} : vector<16x1024xf32> to vector<16x256xf32>
    %cst_65 = arith.constant dense<0.000000e+00> : vector<16xf32>
    %142 = vector.multi_reduction <add>, %141, %cst_65 [1] : vector<16x256xf32> to vector<16xf32>
    %143 = vector.shape_cast %142 : vector<16xf32> to vector<16x1xf32>
    %cst_66 = arith.constant 2.560000e+02 : f32
    %144 = vector.broadcast %cst_66 : f32 to vector<16x1xf32>
    %145 = arith.divf %143, %144 : vector<16x1xf32>
    %146 = vector.extract_strided_slice %130 {offsets = [0, 768], sizes = [16, 256], strides = [1, 1]} : vector<16x1024xf32> to vector<16x256xf32>
    %cst_67 = arith.constant dense<0.000000e+00> : vector<16xf32>
    %147 = vector.multi_reduction <add>, %146, %cst_67 [1] : vector<16x256xf32> to vector<16xf32>
    %148 = vector.shape_cast %147 : vector<16xf32> to vector<16x1xf32>
    %cst_68 = arith.constant 2.560000e+02 : f32
    %149 = vector.broadcast %cst_68 : f32 to vector<16x1xf32>
    %150 = arith.divf %148, %149 : vector<16x1xf32>
    %151 = vector.extract_strided_slice %130 {offsets = [0, 0], sizes = [16, 256], strides = [1, 1]} : vector<16x1024xf32> to vector<16x256xf32>
    %cst_69 = arith.constant dense<0xFF800000> : vector<16xf32>
    %152 = vector.multi_reduction <maximumf>, %151, %cst_69 [1] : vector<16x256xf32> to vector<16xf32>
    %153 = vector.shape_cast %152 : vector<16xf32> to vector<16x1xf32>
    %154 = vector.extract_strided_slice %130 {offsets = [0, 256], sizes = [16, 256], strides = [1, 1]} : vector<16x1024xf32> to vector<16x256xf32>
    %cst_70 = arith.constant dense<0xFF800000> : vector<16xf32>
    %155 = vector.multi_reduction <maximumf>, %154, %cst_70 [1] : vector<16x256xf32> to vector<16xf32>
    %156 = vector.shape_cast %155 : vector<16xf32> to vector<16x1xf32>
    %157 = vector.extract_strided_slice %130 {offsets = [0, 512], sizes = [16, 256], strides = [1, 1]} : vector<16x1024xf32> to vector<16x256xf32>
    %cst_71 = arith.constant dense<0xFF800000> : vector<16xf32>
    %158 = vector.multi_reduction <maximumf>, %157, %cst_71 [1] : vector<16x256xf32> to vector<16xf32>
    %159 = vector.shape_cast %158 : vector<16xf32> to vector<16x1xf32>
    %160 = vector.extract_strided_slice %130 {offsets = [0, 768], sizes = [16, 256], strides = [1, 1]} : vector<16x1024xf32> to vector<16x256xf32>
    %cst_72 = arith.constant dense<0xFF800000> : vector<16xf32>
    %161 = vector.multi_reduction <maximumf>, %160, %cst_72 [1] : vector<16x256xf32> to vector<16xf32>
    %162 = vector.shape_cast %161 : vector<16xf32> to vector<16x1xf32>
    %163 = tpu.concatenate %135, %140, %145, %150, %153, %156, %159, %162 in 1 : vector<16x1xf32>, vector<16x1xf32>, vector<16x1xf32>, vector<16x1xf32>, vector<16x1xf32>, vector<16x1xf32>, vector<16x1xf32>, vector<16x1xf32> -> vector<16x8xf32>
    %c0_73 = arith.constant 0 : index
    %c0_74 = arith.constant 0 : index
    %164 = vector.load %arg5[%c0_73, %c0_74] : memref<2x16xf32, #tpu.memory_space<vmem>>, vector<2x16xf32>
    %cst_75 = arith.constant dense<0.000000e+00> : vector<2x8xf32>
    %165 = tpu.matmul %164, %163, %cst_75 {dimension_numbers = #tpu.dot_dimension_numbers<[1], [0], [0], [1], [0, 0, 1, 1], [], []>} : vector<2x16xf32>, vector<16x8xf32>, vector<2x8xf32> -> vector<2x8xf32>
    %c0_76 = arith.constant 0 : index
    %c0_77 = arith.constant 0 : index
    %166 = vector.load %arg6[%c0_76, %c0_77] : memref<2x1xf32, #tpu.memory_space<vmem>>, vector<2x1xf32>
    %167 = vector.broadcast %166 : vector<2x1xf32> to vector<2x8xf32>
    %168 = arith.addf %165, %167 : vector<2x8xf32>
    %cst_78 = arith.constant 0.000000e+00 : f32
    %169 = vector.broadcast %cst_78 : f32 to vector<2x8xf32>
    %170 = arith.maximumf %168, %169 : vector<2x8xf32>
    %c0_79 = arith.constant 0 : index
    %c0_80 = arith.constant 0 : index
    %171 = vector.load %arg7[%c0_79, %c0_80] : memref<16x2xf32, #tpu.memory_space<vmem>>, vector<16x2xf32>
    %cst_81 = arith.constant dense<0.000000e+00> : vector<16x8xf32>
    %172 = tpu.matmul %171, %170, %cst_81 {dimension_numbers = #tpu.dot_dimension_numbers<[1], [0], [0], [1], [0, 0, 1, 1], [], []>} : vector<16x2xf32>, vector<2x8xf32>, vector<16x8xf32> -> vector<16x8xf32>
    %c0_82 = arith.constant 0 : index
    %c0_83 = arith.constant 0 : index
    %173 = vector.load %arg8[%c0_82, %c0_83] : memref<16x1xf32, #tpu.memory_space<vmem>>, vector<16x1xf32>
    %174 = vector.broadcast %173 : vector<16x1xf32> to vector<16x8xf32>
    %175 = arith.addf %172, %174 : vector<16x8xf32>
    %176 = arith.negf %175 : vector<16x8xf32>
    %177 = math.exp %176 : vector<16x8xf32>
    %cst_84 = arith.constant 1.000000e+00 : f32
    %178 = vector.broadcast %cst_84 : f32 to vector<16x8xf32>
    %179 = arith.addf %178, %177 : vector<16x8xf32>
    %180 = arith.divf %178, %179 : vector<16x8xf32>
    %181 = vector.extract_strided_slice %180 {offsets = [0, 0], sizes = [16, 4], strides = [1, 1]} : vector<16x8xf32> to vector<16x4xf32>
    %182 = vector.extract_strided_slice %180 {offsets = [0, 4], sizes = [16, 4], strides = [1, 1]} : vector<16x8xf32> to vector<16x4xf32>
    %183 = arith.addf %181, %182 : vector<16x4xf32>
    %184 = arith.negf %183 : vector<16x4xf32>
    %185 = math.exp %184 : vector<16x4xf32>
    %cst_85 = arith.constant 1.000000e+00 : f32
    %186 = vector.broadcast %cst_85 : f32 to vector<16x4xf32>
    %187 = arith.addf %186, %185 : vector<16x4xf32>
    %188 = arith.divf %186, %187 : vector<16x4xf32>
    %cst_86 = arith.constant 0.000000e+00 : f32
    %189 = vector.broadcast %cst_86 : f32 to vector<16x1024xf32>
    %c0_i32 = arith.constant 0 : i32
    %190 = vector.broadcast %c0_i32 : i32 to vector<1x1024xi32>
    %191 = arith.cmpi sge, %1, %190 : vector<1x1024xi32>
    %c256_i32 = arith.constant 256 : i32
    %192 = vector.broadcast %c256_i32 : i32 to vector<1x1024xi32>
    %193 = arith.cmpi slt, %1, %192 : vector<1x1024xi32>
    %194 = arith.andi %191, %193 : vector<1x1024xi1>
    %195 = arith.extui %194 : vector<1x1024xi1> to vector<1x1024xi32>
    %196 = arith.sitofp %195 : vector<1x1024xi32> to vector<1x1024xf32>
    %197 = vector.extract_strided_slice %188 {offsets = [0, 0], sizes = [16, 1], strides = [1, 1]} : vector<16x4xf32> to vector<16x1xf32>
    %198 = vector.broadcast %196 : vector<1x1024xf32> to vector<16x1024xf32>
    %199 = vector.broadcast %197 : vector<16x1xf32> to vector<16x1024xf32>
    %200 = arith.mulf %198, %199 : vector<16x1024xf32>
    %201 = arith.addf %189, %200 : vector<16x1024xf32>
    %c256_i32_87 = arith.constant 256 : i32
    %202 = vector.broadcast %c256_i32_87 : i32 to vector<1x1024xi32>
    %203 = arith.cmpi sge, %1, %202 : vector<1x1024xi32>
    %c512_i32 = arith.constant 512 : i32
    %204 = vector.broadcast %c512_i32 : i32 to vector<1x1024xi32>
    %205 = arith.cmpi slt, %1, %204 : vector<1x1024xi32>
    %206 = arith.andi %203, %205 : vector<1x1024xi1>
    %207 = arith.extui %206 : vector<1x1024xi1> to vector<1x1024xi32>
    %208 = arith.sitofp %207 : vector<1x1024xi32> to vector<1x1024xf32>
    %209 = vector.extract_strided_slice %188 {offsets = [0, 1], sizes = [16, 1], strides = [1, 1]} : vector<16x4xf32> to vector<16x1xf32>
    %210 = vector.broadcast %208 : vector<1x1024xf32> to vector<16x1024xf32>
    %211 = vector.broadcast %209 : vector<16x1xf32> to vector<16x1024xf32>
    %212 = arith.mulf %210, %211 : vector<16x1024xf32>
    %213 = arith.addf %201, %212 : vector<16x1024xf32>
    %c512_i32_88 = arith.constant 512 : i32
    %214 = vector.broadcast %c512_i32_88 : i32 to vector<1x1024xi32>
    %215 = arith.cmpi sge, %1, %214 : vector<1x1024xi32>
    %c768_i32 = arith.constant 768 : i32
    %216 = vector.broadcast %c768_i32 : i32 to vector<1x1024xi32>
    %217 = arith.cmpi slt, %1, %216 : vector<1x1024xi32>
    %218 = arith.andi %215, %217 : vector<1x1024xi1>
    %219 = arith.extui %218 : vector<1x1024xi1> to vector<1x1024xi32>
    %220 = arith.sitofp %219 : vector<1x1024xi32> to vector<1x1024xf32>
    %221 = vector.extract_strided_slice %188 {offsets = [0, 2], sizes = [16, 1], strides = [1, 1]} : vector<16x4xf32> to vector<16x1xf32>
    %222 = vector.broadcast %220 : vector<1x1024xf32> to vector<16x1024xf32>
    %223 = vector.broadcast %221 : vector<16x1xf32> to vector<16x1024xf32>
    %224 = arith.mulf %222, %223 : vector<16x1024xf32>
    %225 = arith.addf %213, %224 : vector<16x1024xf32>
    %c768_i32_89 = arith.constant 768 : i32
    %226 = vector.broadcast %c768_i32_89 : i32 to vector<1x1024xi32>
    %227 = arith.cmpi sge, %1, %226 : vector<1x1024xi32>
    %c1024_i32 = arith.constant 1024 : i32
    %228 = vector.broadcast %c1024_i32 : i32 to vector<1x1024xi32>
    %229 = arith.cmpi slt, %1, %228 : vector<1x1024xi32>
    %230 = arith.andi %227, %229 : vector<1x1024xi1>
    %231 = arith.extui %230 : vector<1x1024xi1> to vector<1x1024xi32>
    %232 = arith.sitofp %231 : vector<1x1024xi32> to vector<1x1024xf32>
    %233 = vector.extract_strided_slice %188 {offsets = [0, 3], sizes = [16, 1], strides = [1, 1]} : vector<16x4xf32> to vector<16x1xf32>
    %234 = vector.broadcast %232 : vector<1x1024xf32> to vector<16x1024xf32>
    %235 = vector.broadcast %233 : vector<16x1xf32> to vector<16x1024xf32>
    %236 = arith.mulf %234, %235 : vector<16x1024xf32>
    %237 = arith.addf %225, %236 : vector<16x1024xf32>
    %238 = arith.mulf %130, %237 : vector<16x1024xf32>
    %cst_90 = arith.constant dense<0.000000e+00> : vector<1024xf32>
    %239 = vector.multi_reduction <add>, %238, %cst_90 [0] : vector<16x1024xf32> to vector<1024xf32>
    %240 = vector.shape_cast %239 : vector<1024xf32> to vector<1x1024xf32>
    %cst_91 = arith.constant 1.600000e+01 : f32
    %241 = vector.broadcast %cst_91 : f32 to vector<1x1024xf32>
    %242 = arith.divf %240, %241 : vector<1x1024xf32>
    %cst_92 = arith.constant dense<0xFF800000> : vector<1024xf32>
    %243 = vector.multi_reduction <maximumf>, %238, %cst_92 [0] : vector<16x1024xf32> to vector<1024xf32>
    %244 = vector.shape_cast %243 : vector<1024xf32> to vector<1x1024xf32>
    %245 = tpu.iota {dimensions = array<i32: 0>} : vector<2x1024xi32>
    %c0_i32_93 = arith.constant 0 : i32
    %246 = vector.broadcast %c0_i32_93 : i32 to vector<2x1024xi32>
    %247 = arith.cmpi eq, %245, %246 : vector<2x1024xi32>
    %248 = vector.shape_cast %242 : vector<1x1024xf32> to vector<1x1024xf32>
    %249 = vector.broadcast %248 : vector<1x1024xf32> to vector<2x1024xf32>
    %250 = vector.shape_cast %244 : vector<1x1024xf32> to vector<1x1024xf32>
    %251 = vector.broadcast %250 : vector<1x1024xf32> to vector<2x1024xf32>
    %252 = arith.select %247, %249, %251 : vector<2x1024xi1>, vector<2x1024xf32>
    %c0_94 = arith.constant 0 : index
    %c0_95 = arith.constant 0 : index
    %253 = vector.load %arg9[%c0_94, %c0_95] : memref<2x10xf32, #tpu.memory_space<vmem>>, vector<2x10xf32>
    %cst_96 = arith.constant 0.000000e+00 : f32
    %254 = vector.broadcast %cst_96 : f32 to vector<2x1024xf32>
    %255 = vector.extract_strided_slice %253 {offsets = [0, 0], sizes = [2, 1], strides = [1, 1]} : vector<2x10xf32> to vector<2x1xf32>
    %c17_i32_97 = arith.constant 17 : i32
    %256 = tpu.dynamic_rotate %252 by %c17_i32_97 dim 1 : vector<2x1024xf32>, i32 -> vector<2x1024xf32>
    %257 = vector.broadcast %12 : vector<1x1024xf32> to vector<2x1024xf32>
    %258 = arith.mulf %256, %257 : vector<2x1024xf32>
    %259 = vector.broadcast %255 : vector<2x1xf32> to vector<2x1024xf32>
    %260 = arith.mulf %259, %258 : vector<2x1024xf32>
    %261 = arith.addf %254, %260 : vector<2x1024xf32>
    %262 = vector.extract_strided_slice %253 {offsets = [0, 1], sizes = [2, 1], strides = [1, 1]} : vector<2x10xf32> to vector<2x1xf32>
    %c16_i32_98 = arith.constant 16 : i32
    %263 = tpu.dynamic_rotate %252 by %c16_i32_98 dim 1 : vector<2x1024xf32>, i32 -> vector<2x1024xf32>
    %264 = vector.broadcast %16 : vector<1x1024xf32> to vector<2x1024xf32>
    %265 = arith.mulf %263, %264 : vector<2x1024xf32>
    %266 = vector.broadcast %262 : vector<2x1xf32> to vector<2x1024xf32>
    %267 = arith.mulf %266, %265 : vector<2x1024xf32>
    %268 = arith.addf %261, %267 : vector<2x1024xf32>
    %269 = vector.extract_strided_slice %253 {offsets = [0, 2], sizes = [2, 1], strides = [1, 1]} : vector<2x10xf32> to vector<2x1xf32>
    %c15_i32_99 = arith.constant 15 : i32
    %270 = tpu.dynamic_rotate %252 by %c15_i32_99 dim 1 : vector<2x1024xf32>, i32 -> vector<2x1024xf32>
    %271 = vector.broadcast %23 : vector<1x1024xf32> to vector<2x1024xf32>
    %272 = arith.mulf %270, %271 : vector<2x1024xf32>
    %273 = vector.broadcast %269 : vector<2x1xf32> to vector<2x1024xf32>
    %274 = arith.mulf %273, %272 : vector<2x1024xf32>
    %275 = arith.addf %268, %274 : vector<2x1024xf32>
    %276 = vector.extract_strided_slice %253 {offsets = [0, 3], sizes = [2, 1], strides = [1, 1]} : vector<2x10xf32> to vector<2x1xf32>
    %c1_i32_100 = arith.constant 1 : i32
    %277 = tpu.dynamic_rotate %252 by %c1_i32_100 dim 1 : vector<2x1024xf32>, i32 -> vector<2x1024xf32>
    %278 = vector.broadcast %27 : vector<1x1024xf32> to vector<2x1024xf32>
    %279 = arith.mulf %277, %278 : vector<2x1024xf32>
    %280 = vector.broadcast %276 : vector<2x1xf32> to vector<2x1024xf32>
    %281 = arith.mulf %280, %279 : vector<2x1024xf32>
    %282 = arith.addf %275, %281 : vector<2x1024xf32>
    %283 = vector.extract_strided_slice %253 {offsets = [0, 4], sizes = [2, 1], strides = [1, 1]} : vector<2x10xf32> to vector<2x1xf32>
    %284 = vector.broadcast %283 : vector<2x1xf32> to vector<2x1024xf32>
    %285 = arith.mulf %284, %252 : vector<2x1024xf32>
    %286 = arith.addf %282, %285 : vector<2x1024xf32>
    %287 = vector.extract_strided_slice %253 {offsets = [0, 5], sizes = [2, 1], strides = [1, 1]} : vector<2x10xf32> to vector<2x1xf32>
    %c1023_i32_101 = arith.constant 1023 : i32
    %288 = tpu.dynamic_rotate %252 by %c1023_i32_101 dim 1 : vector<2x1024xf32>, i32 -> vector<2x1024xf32>
    %289 = vector.broadcast %31 : vector<1x1024xf32> to vector<2x1024xf32>
    %290 = arith.mulf %288, %289 : vector<2x1024xf32>
    %291 = vector.broadcast %287 : vector<2x1xf32> to vector<2x1024xf32>
    %292 = arith.mulf %291, %290 : vector<2x1024xf32>
    %293 = arith.addf %286, %292 : vector<2x1024xf32>
    %294 = vector.extract_strided_slice %253 {offsets = [0, 6], sizes = [2, 1], strides = [1, 1]} : vector<2x10xf32> to vector<2x1xf32>
    %c1009_i32_102 = arith.constant 1009 : i32
    %295 = tpu.dynamic_rotate %252 by %c1009_i32_102 dim 1 : vector<2x1024xf32>, i32 -> vector<2x1024xf32>
    %296 = vector.broadcast %38 : vector<1x1024xf32> to vector<2x1024xf32>
    %297 = arith.mulf %295, %296 : vector<2x1024xf32>
    %298 = vector.broadcast %294 : vector<2x1xf32> to vector<2x1024xf32>
    %299 = arith.mulf %298, %297 : vector<2x1024xf32>
    %300 = arith.addf %293, %299 : vector<2x1024xf32>
    %301 = vector.extract_strided_slice %253 {offsets = [0, 7], sizes = [2, 1], strides = [1, 1]} : vector<2x10xf32> to vector<2x1xf32>
    %c1008_i32_103 = arith.constant 1008 : i32
    %302 = tpu.dynamic_rotate %252 by %c1008_i32_103 dim 1 : vector<2x1024xf32>, i32 -> vector<2x1024xf32>
    %303 = vector.broadcast %42 : vector<1x1024xf32> to vector<2x1024xf32>
    %304 = arith.mulf %302, %303 : vector<2x1024xf32>
    %305 = vector.broadcast %301 : vector<2x1xf32> to vector<2x1024xf32>
    %306 = arith.mulf %305, %304 : vector<2x1024xf32>
    %307 = arith.addf %300, %306 : vector<2x1024xf32>
    %308 = vector.extract_strided_slice %253 {offsets = [0, 8], sizes = [2, 1], strides = [1, 1]} : vector<2x10xf32> to vector<2x1xf32>
    %c1007_i32_104 = arith.constant 1007 : i32
    %309 = tpu.dynamic_rotate %252 by %c1007_i32_104 dim 1 : vector<2x1024xf32>, i32 -> vector<2x1024xf32>
    %310 = vector.broadcast %49 : vector<1x1024xf32> to vector<2x1024xf32>
    %311 = arith.mulf %309, %310 : vector<2x1024xf32>
    %312 = vector.broadcast %308 : vector<2x1xf32> to vector<2x1024xf32>
    %313 = arith.mulf %312, %311 : vector<2x1024xf32>
    %314 = arith.addf %307, %313 : vector<2x1024xf32>
    %cst_105 = arith.constant dense<0.000000e+00> : vector<1024xf32>
    %315 = vector.multi_reduction <add>, %314, %cst_105 [0] : vector<2x1024xf32> to vector<1024xf32>
    %316 = vector.shape_cast %315 : vector<1024xf32> to vector<1x1024xf32>
    %317 = vector.extract_strided_slice %253 {offsets = [0, 9], sizes = [1, 1], strides = [1, 1]} : vector<2x10xf32> to vector<1x1xf32>
    %318 = vector.broadcast %317 : vector<1x1xf32> to vector<1x1024xf32>
    %319 = arith.addf %316, %318 : vector<1x1024xf32>
    %320 = arith.negf %319 : vector<1x1024xf32>
    %321 = math.exp %320 : vector<1x1024xf32>
    %cst_106 = arith.constant 1.000000e+00 : f32
    %322 = vector.broadcast %cst_106 : f32 to vector<1x1024xf32>
    %323 = arith.addf %322, %321 : vector<1x1024xf32>
    %324 = arith.divf %322, %323 : vector<1x1024xf32>
    %325 = vector.broadcast %324 : vector<1x1024xf32> to vector<16x1024xf32>
    %326 = arith.mulf %238, %325 : vector<16x1024xf32>
    %327 = arith.mulf %326, %130 : vector<16x1024xf32>
    %328 = arith.addf %327, %0 : vector<16x1024xf32>
    %cst_107 = arith.constant 0.000000e+00 : f32
    %329 = vector.broadcast %cst_107 : f32 to vector<16x1024xf32>
    %330 = arith.maximumf %328, %329 : vector<16x1024xf32>
    %c0_108 = arith.constant 0 : index
    %c0_109 = arith.constant 0 : index
    %331 = vector.load %arg10[%c0_108, %c0_109] : memref<16x1024xf32, #tpu.memory_space<vmem>>, vector<16x1024xf32>
    tpu.vector_store %arg10[%c0_108, %c0_109], %330 {strides = array<i32>} : memref<16x1024xf32, #tpu.memory_space<vmem>>, vector<16x1024xf32>,
    return
  }
  func.func @transform_0(%arg0: i32) -> (i32, i32) {
    %c0_i32 = arith.constant 0 : i32
    %c0_i32_0 = arith.constant 0 : i32
    return %c0_i32, %arg0 : i32, i32
  }
  func.func @transform_1(%arg0: i32) -> (i32, i32) {
    %c0_i32 = arith.constant 0 : i32
    %c0_i32_0 = arith.constant 0 : i32
    %c0_i32_1 = arith.constant 0 : i32
    return %c0_i32, %c0_i32_0 : i32, i32
  }
  func.func @transform_2(%arg0: i32) -> (i32, i32) {
    %c0_i32 = arith.constant 0 : i32
    %c0_i32_0 = arith.constant 0 : i32
    %c0_i32_1 = arith.constant 0 : i32
    return %c0_i32, %c0_i32_0 : i32, i32
  }
  func.func @transform_3(%arg0: i32) -> (i32, i32) {
    %c0_i32 = arith.constant 0 : i32
    %c0_i32_0 = arith.constant 0 : i32
    %c0_i32_1 = arith.constant 0 : i32
    return %c0_i32, %c0_i32_0 : i32, i32
  }
  func.func @transform_4(%arg0: i32) -> (i32, i32) {
    %c0_i32 = arith.constant 0 : i32
    %c0_i32_0 = arith.constant 0 : i32
    %c0_i32_1 = arith.constant 0 : i32
    return %c0_i32, %c0_i32_0 : i32, i32
  }
  func.func @transform_5(%arg0: i32) -> (i32, i32) {
    %c0_i32 = arith.constant 0 : i32
    %c0_i32_0 = arith.constant 0 : i32
    %c0_i32_1 = arith.constant 0 : i32
    return %c0_i32, %c0_i32_0 : i32, i32
  }
  func.func @transform_6(%arg0: i32) -> (i32, i32) {
    %c0_i32 = arith.constant 0 : i32
    %c0_i32_0 = arith.constant 0 : i32
    %c0_i32_1 = arith.constant 0 : i32
    return %c0_i32, %c0_i32_0 : i32, i32
  }
  func.func @transform_7(%arg0: i32) -> (i32, i32) {
    %c0_i32 = arith.constant 0 : i32
    %c0_i32_0 = arith.constant 0 : i32
    %c0_i32_1 = arith.constant 0 : i32
    return %c0_i32, %c0_i32_0 : i32, i32
  }
  func.func @transform_8(%arg0: i32) -> (i32, i32) {
    %c0_i32 = arith.constant 0 : i32
    %c0_i32_0 = arith.constant 0 : i32
    %c0_i32_1 = arith.constant 0 : i32
    return %c0_i32, %c0_i32_0 : i32, i32
  }
  func.func @transform_9(%arg0: i32) -> (i32, i32) {
    %c0_i32 = arith.constant 0 : i32
    %c0_i32_0 = arith.constant 0 : i32
    return %c0_i32, %arg0 : i32, i32
  }
}

</mosaic_0001>

<llo_original>
// kernel: tpu_custom_call.1
$region0: #{tpu_custom_call.1}
  #allocation0 [shape = 'u32[]', space=smem, size = 0x4, offset = 0x4, fixed_abs, tag = 'smem constant byte address 0x4 - core index']
  #allocation1 [shape = 'u32[72,128]{1,0:T(1,128)}', space=vmem, size = 0x9000, scoped, tag = 'internal scratch']
  #allocation2 [shape = 'f32[144,1024]{1,0:T(8,128)}', space=vmem, size = 0x90000, scoped, tag = 'scratch operand']
  %s0 = inlined_call_operand.hbm [shape: f32[16,2048], index: 0, kind: input, shape index: {}]
  %s1 = inlined_call_operand.vmem [shape: f32[16,144], index: 1, kind: input, shape index: {}]
  %s2 = inlined_call_operand.hbm [shape: f32[16,144], index: 2, kind: input, shape index: {}]
  %s3 = inlined_call_operand.vmem [shape: f32[16,2], index: 3, kind: input, shape index: {}]
  %s4 = inlined_call_operand.vmem [shape: f32[2,16], index: 4, kind: input, shape index: {}]
  %s5 = inlined_call_operand.vmem [shape: f32[2,1], index: 5, kind: input, shape index: {}]
  %s6 = inlined_call_operand.vmem [shape: f32[16,2], index: 6, kind: input, shape index: {}]
  %s7 = inlined_call_operand.vmem [shape: f32[16,1], index: 7, kind: input, shape index: {}]
  %s8 = inlined_call_operand.vmem [shape: f32[2,10], index: 8, kind: input, shape index: {}]
  %s9 = inlined_call_operand.hbm [shape: f32[16,2048], index: 9, kind: output, shape index: {}]
  %s10 = sld [smem:[#allocation0]]
  $region77: #{tpu_custom_call.1} parent=0
    _
  %s12 = ssub.s32 1, %s10
  %s13 = scalar_select 0, %s12, %s10
  $region1: #{tpu_custom_call.1} parent=0
    #allocation3 [shape = 'u8[131072]{0}', space=vmem, size = 0x20000, scoped, tag = 'input window, operand 0']
    #allocation4 [shape = 's32[2]{0}', space=sflag, size = 0x8, scoped, tag = 'scoped memory for tpu_custom_call.1']
    #allocation5 [shape = 's32[2]{0}', space=sflag, size = 0x8, scoped, tag = 'scoped memory for tpu_custom_call.1']
    #allocation6 [shape = 'u8[16384]{0}', space=vmem, size = 0x4000, scoped, tag = 'input window, operand 2, single buffered']
    #allocation7 [shape = 's32[1]{0}', space=sflag, size = 0x4, scoped, tag = 'scoped memory for tpu_custom_call.1']
    #allocation8 [shape = 'u8[131072]{0}', space=vmem, size = 0x20000, scoped, tag = 'output window, operand 0']
    %14 = vsyncpa [#allocation4], 0
    %s15 = scalar_lea.sflag [#allocation4], 1
    %16 = vsyncpa %s15, 0
    %17 = vsyncpa [#allocation7], 0
    %18 = vsyncpa [#allocation5], 0
    %s19 = scalar_lea.sflag [#allocation5], 1
    %20 = vsyncpa %s19, 0
    loop: start=0, step=1, limit=4
    $region2: #{tpu_custom_call.1} parent=1 // loop_pre_header
      _
    $region3: #{tpu_custom_call.1} parent=1 // loop_header
      %s22 = sphi 0, %s26
      %p23 = scmp.ge.s32.totalorder %s22, 4
      %s32 = sphi 0, %s34
      %s35 = sphi 0, %s32
      %s36 = sphi 0, %s35
      %s52 = sphi 0, %s36
      %s56 = sphi 0, %s56
      %s58 = sphi 0, %s56
      %s59 = sphi 0, %s58
      %s73 = sphi 0, %s59
      %s77 = sphi 0, %s77
      %s79 = sphi 0, %s77
      %s80 = sphi 0, %s79
      %s94 = sphi 0, %s80
      %s98 = sphi 0, %s98
      %s100 = sphi 0, %s98
      %s101 = sphi 0, %s100
      %s115 = sphi 0, %s101
      %s119 = sphi 0, %s119
      %s121 = sphi 0, %s119
      %s122 = sphi 0, %s121
      %s136 = sphi 0, %s122
      %s140 = sphi 0, %s140
      %s142 = sphi 0, %s140
      %s143 = sphi 0, %s142
      %s157 = sphi 0, %s143
      %s161 = sphi 0, %s161
      %s163 = sphi 0, %s161
      %s164 = sphi 0, %s163
      %s178 = sphi 0, %s164
      %s182 = sphi 0, %s182
      %s184 = sphi 0, %s182
      %s185 = sphi 0, %s184
      %s199 = sphi 0, %s185
      %s203 = sphi 0, %s203
      %s205 = sphi 0, %s203
      %s206 = sphi 0, %s205
      %s220 = sphi 0, %s206
      %s226 = sphi 0, %s228
      %s229 = sphi 0, %s226
      %s230 = sphi 0, %s229
      %s246 = sphi 0, %s230
    $region4: #{tpu_custom_call.1} parent=1 // loop_header_branch
      %25 = sbr.rel (%p23) target = $region8
    $region5: #{tpu_custom_call.1} parent=1 // loop_body
      %s27 = ssub.s32 %s22, 1
      %s28 = ssub.s32 %s22, 2
      %s29 = sadd.s32 %s22, 1
      %s30 = ssub.s32 %s22, %s29
      %p31 = scmp.eq.s32.totalorder %s30, 0
      %s33 = sadd.s32 %s32, 1
      %s34 = scalar_select %p31, %s32, %s33
      %p37 = pneg %p31
      %p38 = scmp.eq.s32.totalorder %s22, 1
      %p39 = por %p37, %p38
      %p40 = scmp.ne.s32.totalorder %s32, %s35
      %p41 = scmp.eq.s32.totalorder %s22, 0
      %p42 = por %p40, %p41
      %p43 = scmp.ne.s32.totalorder %s32, %s35
      %p44 = scmp.eq.s32.totalorder %s27, 1
      %p45 = por %p43, %p44
      %p46 = scmp.ne.s32.totalorder %s35, %s36
      %p47 = scmp.eq.s32.totalorder %s27, 0
      %p48 = por %p46, %p47
      %p49 = scmp.ne.s32.totalorder %s35, %s36
      %p50 = scmp.eq.s32.totalorder %s28, 1
      %p51 = por %p49, %p50
      %p53 = scmp.ne.s32.totalorder %s36, %s52
      %p54 = scmp.eq.s32.totalorder %s28, 0
      %p55 = por %p53, %p54
      %s57 = sadd.s32 %s56, 1
      %p60 = scmp.eq.s32.totalorder %s22, 1
      %p61 = scmp.ne.s32.totalorder %s56, %s58
      %p62 = scmp.eq.s32.totalorder %s22, 0
      %p63 = por %p61, %p62
      %p64 = scmp.ne.s32.totalorder %s56, %s58
      %p65 = scmp.eq.s32.totalorder %s27, 1
      %p66 = por %p64, %p65
      %p67 = scmp.ne.s32.totalorder %s58, %s59
      %p68 = scmp.eq.s32.totalorder %s27, 0
      %p69 = por %p67, %p68
      %p70 = scmp.ne.s32.totalorder %s58, %s59
      %p71 = scmp.eq.s32.totalorder %s28, 1
      %p72 = por %p70, %p71
      %p74 = scmp.ne.s32.totalorder %s59, %s73
      %p75 = scmp.eq.s32.totalorder %s28, 0
      %p76 = por %p74, %p75
      %s78 = sadd.s32 %s77, 1
      %p81 = scmp.eq.s32.totalorder %s22, 1
      %p82 = scmp.ne.s32.totalorder %s77, %s79
      %p83 = scmp.eq.s32.totalorder %s22, 0
      %p84 = por %p82, %p83
      %p85 = scmp.ne.s32.totalorder %s77, %s79
      %p86 = scmp.eq.s32.totalorder %s27, 1
      %p87 = por %p85, %p86
      %p88 = scmp.ne.s32.totalorder %s79, %s80
      %p89 = scmp.eq.s32.totalorder %s27, 0
      %p90 = por %p88, %p89
      %p91 = scmp.ne.s32.totalorder %s79, %s80
      %p92 = scmp.eq.s32.totalorder %s28, 1
      %p93 = por %p91, %p92
      %p95 = scmp.ne.s32.totalorder %s80, %s94
      %p96 = scmp.eq.s32.totalorder %s28, 0
      %p97 = por %p95, %p96
      %s99 = sadd.s32 %s98, 1
      %p102 = scmp.eq.s32.totalorder %s22, 1
      %p103 = scmp.ne.s32.totalorder %s98, %s100
      %p104 = scmp.eq.s32.totalorder %s22, 0
      %p105 = por %p103, %p104
      %p106 = scmp.ne.s32.totalorder %s98, %s100
      %p107 = scmp.eq.s32.totalorder %s27, 1
      %p108 = por %p106, %p107
      %p109 = scmp.ne.s32.totalorder %s100, %s101
      %p110 = scmp.eq.s32.totalorder %s27, 0
      %p111 = por %p109, %p110
      %p112 = scmp.ne.s32.totalorder %s100, %s101
      %p113 = scmp.eq.s32.totalorder %s28, 1
      %p114 = por %p112, %p113
      %p116 = scmp.ne.s32.totalorder %s101, %s115
      %p117 = scmp.eq.s32.totalorder %s28, 0
      %p118 = por %p116, %p117
      %s120 = sadd.s32 %s119, 1
      %p123 = scmp.eq.s32.totalorder %s22, 1
      %p124 = scmp.ne.s32.totalorder %s119, %s121
      %p125 = scmp.eq.s32.totalorder %s22, 0
      %p126 = por %p124, %p125
      %p127 = scmp.ne.s32.totalorder %s119, %s121
      %p128 = scmp.eq.s32.totalorder %s27, 1
      %p129 = por %p127, %p128
      %p130 = scmp.ne.s32.totalorder %s121, %s122
      %p131 = scmp.eq.s32.totalorder %s27, 0
      %p132 = por %p130, %p131
      %p133 = scmp.ne.s32.totalorder %s121, %s122
      %p134 = scmp.eq.s32.totalorder %s28, 1
      %p135 = por %p133, %p134
      %p137 = scmp.ne.s32.totalorder %s122, %s136
      %p138 = scmp.eq.s32.totalorder %s28, 0
      %p139 = por %p137, %p138
      %s141 = sadd.s32 %s140, 1
      %p144 = scmp.eq.s32.totalorder %s22, 1
      %p145 = scmp.ne.s32.totalorder %s140, %s142
      %p146 = scmp.eq.s32.totalorder %s22, 0
      %p147 = por %p145, %p146
      %p148 = scmp.ne.s32.totalorder %s140, %s142
      %p149 = scmp.eq.s32.totalorder %s27, 1
      %p150 = por %p148, %p149
      %p151 = scmp.ne.s32.totalorder %s142, %s143
      %p152 = scmp.eq.s32.totalorder %s27, 0
      %p153 = por %p151, %p152
      %p154 = scmp.ne.s32.totalorder %s142, %s143
      %p155 = scmp.eq.s32.totalorder %s28, 1
      %p156 = por %p154, %p155
      %p158 = scmp.ne.s32.totalorder %s143, %s157
      %p159 = scmp.eq.s32.totalorder %s28, 0
      %p160 = por %p158, %p159
      %s162 = sadd.s32 %s161, 1
      %p165 = scmp.eq.s32.totalorder %s22, 1
      %p166 = scmp.ne.s32.totalorder %s161, %s163
      %p167 = scmp.eq.s32.totalorder %s22, 0
      %p168 = por %p166, %p167
      %p169 = scmp.ne.s32.totalorder %s161, %s163
      %p170 = scmp.eq.s32.totalorder %s27, 1
      %p171 = por %p169, %p170
      %p172 = scmp.ne.s32.totalorder %s163, %s164
      %p173 = scmp.eq.s32.totalorder %s27, 0
      %p174 = por %p172, %p173
      %p175 = scmp.ne.s32.totalorder %s163, %s164
      %p176 = scmp.eq.s32.totalorder %s28, 1
      %p177 = por %p175, %p176
      %p179 = scmp.ne.s32.totalorder %s164, %s178
      %p180 = scmp.eq.s32.totalorder %s28, 0
      %p181 = por %p179, %p180
      %s183 = sadd.s32 %s182, 1
      %p186 = scmp.eq.s32.totalorder %s22, 1
      %p187 = scmp.ne.s32.totalorder %s182, %s184
      %p188 = scmp.eq.s32.totalorder %s22, 0
      %p189 = por %p187, %p188
      %p190 = scmp.ne.s32.totalorder %s182, %s184
      %p191 = scmp.eq.s32.totalorder %s27, 1
      %p192 = por %p190, %p191
      %p193 = scmp.ne.s32.totalorder %s184, %s185
      %p194 = scmp.eq.s32.totalorder %s27, 0
      %p195 = por %p193, %p194
      %p196 = scmp.ne.s32.totalorder %s184, %s185
      %p197 = scmp.eq.s32.totalorder %s28, 1
      %p198 = por %p196, %p197
      %p200 = scmp.ne.s32.totalorder %s185, %s199
      %p201 = scmp.eq.s32.totalorder %s28, 0
      %p202 = por %p200, %p201
      %s204 = sadd.s32 %s203, 1
      %p207 = scmp.eq.s32.totalorder %s22, 1
      %p208 = scmp.ne.s32.totalorder %s203, %s205
      %p209 = scmp.eq.s32.totalorder %s22, 0
      %p210 = por %p208, %p209
      %p211 = scmp.ne.s32.totalorder %s203, %s205
      %p212 = scmp.eq.s32.totalorder %s27, 1
      %p213 = por %p211, %p212
      %p214 = scmp.ne.s32.totalorder %s205, %s206
      %p215 = scmp.eq.s32.totalorder %s27, 0
      %p216 = por %p214, %p215
      %p217 = scmp.ne.s32.totalorder %s205, %s206
      %p218 = scmp.eq.s32.totalorder %s28, 1
      %p219 = por %p217, %p218
      %p221 = scmp.ne.s32.totalorder %s206, %s220
      %p222 = scmp.eq.s32.totalorder %s28, 0
      %p223 = por %p221, %p222
      %s224 = ssub.s32 %s22, %s29
      %p225 = scmp.eq.s32.totalorder %s224, 0
      %s227 = sadd.s32 %s226, 1
      %s228 = scalar_select %p225, %s226, %s227
      %p231 = pneg %p225
      %p232 = scmp.eq.s32.totalorder %s22, 1
      %p233 = por %p231, %p232
      %p234 = scmp.ne.s32.totalorder %s226, %s229
      %p235 = scmp.eq.s32.totalorder %s22, 0
      %p236 = por %p234, %p235
      %p237 = scmp.ne.s32.totalorder %s226, %s229
      %p238 = scmp.eq.s32.totalorder %s27, 1
      %p239 = por %p237, %p238
      %p240 = scmp.ne.s32.totalorder %s229, %s230
      %p241 = scmp.eq.s32.totalorder %s27, 0
      %p242 = por %p240, %p241
      %p243 = scmp.ne.s32.totalorder %s229, %s230
      %p244 = scmp.eq.s32.totalorder %s28, 1
      %p245 = por %p243, %p244
      %p247 = scmp.ne.s32.totalorder %s230, %s246
      %p248 = scmp.eq.s32.totalorder %s28, 0
      %p249 = por %p247, %p248
      %p250 = scmp.le.s32.totalorder 1, %s22
      %p251 = scmp.lt.s32.totalorder %s22, 3
      %p252 = pnand %p250, %p251
      %p253 = pneg %p252
      // Predicated region
      $region9: #{tpu_custom_call.1} parent=5 // pred_check
        _
      $region10: #{tpu_custom_call.1} parent=5 // pred_check_branch
        %255 = sbr.rel (%p252) target = $region12
      $region11: #{tpu_custom_call.1} parent=5 // pred_region
        %s256 = ssub.s32 %s22, 1
        // Predicated region
        $region13: #{tpu_custom_call.1} parent=11 // pred_check
          %p257 = pneg %p69
        $region14: #{tpu_custom_call.1} parent=11 // pred_check_branch
          %259 = sbr.rel (%p257) target = $region16
        $region15: #{tpu_custom_call.1} parent=11 // pred_region
          _
        $region16: #{tpu_custom_call.1} parent=11 // pred_fallthru
          _
        // Predicated region
        $region17: #{tpu_custom_call.1} parent=11 // pred_check
          %p260 = pneg %p90
        $region18: #{tpu_custom_call.1} parent=11 // pred_check_branch
          %262 = sbr.rel (%p260) target = $region20
        $region19: #{tpu_custom_call.1} parent=11 // pred_region
          %264 = vsyncadd [#allocation7], 0
          %s265 = sshll.u32 %s2, 4
          %s266 = int_to_ptr.hbm [resolvable:$true] %s265
          %s267 = sshll.u32 [#allocation6], 4
          %s268 = int_to_ptr.vmem [resolvable:$true] %s267
          %273 = dma.hbm_to_vmem [thread:$0]  %s266, 512, %s268, [#allocation7], 256, 256, 16
        $region20: #{tpu_custom_call.1} parent=11 // pred_fallthru
          _
        // Predicated region
        $region21: #{tpu_custom_call.1} parent=11 // pred_check
          %p274 = pneg %p111
        $region22: #{tpu_custom_call.1} parent=11 // pred_check_branch
          %276 = sbr.rel (%p274) target = $region24
        $region23: #{tpu_custom_call.1} parent=11 // pred_region
          _
        $region24: #{tpu_custom_call.1} parent=11 // pred_fallthru
          _
        // Predicated region
        $region25: #{tpu_custom_call.1} parent=11 // pred_check
          %p277 = pneg %p132
        $region26: #{tpu_custom_call.1} parent=11 // pred_check_branch
          %279 = sbr.rel (%p277) target = $region28
        $region27: #{tpu_custom_call.1} parent=11 // pred_region
          _
        $region28: #{tpu_custom_call.1} parent=11 // pred_fallthru
          _
        // Predicated region
        $region29: #{tpu_custom_call.1} parent=11 // pred_check
          %p280 = pneg %p153
        $region30: #{tpu_custom_call.1} parent=11 // pred_check_branch
          %282 = sbr.rel (%p280) target = $region32
        $region31: #{tpu_custom_call.1} parent=11 // pred_region
          _
        $region32: #{tpu_custom_call.1} parent=11 // pred_fallthru
          _
        // Predicated region
        $region33: #{tpu_custom_call.1} parent=11 // pred_check
          %p283 = pneg %p174
        $region34: #{tpu_custom_call.1} parent=11 // pred_check_branch
          %285 = sbr.rel (%p283) target = $region36
        $region35: #{tpu_custom_call.1} parent=11 // pred_region
          _
        $region36: #{tpu_custom_call.1} parent=11 // pred_fallthru
          _
        // Predicated region
        $region37: #{tpu_custom_call.1} parent=11 // pred_check
          %p286 = pneg %p195
        $region38: #{tpu_custom_call.1} parent=11 // pred_check_branch
          %288 = sbr.rel (%p286) target = $region40
        $region39: #{tpu_custom_call.1} parent=11 // pred_region
          _
        $region40: #{tpu_custom_call.1} parent=11 // pred_fallthru
          _
        // Predicated region
        $region41: #{tpu_custom_call.1} parent=11 // pred_check
          %p289 = pneg %p216
        $region42: #{tpu_custom_call.1} parent=11 // pred_check_branch
          %291 = sbr.rel (%p289) target = $region44
        $region43: #{tpu_custom_call.1} parent=11 // pred_region
          _
        $region44: #{tpu_custom_call.1} parent=11 // pred_fallthru
          _
      $region12: #{tpu_custom_call.1} parent=5 // pred_fallthru
        _
      %p292 = scmp.lt.s32.totalorder %s22, 2
      // Predicated region
      $region45: #{tpu_custom_call.1} parent=5 // pred_check
        %p293 = pneg %p292
      $region46: #{tpu_custom_call.1} parent=5 // pred_check_branch
        %295 = sbr.rel (%p293) target = $region48
      $region47: #{tpu_custom_call.1} parent=5 // pred_region
        // Predicated region
        $region49: #{tpu_custom_call.1} parent=47 // pred_check
          %p296 = pneg %p42
        $region50: #{tpu_custom_call.1} parent=47 // pred_check_branch
          %298 = sbr.rel (%p296) target = $region52
        $region51: #{tpu_custom_call.1} parent=47 // pred_region
          %s299 = sand.u32 %s32, 1
          %s300 = scalar_lea.sflag [#allocation4], %s299
          %s301 = sand.u32 %s32, 1
          %s302 = smul.addr %s301, 128
          %s303 = scalar_lea.vmem [#allocation3], %s302
          %s304 = smul.u32 8, %s22
          %306 = vsyncadd %s300, 0
          %s307 = smul.addr %s304, 8
          %s308 = scalar_lea.hbm %s0, %s307
          %s309 = sshll.u32 %s308, 4
          %s310 = int_to_ptr.hbm [resolvable:$true] %s309
          %s311 = sshll.u32 %s303, 4
          %s312 = int_to_ptr.vmem [resolvable:$true] %s311
          %317 = dma.hbm_to_vmem [thread:$0]  %s310, 2048, %s312, %s300, 2048, 1024, 64
        $region52: #{tpu_custom_call.1} parent=47 // pred_fallthru
          _
      $region48: #{tpu_custom_call.1} parent=5 // pred_fallthru
        _
      %p318 = scmp.le.s32.totalorder 1, %s22
      %p319 = scmp.lt.s32.totalorder %s22, 3
      %p320 = pnand %p318, %p319
      %p321 = pneg %p320
      // Predicated region
      $region53: #{tpu_custom_call.1} parent=5 // pred_check
        _
      $region54: #{tpu_custom_call.1} parent=5 // pred_check_branch
        %323 = sbr.rel (%p320) target = $region56
      $region55: #{tpu_custom_call.1} parent=5 // pred_region
        %s324 = ssub.s32 %s22, 1
        %s325 = sand.u32 %s35, 1
        %s326 = scalar_lea.sflag [#allocation4], %s325
        %s327 = sand.u32 %s35, 1
        %s328 = smul.addr %s327, 128
        %s329 = scalar_lea.vmem [#allocation3], %s328
        // Predicated region
        $region57: #{tpu_custom_call.1} parent=55 // pred_check
          %p330 = pneg %p48
        $region58: #{tpu_custom_call.1} parent=55 // pred_check_branch
          %332 = sbr.rel (%p330) target = $region60
        $region59: #{tpu_custom_call.1} parent=55 // pred_region
          %334 = dma.done %s326, 2048
        $region60: #{tpu_custom_call.1} parent=55 // pred_fallthru
          _
        // Predicated region
        $region61: #{tpu_custom_call.1} parent=55 // pred_check
          %p335 = pneg %p90
        $region62: #{tpu_custom_call.1} parent=55 // pred_check_branch
          %337 = sbr.rel (%p335) target = $region64
        $region63: #{tpu_custom_call.1} parent=55 // pred_region
          %339 = dma.done [#allocation7], 512
        $region64: #{tpu_custom_call.1} parent=55 // pred_fallthru
          _
        %s340 = sand.u32 %s35, 1
        %s341 = scalar_lea.sflag [#allocation4], %s340
        %s342 = sand.u32 %s35, 1
        %s343 = smul.addr %s342, 128
        %s344 = scalar_lea.vmem [#allocation3], %s343
        %p345 = pneg %p48
        %p346 = pneg %p45
        %p347 = pneg %p69
        %p348 = pneg %p66
        %p349 = pneg %p90
        %p350 = pneg %p87
        %p351 = pneg %p111
        %p352 = pneg %p108
        %p353 = pneg %p132
        %p354 = pneg %p129
        %p355 = pneg %p153
        %p356 = pneg %p150
        %p357 = pneg %p174
        %p358 = pneg %p171
        %p359 = pneg %p195
        %p360 = pneg %p192
        %p361 = pneg %p216
        %p362 = pneg %p213
        %p363 = pneg %p242
        %p364 = pneg %p239
        %s365 = sand.u32 %s229, 1
        %s366 = scalar_lea.sflag [#allocation5], %s365
        %s367 = sand.u32 %s229, 1
        %s368 = smul.addr %s367, 128
        %s369 = scalar_lea.vmem [#allocation8], %s368
        %s370 = smul.u32 8, %s27
        %s371 = smul.u32 8, %s27
        %v372 = vld [vmem:[%s329] sm:$0xff]
        %v373 = vld [vmem:[%s329 + $0x8] sm:$0xff]
        %v374 = vld [vmem:[%s329 + $0x10] sm:$0xff]
        %v375 = vld [vmem:[%s329 + $0x18] sm:$0xff]
        %v376 = vld [vmem:[%s329 + $0x20] sm:$0xff]
        %v377 = vld [vmem:[%s329 + $0x28] sm:$0xff]
        %v378 = vld [vmem:[%s329 + $0x30] sm:$0xff]
        %v379 = vld [vmem:[%s329 + $0x38] sm:$0xff]
        %v380 = vld [vmem:[%s329 + $0x40] sm:$0xff]
        %v381 = vld [vmem:[%s329 + $0x48] sm:$0xff]
        %v382 = vld [vmem:[%s329 + $0x50] sm:$0xff]
        %v383 = vld [vmem:[%s329 + $0x58] sm:$0xff]
        %v384 = vld [vmem:[%s329 + $0x60] sm:$0xff]
        %v385 = vld [vmem:[%s329 + $0x68] sm:$0xff]
        %v386 = vld [vmem:[%s329 + $0x70] sm:$0xff]
        %v387 = vld [vmem:[%s329 + $0x78] sm:$0xff]
        %v388 = vlaneseq
        %v389 = vand.u32 %v388, 127
        %v390 = vadd.s32 %v389, 128
        %v391 = vadd.s32 %v389, 256
        %v392 = vadd.s32 %v389, 384
        %v393 = vadd.s32 %v389, 512
        %v394 = vadd.s32 %v389, 640
        %v395 = vadd.s32 %v389, 768
        %v396 = vadd.s32 %v389, 896
        %v397 = vand.u32 %v389, 255
        %v398 = vand.u32 %v390, 255
        %v399 = vand.u32 %v391, 255
        %v400 = vand.u32 %v392, 255
        %v401 = vand.u32 %v393, 255
        %v402 = vand.u32 %v394, 255
        %v403 = vand.u32 %v395, 255
        %v404 = vand.u32 %v396, 255
        %v405 = vand.u32 %v397, 15
        %v406 = vand.u32 %v398, 15
        %v407 = vand.u32 %v399, 15
        %v408 = vand.u32 %v400, 15
        %v409 = vand.u32 %v401, 15
        %v410 = vand.u32 %v402, 15
        %v411 = vand.u32 %v403, 15
        %v412 = vand.u32 %v404, 15
        %vm413 = vcmp.ge.s32.totalorder %v397, 16
        %vm414 = vcmp.ge.s32.totalorder %v398, 16
        %vm415 = vcmp.ge.s32.totalorder %v399, 16
        %vm416 = vcmp.ge.s32.totalorder %v400, 16
        %vm417 = vcmp.ge.s32.totalorder %v401, 16
        %vm418 = vcmp.ge.s32.totalorder %v402, 16
        %vm419 = vcmp.ge.s32.totalorder %v403, 16
        %vm420 = vcmp.ge.s32.totalorder %v404, 16
        %vm421 = vcmp.ge.s32.totalorder %v405, 1
        %vm422 = vcmp.ge.s32.totalorder %v406, 1
        %vm423 = vcmp.ge.s32.totalorder %v407, 1
        %vm424 = vcmp.ge.s32.totalorder %v408, 1
        %vm425 = vcmp.ge.s32.totalorder %v409, 1
        %vm426 = vcmp.ge.s32.totalorder %v410, 1
        %vm427 = vcmp.ge.s32.totalorder %v411, 1
        %vm428 = vcmp.ge.s32.totalorder %v412, 1
        %vm429 = vmand %vm413, %vm421
        %vm430 = vmand %vm414, %vm422
        %vm431 = vmand %vm415, %vm423
        %vm432 = vmand %vm416, %vm424
        %vm433 = vmand %vm417, %vm425
        %vm434 = vmand %vm418, %vm426
        %vm435 = vmand %vm419, %vm427
        %vm436 = vmand %vm420, %vm428
        %v437 = vsel %vm429, 1, 0
        %v438 = vsel %vm430, 1, 0
        %v439 = vsel %vm431, 1, 0
        %v440 = vsel %vm432, 1, 0
        %v441 = vsel %vm433, 1, 0
        %v442 = vsel %vm434, 1, 0
        %v443 = vsel %vm435, 1, 0
        %v444 = vsel %vm436, 1, 0
        %v445 = vcvt.s32.f32 %v437
        %v446 = vcvt.s32.f32 %v438
        %v447 = vcvt.s32.f32 %v439
        %v448 = vcvt.s32.f32 %v440
        %v449 = vcvt.s32.f32 %v441
        %v450 = vcvt.s32.f32 %v442
        %v451 = vcvt.s32.f32 %v443
        %v452 = vcvt.s32.f32 %v444
        %v453 = vsel %vm413, 1, 0
        %v454 = vsel %vm414, 1, 0
        %v455 = vsel %vm415, 1, 0
        %v456 = vsel %vm416, 1, 0
        %v457 = vsel %vm417, 1, 0
        %v458 = vsel %vm418, 1, 0
        %v459 = vsel %vm419, 1, 0
        %v460 = vsel %vm420, 1, 0
        %v461 = vcvt.s32.f32 %v453
        %v462 = vcvt.s32.f32 %v454
        %v463 = vcvt.s32.f32 %v455
        %v464 = vcvt.s32.f32 %v456
        %v465 = vcvt.s32.f32 %v457
        %v466 = vcvt.s32.f32 %v458
        %v467 = vcvt.s32.f32 %v459
        %v468 = vcvt.s32.f32 %v460
        %vm469 = vcmp.lt.s32.totalorder %v405, 15
        %vm470 = vcmp.lt.s32.totalorder %v406, 15
        %vm471 = vcmp.lt.s32.totalorder %v407, 15
        %vm472 = vcmp.lt.s32.totalorder %v408, 15
        %vm473 = vcmp.lt.s32.totalorder %v409, 15
        %vm474 = vcmp.lt.s32.totalorder %v410, 15
        %vm475 = vcmp.lt.s32.totalorder %v411, 15
        %vm476 = vcmp.lt.s32.totalorder %v412, 15
        %vm477 = vmand %vm413, %vm469
        %vm478 = vmand %vm414, %vm470
        %vm479 = vmand %vm415, %vm471
        %vm480 = vmand %vm416, %vm472
        %vm481 = vmand %vm417, %vm473
        %vm482 = vmand %vm418, %vm474
        %vm483 = vmand %vm419, %vm475
        %vm484 = vmand %vm420, %vm476
        %v485 = vsel %vm477, 1, 0
        %v486 = vsel %vm478, 1, 0
        %v487 = vsel %vm479, 1, 0
        %v488 = vsel %vm480, 1, 0
        %v489 = vsel %vm481, 1, 0
        %v490 = vsel %vm482, 1, 0
        %v491 = vsel %vm483, 1, 0
        %v492 = vsel %vm484, 1, 0
        %v493 = vcvt.s32.f32 %v485
        %v494 = vcvt.s32.f32 %v486
        %v495 = vcvt.s32.f32 %v487
        %v496 = vcvt.s32.f32 %v488
        %v497 = vcvt.s32.f32 %v489
        %v498 = vcvt.s32.f32 %v490
        %v499 = vcvt.s32.f32 %v491
        %v500 = vcvt.s32.f32 %v492
        %v501 = vsel %vm421, 1, 0
        %v502 = vsel %vm422, 1, 0
        %v503 = vsel %vm423, 1, 0
        %v504 = vsel %vm424, 1, 0
        %v505 = vsel %vm425, 1, 0
        %v506 = vsel %vm426, 1, 0
        %v507 = vsel %vm427, 1, 0
        %v508 = vsel %vm428, 1, 0
        %v509 = vcvt.s32.f32 %v501
        %v510 = vcvt.s32.f32 %v502
        %v511 = vcvt.s32.f32 %v503
        %v512 = vcvt.s32.f32 %v504
        %v513 = vcvt.s32.f32 %v505
        %v514 = vcvt.s32.f32 %v506
        %v515 = vcvt.s32.f32 %v507
        %v516 = vcvt.s32.f32 %v508
        %v517 = vsel %vm469, 1, 0
        %v518 = vsel %vm470, 1, 0
        %v519 = vsel %vm471, 1, 0
        %v520 = vsel %vm472, 1, 0
        %v521 = vsel %vm473, 1, 0
        %v522 = vsel %vm474, 1, 0
        %v523 = vsel %vm475, 1, 0
        %v524 = vsel %vm476, 1, 0
        %v525 = vcvt.s32.f32 %v517
        %v526 = vcvt.s32.f32 %v518
        %v527 = vcvt.s32.f32 %v519
        %v528 = vcvt.s32.f32 %v520
        %v529 = vcvt.s32.f32 %v521
        %v530 = vcvt.s32.f32 %v522
        %v531 = vcvt.s32.f32 %v523
        %v532 = vcvt.s32.f32 %v524
        %vm533 = vcmp.lt.s32.totalorder %v397, 240
        %vm534 = vcmp.lt.s32.totalorder %v398, 240
        %vm535 = vcmp.lt.s32.totalorder %v399, 240
        %vm536 = vcmp.lt.s32.totalorder %v400, 240
        %vm537 = vcmp.lt.s32.totalorder %v401, 240
        %vm538 = vcmp.lt.s32.totalorder %v402, 240
        %vm539 = vcmp.lt.s32.totalorder %v403, 240
        %vm540 = vcmp.lt.s32.totalorder %v404, 240
        %vm541 = vmand %vm533, %vm421
        %vm542 = vmand %vm534, %vm422
        %vm543 = vmand %vm535, %vm423
        %vm544 = vmand %vm536, %vm424
        %vm545 = vmand %vm537, %vm425
        %vm546 = vmand %vm538, %vm426
        %vm547 = vmand %vm539, %vm427
        %vm548 = vmand %vm540, %vm428
        %v549 = vsel %vm541, 1, 0
        %v550 = vsel %vm542, 1, 0
        %v551 = vsel %vm543, 1, 0
        %v552 = vsel %vm544, 1, 0
        %v553 = vsel %vm545, 1, 0
        %v554 = vsel %vm546, 1, 0
        %v555 = vsel %vm547, 1, 0
        %v556 = vsel %vm548, 1, 0
        %v557 = vcvt.s32.f32 %v549
        %v558 = vcvt.s32.f32 %v550
        %v559 = vcvt.s32.f32 %v551
        %v560 = vcvt.s32.f32 %v552
        %v561 = vcvt.s32.f32 %v553
        %v562 = vcvt.s32.f32 %v554
        %v563 = vcvt.s32.f32 %v555
        %v564 = vcvt.s32.f32 %v556
        %v565 = vsel %vm533, 1, 0
        %v566 = vsel %vm534, 1, 0
        %v567 = vsel %vm535, 1, 0
        %v568 = vsel %vm536, 1, 0
        %v569 = vsel %vm537, 1, 0
        %v570 = vsel %vm538, 1, 0
        %v571 = vsel %vm539, 1, 0
        %v572 = vsel %vm540, 1, 0
        %v573 = vcvt.s32.f32 %v565
        %v574 = vcvt.s32.f32 %v566
        %v575 = vcvt.s32.f32 %v567
        %v576 = vcvt.s32.f32 %v568
        %v577 = vcvt.s32.f32 %v569
        %v578 = vcvt.s32.f32 %v570
        %v579 = vcvt.s32.f32 %v571
        %v580 = vcvt.s32.f32 %v572
        %vm581 = vmand %vm533, %vm469
        %vm582 = vmand %vm534, %vm470
        %vm583 = vmand %vm535, %vm471
        %vm584 = vmand %vm536, %vm472
        %vm585 = vmand %vm537, %vm473
        %vm586 = vmand %vm538, %vm474
        %vm587 = vmand %vm539, %vm475
        %vm588 = vmand %vm540, %vm476
        %v589 = vsel %vm581, 1, 0
        %v590 = vsel %vm582, 1, 0
        %v591 = vsel %vm583, 1, 0
        %v592 = vsel %vm584, 1, 0
        %v593 = vsel %vm585, 1, 0
        %v594 = vsel %vm586, 1, 0
        %v595 = vsel %vm587, 1, 0
        %v596 = vsel %vm588, 1, 0
        %v597 = vcvt.s32.f32 %v589
        %v598 = vcvt.s32.f32 %v590
        %v599 = vcvt.s32.f32 %v591
        %v600 = vcvt.s32.f32 %v592
        %v601 = vcvt.s32.f32 %v593
        %v602 = vcvt.s32.f32 %v594
        %v603 = vcvt.s32.f32 %v595
        %v604 = vcvt.s32.f32 %v596
        %v605 = vld [vmem:[%s3] sm:$0xff]
        %v606 = vld [vmem:[%s3 + $0x8] sm:$0xff]
        %607 = vrot.lane.b32.xlu0 %v372, 17
        %v608 = vpop.permute.xlu0 %607
        %609 = vrot.lane.b32.xlu0 %v380, 17
        %v610 = vpop.permute.xlu0 %609
        %611 = vrot.lane.b32.xlu0 %v373, 17
        %v612 = vpop.permute.xlu0 %611
        %613 = vrot.lane.b32.xlu0 %v381, 17
        %v614 = vpop.permute.xlu0 %613
        %615 = vrot.lane.b32.xlu0 %v374, 17
        %v616 = vpop.permute.xlu0 %615
        %617 = vrot.lane.b32.xlu0 %v382, 17
        %v618 = vpop.permute.xlu0 %617
        %619 = vrot.lane.b32.xlu0 %v375, 17
        %v620 = vpop.permute.xlu0 %619
        %621 = vrot.lane.b32.xlu0 %v383, 17
        %v622 = vpop.permute.xlu0 %621
        %623 = vrot.lane.b32.xlu0 %v376, 17
        %v624 = vpop.permute.xlu0 %623
        %625 = vrot.lane.b32.xlu0 %v384, 17
        %v626 = vpop.permute.xlu0 %625
        %627 = vrot.lane.b32.xlu0 %v377, 17
        %v628 = vpop.permute.xlu0 %627
        %629 = vrot.lane.b32.xlu0 %v385, 17
        %v630 = vpop.permute.xlu0 %629
        %631 = vrot.lane.b32.xlu0 %v378, 17
        %v632 = vpop.permute.xlu0 %631
        %633 = vrot.lane.b32.xlu0 %v386, 17
        %v634 = vpop.permute.xlu0 %633
        %635 = vrot.lane.b32.xlu0 %v379, 17
        %v636 = vpop.permute.xlu0 %635
        %637 = vrot.lane.b32.xlu0 %v387, 17
        %v638 = vpop.permute.xlu0 %637
        %vm639 = vcmp.lt.s32.totalorder %v389, 17
        %v640 = vsel %vm639, %v632, %v636
        %v641 = vsel %vm639, %v634, %v638
        %v642 = vsel %vm639, %v628, %v632
        %v643 = vsel %vm639, %v630, %v634
        %v644 = vsel %vm639, %v624, %v628
        %v645 = vsel %vm639, %v626, %v630
        %v646 = vsel %vm639, %v620, %v624
        %v647 = vsel %vm639, %v622, %v626
        %v648 = vsel %vm639, %v616, %v620
        %v649 = vsel %vm639, %v618, %v622
        %v650 = vsel %vm639, %v612, %v616
        %v651 = vsel %vm639, %v614, %v618
        %v652 = vsel %vm639, %v608, %v612
        %v653 = vsel %vm639, %v610, %v614
        %v654 = vsel %vm639, %v636, %v608
        %v655 = vsel %vm639, %v638, %v610
        %v656 = vmul.f32 %v654, %v445
        %v657 = vmul.f32 %v652, %v446
        %v658 = vmul.f32 %v650, %v447
        %v659 = vmul.f32 %v648, %v448
        %v660 = vmul.f32 %v646, %v449
        %v661 = vmul.f32 %v644, %v450
        %v662 = vmul.f32 %v642, %v451
        %v663 = vmul.f32 %v640, %v452
        %v664 = vmul.f32 %v655, %v445
        %v665 = vmul.f32 %v653, %v446
        %v666 = vmul.f32 %v651, %v447
        %v667 = vmul.f32 %v649, %v448
        %v668 = vmul.f32 %v647, %v449
        %v669 = vmul.f32 %v645, %v450
        %v670 = vmul.f32 %v643, %v451
        %v671 = vmul.f32 %v641, %v452
        %672 = vst [vmem:[#allocation2] sm:$0xff] %v656
        %673 = vst [vmem:[#allocation2 + $0x8] sm:$0xff] %v657
        %674 = vst [vmem:[#allocation2 + $0x10] sm:$0xff] %v658
        %675 = vst [vmem:[#allocation2 + $0x18] sm:$0xff] %v659
        %676 = vst [vmem:[#allocation2 + $0x20] sm:$0xff] %v660
        %677 = vst [vmem:[#allocation2 + $0x28] sm:$0xff] %v661
        %678 = vst [vmem:[#allocation2 + $0x30] sm:$0xff] %v662
        %679 = vst [vmem:[#allocation2 + $0x38] sm:$0xff] %v663
        %680 = vst [vmem:[#allocation2 + $0x40] sm:$0xff] %v664
        %681 = vst [vmem:[#allocation2 + $0x48] sm:$0xff] %v665
        %682 = vst [vmem:[#allocation2 + $0x50] sm:$0xff] %v666
        %683 = vst [vmem:[#allocation2 + $0x58] sm:$0xff] %v667
        %684 = vst [vmem:[#allocation2 + $0x60] sm:$0xff] %v668
        %685 = vst [vmem:[#allocation2 + $0x68] sm:$0xff] %v669
        %686 = vst [vmem:[#allocation2 + $0x70] sm:$0xff] %v670
        %687 = vst [vmem:[#allocation2 + $0x78] sm:$0xff] %v671
        %688 = vrot.lane.b32.xlu0 %v372, 16
        %v689 = vpop.permute.xlu0 %688
        %690 = vrot.lane.b32.xlu0 %v380, 16
        %v691 = vpop.permute.xlu0 %690
        %692 = vrot.lane.b32.xlu0 %v373, 16
        %v693 = vpop.permute.xlu0 %692
        %694 = vrot.lane.b32.xlu0 %v381, 16
        %v695 = vpop.permute.xlu0 %694
        %696 = vrot.lane.b32.xlu0 %v374, 16
        %v697 = vpop.permute.xlu0 %696
        %698 = vrot.lane.b32.xlu0 %v382, 16
        %v699 = vpop.permute.xlu0 %698
        %700 = vrot.lane.b32.xlu0 %v375, 16
        %v701 = vpop.permute.xlu0 %700
        %702 = vrot.lane.b32.xlu0 %v383, 16
        %v703 = vpop.permute.xlu0 %702
        %704 = vrot.lane.b32.xlu0 %v376, 16
        %v705 = vpop.permute.xlu0 %704
        %706 = vrot.lane.b32.xlu0 %v384, 16
        %v707 = vpop.permute.xlu0 %706
        %708 = vrot.lane.b32.xlu0 %v377, 16
        %v709 = vpop.permute.xlu0 %708
        %710 = vrot.lane.b32.xlu0 %v385, 16
        %v711 = vpop.permute.xlu0 %710
        %712 = vrot.lane.b32.xlu0 %v378, 16
        %v713 = vpop.permute.xlu0 %712
        %714 = vrot.lane.b32.xlu0 %v386, 16
        %v715 = vpop.permute.xlu0 %714
        %716 = vrot.lane.b32.xlu0 %v379, 16
        %v717 = vpop.permute.xlu0 %716
        %718 = vrot.lane.b32.xlu0 %v387, 16
        %v719 = vpop.permute.xlu0 %718
        %vm720 = vcmp.lt.s32.totalorder %v389, 16
        %v721 = vsel %vm720, %v713, %v717
        %v722 = vsel %vm720, %v715, %v719
        %v723 = vsel %vm720, %v709, %v713
        %v724 = vsel %vm720, %v711, %v715
        %v725 = vsel %vm720, %v705, %v709
        %v726 = vsel %vm720, %v707, %v711
        %v727 = vsel %vm720, %v701, %v705
        %v728 = vsel %vm720, %v703, %v707
        %v729 = vsel %vm720, %v697, %v701
        %v730 = vsel %vm720, %v699, %v703
        %v731 = vsel %vm720, %v693, %v697
        %v732 = vsel %vm720, %v695, %v699
        %v733 = vsel %vm720, %v689, %v693
        %v734 = vsel %vm720, %v691, %v695
        %v735 = vsel %vm720, %v717, %v689
        %v736 = vsel %vm720, %v719, %v691
        %v737 = vmul.f32 %v735, %v461
        %v738 = vmul.f32 %v733, %v462
        %v739 = vmul.f32 %v731, %v463
        %v740 = vmul.f32 %v729, %v464
        %v741 = vmul.f32 %v727, %v465
        %v742 = vmul.f32 %v725, %v466
        %v743 = vmul.f32 %v723, %v467
        %v744 = vmul.f32 %v721, %v468
        %v745 = vmul.f32 %v736, %v461
        %v746 = vmul.f32 %v734, %v462
        %v747 = vmul.f32 %v732, %v463
        %v748 = vmul.f32 %v730, %v464
        %v749 = vmul.f32 %v728, %v465
        %v750 = vmul.f32 %v726, %v466
        %v751 = vmul.f32 %v724, %v467
        %v752 = vmul.f32 %v722, %v468
        %753 = vst [vmem:[#allocation2 + $0x80] sm:$0xff] %v737
        %754 = vst [vmem:[#allocation2 + $0x88] sm:$0xff] %v738
        %755 = vst [vmem:[#allocation2 + $0x90] sm:$0xff] %v739
        %756 = vst [vmem:[#allocation2 + $0x98] sm:$0xff] %v740
        %757 = vst [vmem:[#allocation2 + $0xa0] sm:$0xff] %v741
        %758 = vst [vmem:[#allocation2 + $0xa8] sm:$0xff] %v742
        %759 = vst [vmem:[#allocation2 + $0xb0] sm:$0xff] %v743
        %760 = vst [vmem:[#allocation2 + $0xb8] sm:$0xff] %v744
        %761 = vst [vmem:[#allocation2 + $0xc0] sm:$0xff] %v745
        %762 = vst [vmem:[#allocation2 + $0xc8] sm:$0xff] %v746
        %763 = vst [vmem:[#allocation2 + $0xd0] sm:$0xff] %v747
        %764 = vst [vmem:[#allocation2 + $0xd8] sm:$0xff] %v748
        %765 = vst [vmem:[#allocation2 + $0xe0] sm:$0xff] %v749
        %766 = vst [vmem:[#allocation2 + $0xe8] sm:$0xff] %v750
        %767 = vst [vmem:[#allocation2 + $0xf0] sm:$0xff] %v751
        %768 = vst [vmem:[#allocation2 + $0xf8] sm:$0xff] %v752
        %769 = vrot.lane.b32.xlu0 %v372, 15
        %v770 = vpop.permute.xlu0 %769
        %771 = vrot.lane.b32.xlu0 %v380, 15
        %v772 = vpop.permute.xlu0 %771
        %773 = vrot.lane.b32.xlu0 %v373, 15
        %v774 = vpop.permute.xlu0 %773
        %775 = vrot.lane.b32.xlu0 %v381, 15
        %v776 = vpop.permute.xlu0 %775
        %777 = vrot.lane.b32.xlu0 %v374, 15
        %v778 = vpop.permute.xlu0 %777
        %779 = vrot.lane.b32.xlu0 %v382, 15
        %v780 = vpop.permute.xlu0 %779
        %781 = vrot.lane.b32.xlu0 %v375, 15
        %v782 = vpop.permute.xlu0 %781
        %783 = vrot.lane.b32.xlu0 %v383, 15
        %v784 = vpop.permute.xlu0 %783
        %785 = vrot.lane.b32.xlu0 %v376, 15
        %v786 = vpop.permute.xlu0 %785
        %787 = vrot.lane.b32.xlu0 %v384, 15
        %v788 = vpop.permute.xlu0 %787
        %789 = vrot.lane.b32.xlu0 %v377, 15
        %v790 = vpop.permute.xlu0 %789
        %791 = vrot.lane.b32.xlu0 %v385, 15
        %v792 = vpop.permute.xlu0 %791
        %793 = vrot.lane.b32.xlu0 %v378, 15
        %v794 = vpop.permute.xlu0 %793
        %795 = vrot.lane.b32.xlu0 %v386, 15
        %v796 = vpop.permute.xlu0 %795
        %797 = vrot.lane.b32.xlu0 %v379, 15
        %v798 = vpop.permute.xlu0 %797
        %799 = vrot.lane.b32.xlu0 %v387, 15
        %v800 = vpop.permute.xlu0 %799
        %vm801 = vcmp.lt.s32.totalorder %v389, 15
        %v802 = vsel %vm801, %v794, %v798
        %v803 = vsel %vm801, %v796, %v800
        %v804 = vsel %vm801, %v790, %v794
        %v805 = vsel %vm801, %v792, %v796
        %v806 = vsel %vm801, %v786, %v790
        %v807 = vsel %vm801, %v788, %v792
        %v808 = vsel %vm801, %v782, %v786
        %v809 = vsel %vm801, %v784, %v788
        %v810 = vsel %vm801, %v778, %v782
        %v811 = vsel %vm801, %v780, %v784
        %v812 = vsel %vm801, %v774, %v778
        %v813 = vsel %vm801, %v776, %v780
        %v814 = vsel %vm801, %v770, %v774
        %v815 = vsel %vm801, %v772, %v776
        %v816 = vsel %vm801, %v798, %v770
        %v817 = vsel %vm801, %v800, %v772
        %v818 = vmul.f32 %v816, %v493
        %v819 = vmul.f32 %v814, %v494
        %v820 = vmul.f32 %v812, %v495
        %v821 = vmul.f32 %v810, %v496
        %v822 = vmul.f32 %v808, %v497
        %v823 = vmul.f32 %v806, %v498
        %v824 = vmul.f32 %v804, %v499
        %v825 = vmul.f32 %v802, %v500
        %v826 = vmul.f32 %v817, %v493
        %v827 = vmul.f32 %v815, %v494
        %v828 = vmul.f32 %v813, %v495
        %v829 = vmul.f32 %v811, %v496
        %v830 = vmul.f32 %v809, %v497
        %v831 = vmul.f32 %v807, %v498
        %v832 = vmul.f32 %v805, %v499
        %v833 = vmul.f32 %v803, %v500
        %834 = vst [vmem:[#allocation2 + $0x100] sm:$0xff] %v818
        %835 = vst [vmem:[#allocation2 + $0x108] sm:$0xff] %v819
        %836 = vst [vmem:[#allocation2 + $0x110] sm:$0xff] %v820
        %837 = vst [vmem:[#allocation2 + $0x118] sm:$0xff] %v821
        %838 = vst [vmem:[#allocation2 + $0x120] sm:$0xff] %v822
        %839 = vst [vmem:[#allocation2 + $0x128] sm:$0xff] %v823
        %840 = vst [vmem:[#allocation2 + $0x130] sm:$0xff] %v824
        %841 = vst [vmem:[#allocation2 + $0x138] sm:$0xff] %v825
        %842 = vst [vmem:[#allocation2 + $0x140] sm:$0xff] %v826
        %843 = vst [vmem:[#allocation2 + $0x148] sm:$0xff] %v827
        %844 = vst [vmem:[#allocation2 + $0x150] sm:$0xff] %v828
        %845 = vst [vmem:[#allocation2 + $0x158] sm:$0xff] %v829
        %846 = vst [vmem:[#allocation2 + $0x160] sm:$0xff] %v830
        %847 = vst [vmem:[#allocation2 + $0x168] sm:$0xff] %v831
        %848 = vst [vmem:[#allocation2 + $0x170] sm:$0xff] %v832
        %849 = vst [vmem:[#allocation2 + $0x178] sm:$0xff] %v833
        %850 = vrot.lane.b32.xlu0 %v372, 1
        %v851 = vpop.permute.xlu0 %850
        %852 = vrot.lane.b32.xlu0 %v380, 1
        %v853 = vpop.permute.xlu0 %852
        %854 = vrot.lane.b32.xlu0 %v373, 1
        %v855 = vpop.permute.xlu0 %854
        %856 = vrot.lane.b32.xlu0 %v381, 1
        %v857 = vpop.permute.xlu0 %856
        %858 = vrot.lane.b32.xlu0 %v374, 1
        %v859 = vpop.permute.xlu0 %858
        %860 = vrot.lane.b32.xlu0 %v382, 1
        %v861 = vpop.permute.xlu0 %860
        %862 = vrot.lane.b32.xlu0 %v375, 1
        %v863 = vpop.permute.xlu0 %862
        %864 = vrot.lane.b32.xlu0 %v383, 1
        %v865 = vpop.permute.xlu0 %864
        %866 = vrot.lane.b32.xlu0 %v376, 1
        %v867 = vpop.permute.xlu0 %866
        %868 = vrot.lane.b32.xlu0 %v384, 1
        %v869 = vpop.permute.xlu0 %868
        %870 = vrot.lane.b32.xlu0 %v377, 1
        %v871 = vpop.permute.xlu0 %870
        %872 = vrot.lane.b32.xlu0 %v385, 1
        %v873 = vpop.permute.xlu0 %872
        %874 = vrot.lane.b32.xlu0 %v378, 1
        %v875 = vpop.permute.xlu0 %874
        %876 = vrot.lane.b32.xlu0 %v386, 1
        %v877 = vpop.permute.xlu0 %876
        %878 = vrot.lane.b32.xlu0 %v379, 1
        %v879 = vpop.permute.xlu0 %878
        %880 = vrot.lane.b32.xlu0 %v387, 1
        %v881 = vpop.permute.xlu0 %880
        %vm882 = vcmp.lt.s32.totalorder %v389, 1
        %v883 = vsel %vm882, %v875, %v879
        %v884 = vsel %vm882, %v877, %v881
        %v885 = vsel %vm882, %v871, %v875
        %v886 = vsel %vm882, %v873, %v877
        %v887 = vsel %vm882, %v867, %v871
        %v888 = vsel %vm882, %v869, %v873
        %v889 = vsel %vm882, %v863, %v867
        %v890 = vsel %vm882, %v865, %v869
        %v891 = vsel %vm882, %v859, %v863
        %v892 = vsel %vm882, %v861, %v865
        %v893 = vsel %vm882, %v855, %v859
        %v894 = vsel %vm882, %v857, %v861
        %v895 = vsel %vm882, %v851, %v855
        %v896 = vsel %vm882, %v853, %v857
        %v897 = vsel %vm882, %v879, %v851
        %v898 = vsel %vm882, %v881, %v853
        %v899 = vmul.f32 %v897, %v509
        %v900 = vmul.f32 %v895, %v510
        %v901 = vmul.f32 %v893, %v511
        %v902 = vmul.f32 %v891, %v512
        %v903 = vmul.f32 %v889, %v513
        %v904 = vmul.f32 %v887, %v514
        %v905 = vmul.f32 %v885, %v515
        %v906 = vmul.f32 %v883, %v516
        %v907 = vmul.f32 %v898, %v509
        %v908 = vmul.f32 %v896, %v510
        %v909 = vmul.f32 %v894, %v511
        %v910 = vmul.f32 %v892, %v512
        %v911 = vmul.f32 %v890, %v513
        %v912 = vmul.f32 %v888, %v514
        %v913 = vmul.f32 %v886, %v515
        %v914 = vmul.f32 %v884, %v516
        %915 = vst [vmem:[#allocation2 + $0x180] sm:$0xff] %v899
        %916 = vst [vmem:[#allocation2 + $0x188] sm:$0xff] %v900
        %917 = vst [vmem:[#allocation2 + $0x190] sm:$0xff] %v901
        %918 = vst [vmem:[#allocation2 + $0x198] sm:$0xff] %v902
        %919 = vst [vmem:[#allocation2 + $0x1a0] sm:$0xff] %v903
        %920 = vst [vmem:[#allocation2 + $0x1a8] sm:$0xff] %v904
        %921 = vst [vmem:[#allocation2 + $0x1b0] sm:$0xff] %v905
        %922 = vst [vmem:[#allocation2 + $0x1b8] sm:$0xff] %v906
        %923 = vst [vmem:[#allocation2 + $0x1c0] sm:$0xff] %v907
        %924 = vst [vmem:[#allocation2 + $0x1c8] sm:$0xff] %v908
        %925 = vst [vmem:[#allocation2 + $0x1d0] sm:$0xff] %v909
        %926 = vst [vmem:[#allocation2 + $0x1d8] sm:$0xff] %v910
        %927 = vst [vmem:[#allocation2 + $0x1e0] sm:$0xff] %v911
        %928 = vst [vmem:[#allocation2 + $0x1e8] sm:$0xff] %v912
        %929 = vst [vmem:[#allocation2 + $0x1f0] sm:$0xff] %v913
        %930 = vst [vmem:[#allocation2 + $0x1f8] sm:$0xff] %v914
        %931 = vst [vmem:[#allocation2 + $0x200] sm:$0xff] %v372
        %932 = vst [vmem:[#allocation2 + $0x208] sm:$0xff] %v373
        %933 = vst [vmem:[#allocation2 + $0x210] sm:$0xff] %v374
        %934 = vst [vmem:[#allocation2 + $0x218] sm:$0xff] %v375
        %935 = vst [vmem:[#allocation2 + $0x220] sm:$0xff] %v376
        %936 = vst [vmem:[#allocation2 + $0x228] sm:$0xff] %v377
        %937 = vst [vmem:[#allocation2 + $0x230] sm:$0xff] %v378
        %938 = vst [vmem:[#allocation2 + $0x238] sm:$0xff] %v379
        %939 = vst [vmem:[#allocation2 + $0x240] sm:$0xff] %v380
        %940 = vst [vmem:[#allocation2 + $0x248] sm:$0xff] %v381
        %941 = vst [vmem:[#allocation2 + $0x250] sm:$0xff] %v382
        %942 = vst [vmem:[#allocation2 + $0x258] sm:$0xff] %v383
        %943 = vst [vmem:[#allocation2 + $0x260] sm:$0xff] %v384
        %944 = vst [vmem:[#allocation2 + $0x268] sm:$0xff] %v385
        %945 = vst [vmem:[#allocation2 + $0x270] sm:$0xff] %v386
        %946 = vst [vmem:[#allocation2 + $0x278] sm:$0xff] %v387
        %947 = vrot.lane.b32.xlu0 %v372, 127
        %v948 = vpop.permute.xlu0 %947
        %949 = vrot.lane.b32.xlu0 %v380, 127
        %v950 = vpop.permute.xlu0 %949
        %951 = vrot.lane.b32.xlu0 %v373, 127
        %v952 = vpop.permute.xlu0 %951
        %953 = vrot.lane.b32.xlu0 %v381, 127
        %v954 = vpop.permute.xlu0 %953
        %955 = vrot.lane.b32.xlu0 %v374, 127
        %v956 = vpop.permute.xlu0 %955
        %957 = vrot.lane.b32.xlu0 %v382, 127
        %v958 = vpop.permute.xlu0 %957
        %959 = vrot.lane.b32.xlu0 %v375, 127
        %v960 = vpop.permute.xlu0 %959
        %961 = vrot.lane.b32.xlu0 %v383, 127
        %v962 = vpop.permute.xlu0 %961
        %963 = vrot.lane.b32.xlu0 %v376, 127
        %v964 = vpop.permute.xlu0 %963
        %965 = vrot.lane.b32.xlu0 %v384, 127
        %v966 = vpop.permute.xlu0 %965
        %967 = vrot.lane.b32.xlu0 %v377, 127
        %v968 = vpop.permute.xlu0 %967
        %969 = vrot.lane.b32.xlu0 %v385, 127
        %v970 = vpop.permute.xlu0 %969
        %971 = vrot.lane.b32.xlu0 %v378, 127
        %v972 = vpop.permute.xlu0 %971
        %973 = vrot.lane.b32.xlu0 %v386, 127
        %v974 = vpop.permute.xlu0 %973
        %975 = vrot.lane.b32.xlu0 %v379, 127
        %v976 = vpop.permute.xlu0 %975
        %977 = vrot.lane.b32.xlu0 %v387, 127
        %v978 = vpop.permute.xlu0 %977
        %vm979 = vcmp.lt.s32.totalorder %v389, 127
        %v980 = vsel %vm979, %v972, %v976
        %v981 = vsel %vm979, %v974, %v978
        %v982 = vsel %vm979, %v968, %v972
        %v983 = vsel %vm979, %v970, %v974
        %v984 = vsel %vm979, %v964, %v968
        %v985 = vsel %vm979, %v966, %v970
        %v986 = vsel %vm979, %v960, %v964
        %v987 = vsel %vm979, %v962, %v966
        %v988 = vsel %vm979, %v956, %v960
        %v989 = vsel %vm979, %v958, %v962
        %v990 = vsel %vm979, %v952, %v956
        %v991 = vsel %vm979, %v954, %v958
        %v992 = vsel %vm979, %v948, %v952
        %v993 = vsel %vm979, %v950, %v954
        %v994 = vsel %vm979, %v976, %v948
        %v995 = vsel %vm979, %v978, %v950
        %v996 = vmul.f32 %v992, %v525
        %v997 = vmul.f32 %v990, %v526
        %v998 = vmul.f32 %v988, %v527
        %v999 = vmul.f32 %v986, %v528
        %v1000 = vmul.f32 %v984, %v529
        %v1001 = vmul.f32 %v982, %v530
        %v1002 = vmul.f32 %v980, %v531
        %v1003 = vmul.f32 %v994, %v532
        %v1004 = vmul.f32 %v993, %v525
        %v1005 = vmul.f32 %v991, %v526
        %v1006 = vmul.f32 %v989, %v527
        %v1007 = vmul.f32 %v987, %v528
        %v1008 = vmul.f32 %v985, %v529
        %v1009 = vmul.f32 %v983, %v530
        %v1010 = vmul.f32 %v981, %v531
        %v1011 = vmul.f32 %v995, %v532
        %1012 = vst [vmem:[#allocation2 + $0x280] sm:$0xff] %v996
        %1013 = vst [vmem:[#allocation2 + $0x288] sm:$0xff] %v997
        %1014 = vst [vmem:[#allocation2 + $0x290] sm:$0xff] %v998
        %1015 = vst [vmem:[#allocation2 + $0x298] sm:$0xff] %v999
        %1016 = vst [vmem:[#allocation2 + $0x2a0] sm:$0xff] %v1000
        %1017 = vst [vmem:[#allocation2 + $0x2a8] sm:$0xff] %v1001
        %1018 = vst [vmem:[#allocation2 + $0x2b0] sm:$0xff] %v1002
        %1019 = vst [vmem:[#allocation2 + $0x2b8] sm:$0xff] %v1003
        %1020 = vst [vmem:[#allocation2 + $0x2c0] sm:$0xff] %v1004
        %1021 = vst [vmem:[#allocation2 + $0x2c8] sm:$0xff] %v1005
        %1022 = vst [vmem:[#allocation2 + $0x2d0] sm:$0xff] %v1006
        %1023 = vst [vmem:[#allocation2 + $0x2d8] sm:$0xff] %v1007
        %1024 = vst [vmem:[#allocation2 + $0x2e0] sm:$0xff] %v1008
        %1025 = vst [vmem:[#allocation2 + $0x2e8] sm:$0xff] %v1009
        %1026 = vst [vmem:[#allocation2 + $0x2f0] sm:$0xff] %v1010
        %1027 = vst [vmem:[#allocation2 + $0x2f8] sm:$0xff] %v1011
        %1028 = vrot.lane.b32.xlu0 %v372, 113
        %v1029 = vpop.permute.xlu0 %1028
        %1030 = vrot.lane.b32.xlu0 %v380, 113
        %v1031 = vpop.permute.xlu0 %1030
        %1032 = vrot.lane.b32.xlu0 %v373, 113
        %v1033 = vpop.permute.xlu0 %1032
        %1034 = vrot.lane.b32.xlu0 %v381, 113
        %v1035 = vpop.permute.xlu0 %1034
        %1036 = vrot.lane.b32.xlu0 %v374, 113
        %v1037 = vpop.permute.xlu0 %1036
        %1038 = vrot.lane.b32.xlu0 %v382, 113
        %v1039 = vpop.permute.xlu0 %1038
        %1040 = vrot.lane.b32.xlu0 %v375, 113
        %v1041 = vpop.permute.xlu0 %1040
        %1042 = vrot.lane.b32.xlu0 %v383, 113
        %v1043 = vpop.permute.xlu0 %1042
        %1044 = vrot.lane.b32.xlu0 %v376, 113
        %v1045 = vpop.permute.xlu0 %1044
        %1046 = vrot.lane.b32.xlu0 %v384, 113
        %v1047 = vpop.permute.xlu0 %1046
        %1048 = vrot.lane.b32.xlu0 %v377, 113
        %v1049 = vpop.permute.xlu0 %1048
        %1050 = vrot.lane.b32.xlu0 %v385, 113
        %v1051 = vpop.permute.xlu0 %1050
        %1052 = vrot.lane.b32.xlu0 %v378, 113
        %v1053 = vpop.permute.xlu0 %1052
        %1054 = vrot.lane.b32.xlu0 %v386, 113
        %v1055 = vpop.permute.xlu0 %1054
        %1056 = vrot.lane.b32.xlu0 %v379, 113
        %v1057 = vpop.permute.xlu0 %1056
        %1058 = vrot.lane.b32.xlu0 %v387, 113
        %v1059 = vpop.permute.xlu0 %1058
        %vm1060 = vcmp.lt.s32.totalorder %v389, 113
        %v1061 = vsel %vm1060, %v1053, %v1057
        %v1062 = vsel %vm1060, %v1055, %v1059
        %v1063 = vsel %vm1060, %v1049, %v1053
        %v1064 = vsel %vm1060, %v1051, %v1055
        %v1065 = vsel %vm1060, %v1045, %v1049
        %v1066 = vsel %vm1060, %v1047, %v1051
        %v1067 = vsel %vm1060, %v1041, %v1045
        %v1068 = vsel %vm1060, %v1043, %v1047
        %v1069 = vsel %vm1060, %v1037, %v1041
        %v1070 = vsel %vm1060, %v1039, %v1043
        %v1071 = vsel %vm1060, %v1033, %v1037
        %v1072 = vsel %vm1060, %v1035, %v1039
        %v1073 = vsel %vm1060, %v1029, %v1033
        %v1074 = vsel %vm1060, %v1031, %v1035
        %v1075 = vsel %vm1060, %v1057, %v1029
        %v1076 = vsel %vm1060, %v1059, %v1031
        %v1077 = vmul.f32 %v1073, %v557
        %v1078 = vmul.f32 %v1071, %v558
        %v1079 = vmul.f32 %v1069, %v559
        %v1080 = vmul.f32 %v1067, %v560
        %v1081 = vmul.f32 %v1065, %v561
        %v1082 = vmul.f32 %v1063, %v562
        %v1083 = vmul.f32 %v1061, %v563
        %v1084 = vmul.f32 %v1075, %v564
        %v1085 = vmul.f32 %v1074, %v557
        %v1086 = vmul.f32 %v1072, %v558
        %v1087 = vmul.f32 %v1070, %v559
        %v1088 = vmul.f32 %v1068, %v560
        %v1089 = vmul.f32 %v1066, %v561
        %v1090 = vmul.f32 %v1064, %v562
        %v1091 = vmul.f32 %v1062, %v563
        %v1092 = vmul.f32 %v1076, %v564
        %1093 = vst [vmem:[#allocation2 + $0x300] sm:$0xff] %v1077
        %1094 = vst [vmem:[#allocation2 + $0x308] sm:$0xff] %v1078
        %1095 = vst [vmem:[#allocation2 + $0x310] sm:$0xff] %v1079
        %1096 = vst [vmem:[#allocation2 + $0x318] sm:$0xff] %v1080
        %1097 = vst [vmem:[#allocation2 + $0x320] sm:$0xff] %v1081
        %1098 = vst [vmem:[#allocation2 + $0x328] sm:$0xff] %v1082
        %1099 = vst [vmem:[#allocation2 + $0x330] sm:$0xff] %v1083
        %1100 = vst [vmem:[#allocation2 + $0x338] sm:$0xff] %v1084
        %1101 = vst [vmem:[#allocation2 + $0x340] sm:$0xff] %v1085
        %1102 = vst [vmem:[#allocation2 + $0x348] sm:$0xff] %v1086
        %1103 = vst [vmem:[#allocation2 + $0x350] sm:$0xff] %v1087
        %1104 = vst [vmem:[#allocation2 + $0x358] sm:$0xff] %v1088
        %1105 = vst [vmem:[#allocation2 + $0x360] sm:$0xff] %v1089
        %1106 = vst [vmem:[#allocation2 + $0x368] sm:$0xff] %v1090
        %1107 = vst [vmem:[#allocation2 + $0x370] sm:$0xff] %v1091
        %1108 = vst [vmem:[#allocation2 + $0x378] sm:$0xff] %v1092
        %1109 = vrot.lane.b32.xlu0 %v372, 112
        %v1110 = vpop.permute.xlu0 %1109
        %1111 = vrot.lane.b32.xlu0 %v380, 112
        %v1112 = vpop.permute.xlu0 %1111
        %1113 = vrot.lane.b32.xlu0 %v373, 112
        %v1114 = vpop.permute.xlu0 %1113
        %1115 = vrot.lane.b32.xlu0 %v381, 112
        %v1116 = vpop.permute.xlu0 %1115
        %1117 = vrot.lane.b32.xlu0 %v374, 112
        %v1118 = vpop.permute.xlu0 %1117
        %1119 = vrot.lane.b32.xlu0 %v382, 112
        %v1120 = vpop.permute.xlu0 %1119
        %1121 = vrot.lane.b32.xlu0 %v375, 112
        %v1122 = vpop.permute.xlu0 %1121
        %1123 = vrot.lane.b32.xlu0 %v383, 112
        %v1124 = vpop.permute.xlu0 %1123
        %1125 = vrot.lane.b32.xlu0 %v376, 112
        %v1126 = vpop.permute.xlu0 %1125
        %1127 = vrot.lane.b32.xlu0 %v384, 112
        %v1128 = vpop.permute.xlu0 %1127
        %1129 = vrot.lane.b32.xlu0 %v377, 112
        %v1130 = vpop.permute.xlu0 %1129
        %1131 = vrot.lane.b32.xlu0 %v385, 112
        %v1132 = vpop.permute.xlu0 %1131
        %1133 = vrot.lane.b32.xlu0 %v378, 112
        %v1134 = vpop.permute.xlu0 %1133
        %1135 = vrot.lane.b32.xlu0 %v386, 112
        %v1136 = vpop.permute.xlu0 %1135
        %1137 = vrot.lane.b32.xlu0 %v379, 112
        %v1138 = vpop.permute.xlu0 %1137
        %1139 = vrot.lane.b32.xlu0 %v387, 112
        %v1140 = vpop.permute.xlu0 %1139
        %vm1141 = vcmp.lt.s32.totalorder %v389, 112
        %v1142 = vsel %vm1141, %v1134, %v1138
        %v1143 = vsel %vm1141, %v1136, %v1140
        %v1144 = vsel %vm1141, %v1130, %v1134
        %v1145 = vsel %vm1141, %v1132, %v1136
        %v1146 = vsel %vm1141, %v1126, %v1130
        %v1147 = vsel %vm1141, %v1128, %v1132
        %v1148 = vsel %vm1141, %v1122, %v1126
        %v1149 = vsel %vm1141, %v1124, %v1128
        %v1150 = vsel %vm1141, %v1118, %v1122
        %v1151 = vsel %vm1141, %v1120, %v1124
        %v1152 = vsel %vm1141, %v1114, %v1118
        %v1153 = vsel %vm1141, %v1116, %v1120
        %v1154 = vsel %vm1141, %v1110, %v1114
        %v1155 = vsel %vm1141, %v1112, %v1116
        %v1156 = vsel %vm1141, %v1138, %v1110
        %v1157 = vsel %vm1141, %v1140, %v1112
        %v1158 = vmul.f32 %v1154, %v573
        %v1159 = vmul.f32 %v1152, %v574
        %v1160 = vmul.f32 %v1150, %v575
        %v1161 = vmul.f32 %v1148, %v576
        %v1162 = vmul.f32 %v1146, %v577
        %v1163 = vmul.f32 %v1144, %v578
        %v1164 = vmul.f32 %v1142, %v579
        %v1165 = vmul.f32 %v1156, %v580
        %v1166 = vmul.f32 %v1155, %v573
        %v1167 = vmul.f32 %v1153, %v574
        %v1168 = vmul.f32 %v1151, %v575
        %v1169 = vmul.f32 %v1149, %v576
        %v1170 = vmul.f32 %v1147, %v577
        %v1171 = vmul.f32 %v1145, %v578
        %v1172 = vmul.f32 %v1143, %v579
        %v1173 = vmul.f32 %v1157, %v580
        %1174 = vst [vmem:[#allocation2 + $0x380] sm:$0xff] %v1158
        %1175 = vst [vmem:[#allocation2 + $0x388] sm:$0xff] %v1159
        %1176 = vst [vmem:[#allocation2 + $0x390] sm:$0xff] %v1160
        %1177 = vst [vmem:[#allocation2 + $0x398] sm:$0xff] %v1161
        %1178 = vst [vmem:[#allocation2 + $0x3a0] sm:$0xff] %v1162
        %1179 = vst [vmem:[#allocation2 + $0x3a8] sm:$0xff] %v1163
        %1180 = vst [vmem:[#allocation2 + $0x3b0] sm:$0xff] %v1164
        %1181 = vst [vmem:[#allocation2 + $0x3b8] sm:$0xff] %v1165
        %1182 = vst [vmem:[#allocation2 + $0x3c0] sm:$0xff] %v1166
        %1183 = vst [vmem:[#allocation2 + $0x3c8] sm:$0xff] %v1167
        %1184 = vst [vmem:[#allocation2 + $0x3d0] sm:$0xff] %v1168
        %1185 = vst [vmem:[#allocation2 + $0x3d8] sm:$0xff] %v1169
        %1186 = vst [vmem:[#allocation2 + $0x3e0] sm:$0xff] %v1170
        %1187 = vst [vmem:[#allocation2 + $0x3e8] sm:$0xff] %v1171
        %1188 = vst [vmem:[#allocation2 + $0x3f0] sm:$0xff] %v1172
        %1189 = vst [vmem:[#allocation2 + $0x3f8] sm:$0xff] %v1173
        %1190 = vrot.lane.b32.xlu0 %v372, 111
        %v1191 = vpop.permute.xlu0 %1190
        %1192 = vrot.lane.b32.xlu0 %v380, 111
        %v1193 = vpop.permute.xlu0 %1192
        %1194 = vrot.lane.b32.xlu0 %v373, 111
        %v1195 = vpop.permute.xlu0 %1194
        %1196 = vrot.lane.b32.xlu0 %v381, 111
        %v1197 = vpop.permute.xlu0 %1196
        %1198 = vrot.lane.b32.xlu0 %v374, 111
        %v1199 = vpop.permute.xlu0 %1198
        %1200 = vrot.lane.b32.xlu0 %v382, 111
        %v1201 = vpop.permute.xlu0 %1200
        %1202 = vrot.lane.b32.xlu0 %v375, 111
        %v1203 = vpop.permute.xlu0 %1202
        %1204 = vrot.lane.b32.xlu0 %v383, 111
        %v1205 = vpop.permute.xlu0 %1204
        %1206 = vrot.lane.b32.xlu0 %v376, 111
        %v1207 = vpop.permute.xlu0 %1206
        %1208 = vrot.lane.b32.xlu0 %v384, 111
        %v1209 = vpop.permute.xlu0 %1208
        %1210 = vrot.lane.b32.xlu0 %v377, 111
        %v1211 = vpop.permute.xlu0 %1210
        %1212 = vrot.lane.b32.xlu0 %v385, 111
        %v1213 = vpop.permute.xlu0 %1212
        %1214 = vrot.lane.b32.xlu0 %v378, 111
        %v1215 = vpop.permute.xlu0 %1214
        %1216 = vrot.lane.b32.xlu0 %v386, 111
        %v1217 = vpop.permute.xlu0 %1216
        %1218 = vrot.lane.b32.xlu0 %v379, 111
        %v1219 = vpop.permute.xlu0 %1218
        %1220 = vrot.lane.b32.xlu0 %v387, 111
        %v1221 = vpop.permute.xlu0 %1220
        %vm1222 = vcmp.lt.s32.totalorder %v389, 111
        %v1223 = vsel %vm1222, %v1215, %v1219
        %v1224 = vsel %vm1222, %v1217, %v1221
        %v1225 = vsel %vm1222, %v1211, %v1215
        %v1226 = vsel %vm1222, %v1213, %v1217
        %v1227 = vsel %vm1222, %v1207, %v1211
        %v1228 = vsel %vm1222, %v1209, %v1213
        %v1229 = vsel %vm1222, %v1203, %v1207
        %v1230 = vsel %vm1222, %v1205, %v1209
        %v1231 = vsel %vm1222, %v1199, %v1203
        %v1232 = vsel %vm1222, %v1201, %v1205
        %v1233 = vsel %vm1222, %v1195, %v1199
        %v1234 = vsel %vm1222, %v1197, %v1201
        %v1235 = vsel %vm1222, %v1191, %v1195
        %v1236 = vsel %vm1222, %v1193, %v1197
        %v1237 = vsel %vm1222, %v1219, %v1191
        %v1238 = vsel %vm1222, %v1221, %v1193
        %v1239 = vmul.f32 %v1235, %v597
        %v1240 = vmul.f32 %v1233, %v598
        %v1241 = vmul.f32 %v1231, %v599
        %v1242 = vmul.f32 %v1229, %v600
        %v1243 = vmul.f32 %v1227, %v601
        %v1244 = vmul.f32 %v1225, %v602
        %v1245 = vmul.f32 %v1223, %v603
        %v1246 = vmul.f32 %v1237, %v604
        %v1247 = vmul.f32 %v1236, %v597
        %v1248 = vmul.f32 %v1234, %v598
        %v1249 = vmul.f32 %v1232, %v599
        %v1250 = vmul.f32 %v1230, %v600
        %v1251 = vmul.f32 %v1228, %v601
        %v1252 = vmul.f32 %v1226, %v602
        %v1253 = vmul.f32 %v1224, %v603
        %v1254 = vmul.f32 %v1238, %v604
        %1255 = vst [vmem:[#allocation2 + $0x400] sm:$0xff] %v1239
        %1256 = vst [vmem:[#allocation2 + $0x408] sm:$0xff] %v1240
        %1257 = vst [vmem:[#allocation2 + $0x410] sm:$0xff] %v1241
        %1258 = vst [vmem:[#allocation2 + $0x418] sm:$0xff] %v1242
        %1259 = vst [vmem:[#allocation2 + $0x420] sm:$0xff] %v1243
        %1260 = vst [vmem:[#allocation2 + $0x428] sm:$0xff] %v1244
        %1261 = vst [vmem:[#allocation2 + $0x430] sm:$0xff] %v1245
        %1262 = vst [vmem:[#allocation2 + $0x438] sm:$0xff] %v1246
        %1263 = vst [vmem:[#allocation2 + $0x440] sm:$0xff] %v1247
        %1264 = vst [vmem:[#allocation2 + $0x448] sm:$0xff] %v1248
        %1265 = vst [vmem:[#allocation2 + $0x450] sm:$0xff] %v1249
        %1266 = vst [vmem:[#allocation2 + $0x458] sm:$0xff] %v1250
        %1267 = vst [vmem:[#allocation2 + $0x460] sm:$0xff] %v1251
        %1268 = vst [vmem:[#allocation2 + $0x468] sm:$0xff] %v1252
        %1269 = vst [vmem:[#allocation2 + $0x470] sm:$0xff] %v1253
        %1270 = vst [vmem:[#allocation2 + $0x478] sm:$0xff] %v1254
        %v1271 = vld [vmem:[%s1] sm:$0xff]
        %v1272 = vld [vmem:[%s1 + $0x8] sm:$0xff]
        %v1273 = vld [vmem:[%s1 + $0x10] sm:$0xff]
        %v1274 = vld [vmem:[%s1 + $0x18] sm:$0xff]
        %v1275 = vld [vmem:[#allocation2] sm:$0xff]
        %v1276 = vld [vmem:[#allocation2 + $0x8] sm:$0xff]
        %v1277 = vld [vmem:[#allocation2 + $0x10] sm:$0xff]
        %v1278 = vld [vmem:[#allocation2 + $0x18] sm:$0xff]
        %v1279 = vld [vmem:[#allocation2 + $0x20] sm:$0xff]
        %v1280 = vld [vmem:[#allocation2 + $0x28] sm:$0xff]
        %v1281 = vld [vmem:[#allocation2 + $0x30] sm:$0xff]
        %v1282 = vld [vmem:[#allocation2 + $0x38] sm:$0xff]
        %v1283 = vld [vmem:[#allocation2 + $0x40] sm:$0xff]
        %v1284 = vld [vmem:[#allocation2 + $0x48] sm:$0xff]
        %v1285 = vld [vmem:[#allocation2 + $0x50] sm:$0xff]
        %v1286 = vld [vmem:[#allocation2 + $0x58] sm:$0xff]
        %v1287 = vld [vmem:[#allocation2 + $0x60] sm:$0xff]
        %v1288 = vld [vmem:[#allocation2 + $0x68] sm:$0xff]
        %v1289 = vld [vmem:[#allocation2 + $0x70] sm:$0xff]
        %v1290 = vld [vmem:[#allocation2 + $0x78] sm:$0xff]
        %v1291 = vld [vmem:[#allocation2 + $0x80] sm:$0xff]
        %v1292 = vld [vmem:[#allocation2 + $0x88] sm:$0xff]
        %v1293 = vld [vmem:[#allocation2 + $0x90] sm:$0xff]
        %v1294 = vld [vmem:[#allocation2 + $0x98] sm:$0xff]
        %v1295 = vld [vmem:[#allocation2 + $0xa0] sm:$0xff]
        %v1296 = vld [vmem:[#allocation2 + $0xa8] sm:$0xff]
        %v1297 = vld [vmem:[#allocation2 + $0xb0] sm:$0xff]
        %v1298 = vld [vmem:[#allocation2 + $0xb8] sm:$0xff]
        %v1299 = vld [vmem:[#allocation2 + $0xc0] sm:$0xff]
        %v1300 = vld [vmem:[#allocation2 + $0xc8] sm:$0xff]
        %v1301 = vld [vmem:[#allocation2 + $0xd0] sm:$0xff]
        %v1302 = vld [vmem:[#allocation2 + $0xd8] sm:$0xff]
        %v1303 = vld [vmem:[#allocation2 + $0xe0] sm:$0xff]
        %v1304 = vld [vmem:[#allocation2 + $0xe8] sm:$0xff]
        %v1305 = vld [vmem:[#allocation2 + $0xf0] sm:$0xff]
        %v1306 = vld [vmem:[#allocation2 + $0xf8] sm:$0xff]
        %v1307 = vld [vmem:[#allocation2 + $0x100] sm:$0xff]
        %v1308 = vld [vmem:[#allocation2 + $0x108] sm:$0xff]
        %v1309 = vld [vmem:[#allocation2 + $0x110] sm:$0xff]
        %v1310 = vld [vmem:[#allocation2 + $0x118] sm:$0xff]
        %v1311 = vld [vmem:[#allocation2 + $0x120] sm:$0xff]
        %v1312 = vld [vmem:[#allocation2 + $0x128] sm:$0xff]
        %v1313 = vld [vmem:[#allocation2 + $0x130] sm:$0xff]
        %v1314 = vld [vmem:[#allocation2 + $0x138] sm:$0xff]
        %v1315 = vld [vmem:[#allocation2 + $0x140] sm:$0xff]
        %v1316 = vld [vmem:[#allocation2 + $0x148] sm:$0xff]
        %v1317 = vld [vmem:[#allocation2 + $0x150] sm:$0xff]
        %v1318 = vld [vmem:[#allocation2 + $0x158] sm:$0xff]
        %v1319 = vld [vmem:[#allocation2 + $0x160] sm:$0xff]
        %v1320 = vld [vmem:[#allocation2 + $0x168] sm:$0xff]
        %v1321 = vld [vmem:[#allocation2 + $0x170] sm:$0xff]
        %v1322 = vld [vmem:[#allocation2 + $0x178] sm:$0xff]
        %v1323 = vld [vmem:[#allocation2 + $0x180] sm:$0xff]
        %v1324 = vld [vmem:[#allocation2 + $0x188] sm:$0xff]
        %v1325 = vld [vmem:[#allocation2 + $0x190] sm:$0xff]
        %v1326 = vld [vmem:[#allocation2 + $0x198] sm:$0xff]
        %v1327 = vld [vmem:[#allocation2 + $0x1a0] sm:$0xff]
        %v1328 = vld [vmem:[#allocation2 + $0x1a8] sm:$0xff]
        %v1329 = vld [vmem:[#allocation2 + $0x1b0] sm:$0xff]
        %v1330 = vld [vmem:[#allocation2 + $0x1b8] sm:$0xff]
        %v1331 = vld [vmem:[#allocation2 + $0x1c0] sm:$0xff]
        %v1332 = vld [vmem:[#allocation2 + $0x1c8] sm:$0xff]
        %v1333 = vld [vmem:[#allocation2 + $0x1d0] sm:$0xff]
        %v1334 = vld [vmem:[#allocation2 + $0x1d8] sm:$0xff]
        %v1335 = vld [vmem:[#allocation2 + $0x1e0] sm:$0xff]
        %v1336 = vld [vmem:[#allocation2 + $0x1e8] sm:$0xff]
        %v1337 = vld [vmem:[#allocation2 + $0x1f0] sm:$0xff]
        %v1338 = vld [vmem:[#allocation2 + $0x1f8] sm:$0xff]
        %v1339 = vld [vmem:[#allocation2 + $0x200] sm:$0xff]
        %v1340 = vld [vmem:[#allocation2 + $0x208] sm:$0xff]
        %v1341 = vld [vmem:[#allocation2 + $0x210] sm:$0xff]
        %v1342 = vld [vmem:[#allocation2 + $0x218] sm:$0xff]
        %v1343 = vld [vmem:[#allocation2 + $0x220] sm:$0xff]
        %v1344 = vld [vmem:[#allocation2 + $0x228] sm:$0xff]
        %v1345 = vld [vmem:[#allocation2 + $0x230] sm:$0xff]
        %v1346 = vld [vmem:[#allocation2 + $0x238] sm:$0xff]
        %v1347 = vld [vmem:[#allocation2 + $0x240] sm:$0xff]
        %v1348 = vld [vmem:[#allocation2 + $0x248] sm:$0xff]
        %v1349 = vld [vmem:[#allocation2 + $0x250] sm:$0xff]
        %v1350 = vld [vmem:[#allocation2 + $0x258] sm:$0xff]
        %v1351 = vld [vmem:[#allocation2 + $0x260] sm:$0xff]
        %v1352 = vld [vmem:[#allocation2 + $0x268] sm:$0xff]
        %v1353 = vld [vmem:[#allocation2 + $0x270] sm:$0xff]
        %v1354 = vld [vmem:[#allocation2 + $0x278] sm:$0xff]
        %v1355 = vld [vmem:[#allocation2 + $0x280] sm:$0xff]
        %v1356 = vld [vmem:[#allocation2 + $0x288] sm:$0xff]
        %v1357 = vld [vmem:[#allocation2 + $0x290] sm:$0xff]
        %v1358 = vld [vmem:[#allocation2 + $0x298] sm:$0xff]
        %v1359 = vld [vmem:[#allocation2 + $0x2a0] sm:$0xff]
        %v1360 = vld [vmem:[#allocation2 + $0x2a8] sm:$0xff]
        %v1361 = vld [vmem:[#allocation2 + $0x2b0] sm:$0xff]
        %v1362 = vld [vmem:[#allocation2 + $0x2b8] sm:$0xff]
        %v1363 = vld [vmem:[#allocation2 + $0x2c0] sm:$0xff]
        %v1364 = vld [vmem:[#allocation2 + $0x2c8] sm:$0xff]
        %v1365 = vld [vmem:[#allocation2 + $0x2d0] sm:$0xff]
        %v1366 = vld [vmem:[#allocation2 + $0x2d8] sm:$0xff]
        %v1367 = vld [vmem:[#allocation2 + $0x2e0] sm:$0xff]
        %v1368 = vld [vmem:[#allocation2 + $0x2e8] sm:$0xff]
        %v1369 = vld [vmem:[#allocation2 + $0x2f0] sm:$0xff]
        %v1370 = vld [vmem:[#allocation2 + $0x2f8] sm:$0xff]
        %v1371 = vld [vmem:[#allocation2 + $0x300] sm:$0xff]
        %v1372 = vld [vmem:[#allocation2 + $0x308] sm:$0xff]
        %v1373 = vld [vmem:[#allocation2 + $0x310] sm:$0xff]
        %v1374 = vld [vmem:[#allocation2 + $0x318] sm:$0xff]
        %v1375 = vld [vmem:[#allocation2 + $0x320] sm:$0xff]
        %v1376 = vld [vmem:[#allocation2 + $0x328] sm:$0xff]
        %v1377 = vld [vmem:[#allocation2 + $0x330] sm:$0xff]
        %v1378 = vld [vmem:[#allocation2 + $0x338] sm:$0xff]
        %v1379 = vld [vmem:[#allocation2 + $0x340] sm:$0xff]
        %v1380 = vld [vmem:[#allocation2 + $0x348] sm:$0xff]
        %v1381 = vld [vmem:[#allocation2 + $0x350] sm:$0xff]
        %v1382 = vld [vmem:[#allocation2 + $0x358] sm:$0xff]
        %v1383 = vld [vmem:[#allocation2 + $0x360] sm:$0xff]
        %v1384 = vld [vmem:[#allocation2 + $0x368] sm:$0xff]
        %v1385 = vld [vmem:[#allocation2 + $0x370] sm:$0xff]
        %v1386 = vld [vmem:[#allocation2 + $0x378] sm:$0xff]
        %v1387 = vld [vmem:[#allocation2 + $0x380] sm:$0xff]
        %v1388 = vld [vmem:[#allocation2 + $0x388] sm:$0xff]
        %v1389 = vld [vmem:[#allocation2 + $0x390] sm:$0xff]
        %v1390 = vld [vmem:[#allocation2 + $0x398] sm:$0xff]
        %v1391 = vld [vmem:[#allocation2 + $0x3a0] sm:$0xff]
        %v1392 = vld [vmem:[#allocation2 + $0x3a8] sm:$0xff]
        %v1393 = vld [vmem:[#allocation2 + $0x3b0] sm:$0xff]
        %v1394 = vld [vmem:[#allocation2 + $0x3b8] sm:$0xff]
        %v1395 = vld [vmem:[#allocation2 + $0x3c0] sm:$0xff]
        %v1396 = vld [vmem:[#allocation2 + $0x3c8] sm:$0xff]
        %v1397 = vld [vmem:[#allocation2 + $0x3d0] sm:$0xff]
        %v1398 = vld [vmem:[#allocation2 + $0x3d8] sm:$0xff]
        %v1399 = vld [vmem:[#allocation2 + $0x3e0] sm:$0xff]
        %v1400 = vld [vmem:[#allocation2 + $0x3e8] sm:$0xff]
        %v1401 = vld [vmem:[#allocation2 + $0x3f0] sm:$0xff]
        %v1402 = vld [vmem:[#allocation2 + $0x3f8] sm:$0xff]
        %v1403 = vld [vmem:[#allocation2 + $0x400] sm:$0xff]
        %v1404 = vld [vmem:[#allocation2 + $0x408] sm:$0xff]
        %v1405 = vld [vmem:[#allocation2 + $0x410] sm:$0xff]
        %v1406 = vld [vmem:[#allocation2 + $0x418] sm:$0xff]
        %v1407 = vld [vmem:[#allocation2 + $0x420] sm:$0xff]
        %v1408 = vld [vmem:[#allocation2 + $0x428] sm:$0xff]
        %v1409 = vld [vmem:[#allocation2 + $0x430] sm:$0xff]
        %v1410 = vld [vmem:[#allocation2 + $0x438] sm:$0xff]
        %v1411 = vld [vmem:[#allocation2 + $0x440] sm:$0xff]
        %v1412 = vld [vmem:[#allocation2 + $0x448] sm:$0xff]
        %v1413 = vld [vmem:[#allocation2 + $0x450] sm:$0xff]
        %v1414 = vld [vmem:[#allocation2 + $0x458] sm:$0xff]
        %v1415 = vld [vmem:[#allocation2 + $0x460] sm:$0xff]
        %v1416 = vld [vmem:[#allocation2 + $0x468] sm:$0xff]
        %v1417 = vld [vmem:[#allocation2 + $0x470] sm:$0xff]
        %v1418 = vld [vmem:[#allocation2 + $0x478] sm:$0xff]
        %1420 = vset.pattern.permute.xlu0 0
        %1421 = vperm.xlu0 %1420, %v605
        %v1422 = vpop.permute.xlu0 %1421
        %1425 = vset.pattern.permute.xlu0 0
        %1426 = vperm.xlu0 %1425, %v606
        %v1427 = vpop.permute.xlu0 %1426
        %vm1429 = vcmask 130048
        %v1431 = vsel %vm1429, %v1272, 0
        %v1434 = vsel %vm1429, %v1274, 0
        %1436 = vmatpush.msra.mxu0 %v1395
        %1437 = vmatpush.msra.mxu0 %v1387
        %1438 = vmatpush.msra.mxu0 %v1379
        %1439 = vmatpush.msra.mxu0 %v1371
        %1440 = vmatpush.msra.mxu0 %v1363
        %1441 = vmatpush.msra.mxu0 %v1355
        %1442 = vmatpush.msra.mxu0 %v1347
        %1443 = vmatpush.msra.mxu0 %v1339
        %1444 = vmatpush.msra.mxu0 %v1331
        %1445 = vmatpush.msra.mxu0 %v1323
        %1446 = vmatpush.msra.mxu0 %v1315
        %1447 = vmatpush.msra.mxu0 %v1307
        %1448 = vmatpush.msra.mxu0 %v1299
        %1449 = vmatpush.msra.mxu0 %v1291
        %1450 = vmatpush.msra.mxu0 %v1283
        %1451 = vmatpush.msra.mxu0 %v1275
        %1452 = vmatmul.f32.gmra.mxu0 %v1271
        %v1453 = vpop.f32.mrf.mxu0
        %v1454 = vadd.f32 %v1422, %v1453
        %1455 = vmatmul.f32.gmra.mxu0 %v1273
        %v1456 = vpop.f32.mrf.mxu0
        %v1457 = vadd.f32 %v1427, %v1456
        %1458 = vdwg.mxu0
        %1459 = vmatpush.msra.mxu0 0.0
        %1460 = vmatpush.msra.mxu0 0.0
        %1461 = vmatpush.msra.mxu0 0.0
        %1462 = vmatpush.msra.mxu0 0.0
        %1463 = vmatpush.msra.mxu0 0.0
        %1464 = vmatpush.msra.mxu0 0.0
        %1465 = vmatpush.msra.mxu0 0.0
        %1466 = vmatpush.msra.mxu0 0.0
        %1467 = vmatpush.msra.mxu0 0.0
        %1468 = vmatpush.msra.mxu0 0.0
        %1469 = vmatpush.msra.mxu0 0.0
        %1470 = vmatpush.msra.mxu0 0.0
        %1471 = vmatpush.msra.mxu0 0.0
        %1472 = vmatpush.msra.mxu0 0.0
        %1473 = vmatpush.msra.mxu0 %v1411
        %1474 = vmatpush.msra.mxu0 %v1403
        %1475 = vmatmul.f32.gmra.mxu0 %v1431
        %v1476 = vpop.f32.mrf.mxu0
        %v1477 = vadd.f32 %v1454, %v1476
        %1478 = vmatmul.f32.gmra.mxu0 %v1434
        %v1479 = vpop.f32.mrf.mxu0
        %v1480 = vadd.f32 %v1457, %v1479
        %1481 = vdwg.mxu0
        %1482 = vmatpush.msra.mxu0 %v1396
        %1483 = vmatpush.msra.mxu0 %v1388
        %1484 = vmatpush.msra.mxu0 %v1380
        %1485 = vmatpush.msra.mxu0 %v1372
        %1486 = vmatpush.msra.mxu0 %v1364
        %1487 = vmatpush.msra.mxu0 %v1356
        %1488 = vmatpush.msra.mxu0 %v1348
        %1489 = vmatpush.msra.mxu0 %v1340
        %1490 = vmatpush.msra.mxu0 %v1332
        %1491 = vmatpush.msra.mxu0 %v1324
        %1492 = vmatpush.msra.mxu0 %v1316
        %1493 = vmatpush.msra.mxu0 %v1308
        %1494 = vmatpush.msra.mxu0 %v1300
        %1495 = vmatpush.msra.mxu0 %v1292
        %1496 = vmatpush.msra.mxu0 %v1284
        %1497 = vmatpush.msra.mxu0 %v1276
        %1498 = vmatmul.f32.gmra.mxu0 %v1271
        %v1499 = vpop.f32.mrf.mxu0
        %v1500 = vadd.f32 %v1422, %v1499
        %1501 = vmatmul.f32.gmra.mxu0 %v1273
        %v1502 = vpop.f32.mrf.mxu0
        %v1503 = vadd.f32 %v1427, %v1502
        %1504 = vdwg.mxu0
        %1505 = vmatpush.msra.mxu0 0.0
        %1506 = vmatpush.msra.mxu0 0.0
        %1507 = vmatpush.msra.mxu0 0.0
        %1508 = vmatpush.msra.mxu0 0.0
        %1509 = vmatpush.msra.mxu0 0.0
        %1510 = vmatpush.msra.mxu0 0.0
        %1511 = vmatpush.msra.mxu0 0.0
        %1512 = vmatpush.msra.mxu0 0.0
        %1513 = vmatpush.msra.mxu0 0.0
        %1514 = vmatpush.msra.mxu0 0.0
        %1515 = vmatpush.msra.mxu0 0.0
        %1516 = vmatpush.msra.mxu0 0.0
        %1517 = vmatpush.msra.mxu0 0.0
        %1518 = vmatpush.msra.mxu0 0.0
        %1519 = vmatpush.msra.mxu0 %v1412
        %1520 = vmatpush.msra.mxu0 %v1404
        %1521 = vmatmul.f32.gmra.mxu0 %v1431
        %v1522 = vpop.f32.mrf.mxu0
        %v1523 = vadd.f32 %v1500, %v1522
        %1524 = vmatmul.f32.gmra.mxu0 %v1434
        %v1525 = vpop.f32.mrf.mxu0
        %v1526 = vadd.f32 %v1503, %v1525
        %1527 = vdwg.mxu0
        %1528 = vmatpush.msra.mxu0 %v1397
        %1529 = vmatpush.msra.mxu0 %v1389
        %1530 = vmatpush.msra.mxu0 %v1381
        %1531 = vmatpush.msra.mxu0 %v1373
        %1532 = vmatpush.msra.mxu0 %v1365
        %1533 = vmatpush.msra.mxu0 %v1357
        %1534 = vmatpush.msra.mxu0 %v1349
        %1535 = vmatpush.msra.mxu0 %v1341
        %1536 = vmatpush.msra.mxu0 %v1333
        %1537 = vmatpush.msra.mxu0 %v1325
        %1538 = vmatpush.msra.mxu0 %v1317
        %1539 = vmatpush.msra.mxu0 %v1309
        %1540 = vmatpush.msra.mxu0 %v1301
        %1541 = vmatpush.msra.mxu0 %v1293
        %1542 = vmatpush.msra.mxu0 %v1285
        %1543 = vmatpush.msra.mxu0 %v1277
        %1544 = vmatmul.f32.gmra.mxu0 %v1271
        %v1545 = vpop.f32.mrf.mxu0
        %v1546 = vadd.f32 %v1422, %v1545
        %1547 = vmatmul.f32.gmra.mxu0 %v1273
        %v1548 = vpop.f32.mrf.mxu0
        %v1549 = vadd.f32 %v1427, %v1548
        %1550 = vdwg.mxu0
        %1551 = vmatpush.msra.mxu0 0.0
        %1552 = vmatpush.msra.mxu0 0.0
        %1553 = vmatpush.msra.mxu0 0.0
        %1554 = vmatpush.msra.mxu0 0.0
        %1555 = vmatpush.msra.mxu0 0.0
        %1556 = vmatpush.msra.mxu0 0.0
        %1557 = vmatpush.msra.mxu0 0.0
        %1558 = vmatpush.msra.mxu0 0.0
        %1559 = vmatpush.msra.mxu0 0.0
        %1560 = vmatpush.msra.mxu0 0.0
        %1561 = vmatpush.msra.mxu0 0.0
        %1562 = vmatpush.msra.mxu0 0.0
        %1563 = vmatpush.msra.mxu0 0.0
        %1564 = vmatpush.msra.mxu0 0.0
        %1565 = vmatpush.msra.mxu0 %v1413
        %1566 = vmatpush.msra.mxu0 %v1405
        %1567 = vmatmul.f32.gmra.mxu0 %v1431
        %v1568 = vpop.f32.mrf.mxu0
        %v1569 = vadd.f32 %v1546, %v1568
        %1570 = vmatmul.f32.gmra.mxu0 %v1434
        %v1571 = vpop.f32.mrf.mxu0
        %v1572 = vadd.f32 %v1549, %v1571
        %1573 = vdwg.mxu0
        %1574 = vmatpush.msra.mxu0 %v1398
        %1575 = vmatpush.msra.mxu0 %v1390
        %1576 = vmatpush.msra.mxu0 %v1382
        %1577 = vmatpush.msra.mxu0 %v1374
        %1578 = vmatpush.msra.mxu0 %v1366
        %1579 = vmatpush.msra.mxu0 %v1358
        %1580 = vmatpush.msra.mxu0 %v1350
        %1581 = vmatpush.msra.mxu0 %v1342
        %1582 = vmatpush.msra.mxu0 %v1334
        %1583 = vmatpush.msra.mxu0 %v1326
        %1584 = vmatpush.msra.mxu0 %v1318
        %1585 = vmatpush.msra.mxu0 %v1310
        %1586 = vmatpush.msra.mxu0 %v1302
        %1587 = vmatpush.msra.mxu0 %v1294
        %1588 = vmatpush.msra.mxu0 %v1286
        %1589 = vmatpush.msra.mxu0 %v1278
        %1590 = vmatmul.f32.gmra.mxu0 %v1271
        %v1591 = vpop.f32.mrf.mxu0
        %v1592 = vadd.f32 %v1422, %v1591
        %1593 = vmatmul.f32.gmra.mxu0 %v1273
        %v1594 = vpop.f32.mrf.mxu0
        %v1595 = vadd.f32 %v1427, %v1594
        %1596 = vdwg.mxu0
        %1597 = vmatpush.msra.mxu0 0.0
        %1598 = vmatpush.msra.mxu0 0.0
        %1599 = vmatpush.msra.mxu0 0.0
        %1600 = vmatpush.msra.mxu0 0.0
        %1601 = vmatpush.msra.mxu0 0.0
        %1602 = vmatpush.msra.mxu0 0.0
        %1603 = vmatpush.msra.mxu0 0.0
        %1604 = vmatpush.msra.mxu0 0.0
        %1605 = vmatpush.msra.mxu0 0.0
        %1606 = vmatpush.msra.mxu0 0.0
        %1607 = vmatpush.msra.mxu0 0.0
        %1608 = vmatpush.msra.mxu0 0.0
        %1609 = vmatpush.msra.mxu0 0.0
        %1610 = vmatpush.msra.mxu0 0.0
        %1611 = vmatpush.msra.mxu0 %v1414
        %1612 = vmatpush.msra.mxu0 %v1406
        %1613 = vmatmul.f32.gmra.mxu0 %v1431
        %v1614 = vpop.f32.mrf.mxu0
        %v1615 = vadd.f32 %v1592, %v1614
        %1616 = vmatmul.f32.gmra.mxu0 %v1434
        %v1617 = vpop.f32.mrf.mxu0
        %v1618 = vadd.f32 %v1595, %v1617
        %1619 = vdwg.mxu0
        %1620 = vmatpush.msra.mxu0 %v1399
        %1621 = vmatpush.msra.mxu0 %v1391
        %1622 = vmatpush.msra.mxu0 %v1383
        %1623 = vmatpush.msra.mxu0 %v1375
        %1624 = vmatpush.msra.mxu0 %v1367
        %1625 = vmatpush.msra.mxu0 %v1359
        %1626 = vmatpush.msra.mxu0 %v1351
        %1627 = vmatpush.msra.mxu0 %v1343
        %1628 = vmatpush.msra.mxu0 %v1335
        %1629 = vmatpush.msra.mxu0 %v1327
        %1630 = vmatpush.msra.mxu0 %v1319
        %1631 = vmatpush.msra.mxu0 %v1311
        %1632 = vmatpush.msra.mxu0 %v1303
        %1633 = vmatpush.msra.mxu0 %v1295
        %1634 = vmatpush.msra.mxu0 %v1287
        %1635 = vmatpush.msra.mxu0 %v1279
        %1636 = vmatmul.f32.gmra.mxu0 %v1271
        %v1637 = vpop.f32.mrf.mxu0
        %v1638 = vadd.f32 %v1422, %v1637
        %1639 = vmatmul.f32.gmra.mxu0 %v1273
        %v1640 = vpop.f32.mrf.mxu0
        %v1641 = vadd.f32 %v1427, %v1640
        %1642 = vdwg.mxu0
        %1643 = vmatpush.msra.mxu0 0.0
        %1644 = vmatpush.msra.mxu0 0.0
        %1645 = vmatpush.msra.mxu0 0.0
        %1646 = vmatpush.msra.mxu0 0.0
        %1647 = vmatpush.msra.mxu0 0.0
        %1648 = vmatpush.msra.mxu0 0.0
        %1649 = vmatpush.msra.mxu0 0.0
        %1650 = vmatpush.msra.mxu0 0.0
        %1651 = vmatpush.msra.mxu0 0.0
        %1652 = vmatpush.msra.mxu0 0.0
        %1653 = vmatpush.msra.mxu0 0.0
        %1654 = vmatpush.msra.mxu0 0.0
        %1655 = vmatpush.msra.mxu0 0.0
        %1656 = vmatpush.msra.mxu0 0.0
        %1657 = vmatpush.msra.mxu0 %v1415
        %1658 = vmatpush.msra.mxu0 %v1407
        %1659 = vmatmul.f32.gmra.mxu0 %v1431
        %v1660 = vpop.f32.mrf.mxu0
        %v1661 = vadd.f32 %v1638, %v1660
        %1662 = vmatmul.f32.gmra.mxu0 %v1434
        %v1663 = vpop.f32.mrf.mxu0
        %v1664 = vadd.f32 %v1641, %v1663
        %1665 = vdwg.mxu0
        %1666 = vmatpush.msra.mxu0 %v1400
        %1667 = vmatpush.msra.mxu0 %v1392
        %1668 = vmatpush.msra.mxu0 %v1384
        %1669 = vmatpush.msra.mxu0 %v1376
        %1670 = vmatpush.msra.mxu0 %v1368
        %1671 = vmatpush.msra.mxu0 %v1360
        %1672 = vmatpush.msra.mxu0 %v1352
        %1673 = vmatpush.msra.mxu0 %v1344
        %1674 = vmatpush.msra.mxu0 %v1336
        %1675 = vmatpush.msra.mxu0 %v1328
        %1676 = vmatpush.msra.mxu0 %v1320
        %1677 = vmatpush.msra.mxu0 %v1312
        %1678 = vmatpush.msra.mxu0 %v1304
        %1679 = vmatpush.msra.mxu0 %v1296
        %1680 = vmatpush.msra.mxu0 %v1288
        %1681 = vmatpush.msra.mxu0 %v1280
        %1682 = vmatmul.f32.gmra.mxu0 %v1271
        %v1683 = vpop.f32.mrf.mxu0
        %v1684 = vadd.f32 %v1422, %v1683
        %1685 = vmatmul.f32.gmra.mxu0 %v1273
        %v1686 = vpop.f32.mrf.mxu0
        %v1687 = vadd.f32 %v1427, %v1686
        %1688 = vdwg.mxu0
        %1689 = vmatpush.msra.mxu0 0.0
        %1690 = vmatpush.msra.mxu0 0.0
        %1691 = vmatpush.msra.mxu0 0.0
        %1692 = vmatpush.msra.mxu0 0.0
        %1693 = vmatpush.msra.mxu0 0.0
        %1694 = vmatpush.msra.mxu0 0.0
        %1695 = vmatpush.msra.mxu0 0.0
        %1696 = vmatpush.msra.mxu0 0.0
        %1697 = vmatpush.msra.mxu0 0.0
        %1698 = vmatpush.msra.mxu0 0.0
        %1699 = vmatpush.msra.mxu0 0.0
        %1700 = vmatpush.msra.mxu0 0.0
        %1701 = vmatpush.msra.mxu0 0.0
        %1702 = vmatpush.msra.mxu0 0.0
        %1703 = vmatpush.msra.mxu0 %v1416
        %1704 = vmatpush.msra.mxu0 %v1408
        %1705 = vmatmul.f32.gmra.mxu0 %v1431
        %v1706 = vpop.f32.mrf.mxu0
        %v1707 = vadd.f32 %v1684, %v1706
        %1708 = vmatmul.f32.gmra.mxu0 %v1434
        %v1709 = vpop.f32.mrf.mxu0
        %v1710 = vadd.f32 %v1687, %v1709
        %1711 = vdwg.mxu0
        %1712 = vmatpush.msra.mxu0 %v1401
        %1713 = vmatpush.msra.mxu0 %v1393
        %1714 = vmatpush.msra.mxu0 %v1385
        %1715 = vmatpush.msra.mxu0 %v1377
        %1716 = vmatpush.msra.mxu0 %v1369
        %1717 = vmatpush.msra.mxu0 %v1361
        %1718 = vmatpush.msra.mxu0 %v1353
        %1719 = vmatpush.msra.mxu0 %v1345
        %1720 = vmatpush.msra.mxu0 %v1337
        %1721 = vmatpush.msra.mxu0 %v1329
        %1722 = vmatpush.msra.mxu0 %v1321
        %1723 = vmatpush.msra.mxu0 %v1313
        %1724 = vmatpush.msra.mxu0 %v1305
        %1725 = vmatpush.msra.mxu0 %v1297
        %1726 = vmatpush.msra.mxu0 %v1289
        %1727 = vmatpush.msra.mxu0 %v1281
        %1728 = vmatmul.f32.gmra.mxu0 %v1271
        %v1729 = vpop.f32.mrf.mxu0
        %v1730 = vadd.f32 %v1422, %v1729
        %1731 = vmatmul.f32.gmra.mxu0 %v1273
        %v1732 = vpop.f32.mrf.mxu0
        %v1733 = vadd.f32 %v1427, %v1732
        %1734 = vdwg.mxu0
        %1735 = vmatpush.msra.mxu0 0.0
        %1736 = vmatpush.msra.mxu0 0.0
        %1737 = vmatpush.msra.mxu0 0.0
        %1738 = vmatpush.msra.mxu0 0.0
        %1739 = vmatpush.msra.mxu0 0.0
        %1740 = vmatpush.msra.mxu0 0.0
        %1741 = vmatpush.msra.mxu0 0.0
        %1742 = vmatpush.msra.mxu0 0.0
        %1743 = vmatpush.msra.mxu0 0.0
        %1744 = vmatpush.msra.mxu0 0.0
        %1745 = vmatpush.msra.mxu0 0.0
        %1746 = vmatpush.msra.mxu0 0.0
        %1747 = vmatpush.msra.mxu0 0.0
        %1748 = vmatpush.msra.mxu0 0.0
        %1749 = vmatpush.msra.mxu0 %v1417
        %1750 = vmatpush.msra.mxu0 %v1409
        %1751 = vmatmul.f32.gmra.mxu0 %v1431
        %v1752 = vpop.f32.mrf.mxu0
        %v1753 = vadd.f32 %v1730, %v1752
        %1754 = vmatmul.f32.gmra.mxu0 %v1434
        %v1755 = vpop.f32.mrf.mxu0
        %v1756 = vadd.f32 %v1733, %v1755
        %1757 = vdwg.mxu0
        %1758 = vmatpush.msra.mxu0 %v1402
        %1759 = vmatpush.msra.mxu0 %v1394
        %1760 = vmatpush.msra.mxu0 %v1386
        %1761 = vmatpush.msra.mxu0 %v1378
        %1762 = vmatpush.msra.mxu0 %v1370
        %1763 = vmatpush.msra.mxu0 %v1362
        %1764 = vmatpush.msra.mxu0 %v1354
        %1765 = vmatpush.msra.mxu0 %v1346
        %1766 = vmatpush.msra.mxu0 %v1338
        %1767 = vmatpush.msra.mxu0 %v1330
        %1768 = vmatpush.msra.mxu0 %v1322
        %1769 = vmatpush.msra.mxu0 %v1314
        %1770 = vmatpush.msra.mxu0 %v1306
        %1771 = vmatpush.msra.mxu0 %v1298
        %1772 = vmatpush.msra.mxu0 %v1290
        %1773 = vmatpush.msra.mxu0 %v1282
        %1774 = vmatmul.f32.gmra.mxu0 %v1271
        %v1775 = vpop.f32.mrf.mxu0
        %v1776 = vadd.f32 %v1422, %v1775
        %1777 = vmatmul.f32.gmra.mxu0 %v1273
        %v1778 = vpop.f32.mrf.mxu0
        %v1779 = vadd.f32 %v1427, %v1778
        %1780 = vdwg.mxu0
        %1781 = vmatpush.msra.mxu0 0.0
        %1782 = vmatpush.msra.mxu0 0.0
        %1783 = vmatpush.msra.mxu0 0.0
        %1784 = vmatpush.msra.mxu0 0.0
        %1785 = vmatpush.msra.mxu0 0.0
        %1786 = vmatpush.msra.mxu0 0.0
        %1787 = vmatpush.msra.mxu0 0.0
        %1788 = vmatpush.msra.mxu0 0.0
        %1789 = vmatpush.msra.mxu0 0.0
        %1790 = vmatpush.msra.mxu0 0.0
        %1791 = vmatpush.msra.mxu0 0.0
        %1792 = vmatpush.msra.mxu0 0.0
        %1793 = vmatpush.msra.mxu0 0.0
        %1794 = vmatpush.msra.mxu0 0.0
        %1795 = vmatpush.msra.mxu0 %v1418
        %1796 = vmatpush.msra.mxu0 %v1410
        %1797 = vmatmul.f32.gmra.mxu0 %v1431
        %v1798 = vpop.f32.mrf.mxu0
        %v1799 = vadd.f32 %v1776, %v1798
        %1800 = vmatmul.f32.gmra.mxu0 %v1434
        %v1801 = vpop.f32.mrf.mxu0
        %v1802 = vadd.f32 %v1779, %v1801
        %1803 = vdwg.mxu0
        %v1804 = vmax.f32 %v1477, 0.0
        %v1805 = vmax.f32 %v1523, 0.0
        %v1806 = vmax.f32 %v1569, 0.0
        %v1807 = vmax.f32 %v1615, 0.0
        %v1808 = vmax.f32 %v1661, 0.0
        %v1809 = vmax.f32 %v1707, 0.0
        %v1810 = vmax.f32 %v1753, 0.0
        %v1811 = vmax.f32 %v1799, 0.0
        %v1812 = vmax.f32 %v1480, 0.0
        %v1813 = vmax.f32 %v1526, 0.0
        %v1814 = vmax.f32 %v1572, 0.0
        %v1815 = vmax.f32 %v1618, 0.0
        %v1816 = vmax.f32 %v1664, 0.0
        %v1817 = vmax.f32 %v1710, 0.0
        %v1818 = vmax.f32 %v1756, 0.0
        %v1819 = vmax.f32 %v1802, 0.0
        %1820 = vrot.lane.b32.xlu0 %v1804, 17
        %v1821 = vpop.permute.xlu0 %1820
        %1822 = vrot.lane.b32.xlu0 %v1812, 17
        %v1823 = vpop.permute.xlu0 %1822
        %1824 = vrot.lane.b32.xlu0 %v1805, 17
        %v1825 = vpop.permute.xlu0 %1824
        %1826 = vrot.lane.b32.xlu0 %v1813, 17
        %v1827 = vpop.permute.xlu0 %1826
        %1828 = vrot.lane.b32.xlu0 %v1806, 17
        %v1829 = vpop.permute.xlu0 %1828
        %1830 = vrot.lane.b32.xlu0 %v1814, 17
        %v1831 = vpop.permute.xlu0 %1830
        %1832 = vrot.lane.b32.xlu0 %v1807, 17
        %v1833 = vpop.permute.xlu0 %1832
        %1834 = vrot.lane.b32.xlu0 %v1815, 17
        %v1835 = vpop.permute.xlu0 %1834
        %1836 = vrot.lane.b32.xlu0 %v1808, 17
        %v1837 = vpop.permute.xlu0 %1836
        %1838 = vrot.lane.b32.xlu0 %v1816, 17
        %v1839 = vpop.permute.xlu0 %1838
        %1840 = vrot.lane.b32.xlu0 %v1809, 17
        %v1841 = vpop.permute.xlu0 %1840
        %1842 = vrot.lane.b32.xlu0 %v1817, 17
        %v1843 = vpop.permute.xlu0 %1842
        %1844 = vrot.lane.b32.xlu0 %v1810, 17
        %v1845 = vpop.permute.xlu0 %1844
        %1846 = vrot.lane.b32.xlu0 %v1818, 17
        %v1847 = vpop.permute.xlu0 %1846
        %1848 = vrot.lane.b32.xlu0 %v1811, 17
        %v1849 = vpop.permute.xlu0 %1848
        %1850 = vrot.lane.b32.xlu0 %v1819, 17
        %v1851 = vpop.permute.xlu0 %1850
        %v1852 = vsel %vm639, %v1845, %v1849
        %v1853 = vsel %vm639, %v1847, %v1851
        %v1854 = vsel %vm639, %v1841, %v1845
        %v1855 = vsel %vm639, %v1843, %v1847
        %v1856 = vsel %vm639, %v1837, %v1841
        %v1857 = vsel %vm639, %v1839, %v1843
        %v1858 = vsel %vm639, %v1833, %v1837
        %v1859 = vsel %vm639, %v1835, %v1839
        %v1860 = vsel %vm639, %v1829, %v1833
        %v1861 = vsel %vm639, %v1831, %v1835
        %v1862 = vsel %vm639, %v1825, %v1829
        %v1863 = vsel %vm639, %v1827, %v1831
        %v1864 = vsel %vm639, %v1821, %v1825
        %v1865 = vsel %vm639, %v1823, %v1827
        %v1866 = vsel %vm639, %v1849, %v1821
        %v1867 = vsel %vm639, %v1851, %v1823
        %v1868 = vmul.f32 %v1866, %v445
        %v1869 = vmul.f32 %v1864, %v446
        %v1870 = vmul.f32 %v1862, %v447
        %v1871 = vmul.f32 %v1860, %v448
        %v1872 = vmul.f32 %v1858, %v449
        %v1873 = vmul.f32 %v1856, %v450
        %v1874 = vmul.f32 %v1854, %v451
        %v1875 = vmul.f32 %v1852, %v452
        %v1876 = vmul.f32 %v1867, %v445
        %v1877 = vmul.f32 %v1865, %v446
        %v1878 = vmul.f32 %v1863, %v447
        %v1879 = vmul.f32 %v1861, %v448
        %v1880 = vmul.f32 %v1859, %v449
        %v1881 = vmul.f32 %v1857, %v450
        %v1882 = vmul.f32 %v1855, %v451
        %v1883 = vmul.f32 %v1853, %v452
        %1884 = vst [vmem:[#allocation2] sm:$0xff] %v1868
        %1885 = vst [vmem:[#allocation2 + $0x8] sm:$0xff] %v1869
        %1886 = vst [vmem:[#allocation2 + $0x10] sm:$0xff] %v1870
        %1887 = vst [vmem:[#allocation2 + $0x18] sm:$0xff] %v1871
        %1888 = vst [vmem:[#allocation2 + $0x20] sm:$0xff] %v1872
        %1889 = vst [vmem:[#allocation2 + $0x28] sm:$0xff] %v1873
        %1890 = vst [vmem:[#allocation2 + $0x30] sm:$0xff] %v1874
        %1891 = vst [vmem:[#allocation2 + $0x38] sm:$0xff] %v1875
        %1892 = vst [vmem:[#allocation2 + $0x40] sm:$0xff] %v1876
        %1893 = vst [vmem:[#allocation2 + $0x48] sm:$0xff] %v1877
        %1894 = vst [vmem:[#allocation2 + $0x50] sm:$0xff] %v1878
        %1895 = vst [vmem:[#allocation2 + $0x58] sm:$0xff] %v1879
        %1896 = vst [vmem:[#allocation2 + $0x60] sm:$0xff] %v1880
        %1897 = vst [vmem:[#allocation2 + $0x68] sm:$0xff] %v1881
        %1898 = vst [vmem:[#allocation2 + $0x70] sm:$0xff] %v1882
        %1899 = vst [vmem:[#allocation2 + $0x78] sm:$0xff] %v1883
        %1900 = vrot.lane.b32.xlu0 %v1804, 16
        %v1901 = vpop.permute.xlu0 %1900
        %1902 = vrot.lane.b32.xlu0 %v1812, 16
        %v1903 = vpop.permute.xlu0 %1902
        %1904 = vrot.lane.b32.xlu0 %v1805, 16
        %v1905 = vpop.permute.xlu0 %1904
        %1906 = vrot.lane.b32.xlu0 %v1813, 16
        %v1907 = vpop.permute.xlu0 %1906
        %1908 = vrot.lane.b32.xlu0 %v1806, 16
        %v1909 = vpop.permute.xlu0 %1908
        %1910 = vrot.lane.b32.xlu0 %v1814, 16
        %v1911 = vpop.permute.xlu0 %1910
        %1912 = vrot.lane.b32.xlu0 %v1807, 16
        %v1913 = vpop.permute.xlu0 %1912
        %1914 = vrot.lane.b32.xlu0 %v1815, 16
        %v1915 = vpop.permute.xlu0 %1914
        %1916 = vrot.lane.b32.xlu0 %v1808, 16
        %v1917 = vpop.permute.xlu0 %1916
        %1918 = vrot.lane.b32.xlu0 %v1816, 16
        %v1919 = vpop.permute.xlu0 %1918
        %1920 = vrot.lane.b32.xlu0 %v1809, 16
        %v1921 = vpop.permute.xlu0 %1920
        %1922 = vrot.lane.b32.xlu0 %v1817, 16
        %v1923 = vpop.permute.xlu0 %1922
        %1924 = vrot.lane.b32.xlu0 %v1810, 16
        %v1925 = vpop.permute.xlu0 %1924
        %1926 = vrot.lane.b32.xlu0 %v1818, 16
        %v1927 = vpop.permute.xlu0 %1926
        %1928 = vrot.lane.b32.xlu0 %v1811, 16
        %v1929 = vpop.permute.xlu0 %1928
        %1930 = vrot.lane.b32.xlu0 %v1819, 16
        %v1931 = vpop.permute.xlu0 %1930
        %v1932 = vsel %vm720, %v1925, %v1929
        %v1933 = vsel %vm720, %v1927, %v1931
        %v1934 = vsel %vm720, %v1921, %v1925
        %v1935 = vsel %vm720, %v1923, %v1927
        %v1936 = vsel %vm720, %v1917, %v1921
        %v1937 = vsel %vm720, %v1919, %v1923
        %v1938 = vsel %vm720, %v1913, %v1917
        %v1939 = vsel %vm720, %v1915, %v1919
        %v1940 = vsel %vm720, %v1909, %v1913
        %v1941 = vsel %vm720, %v1911, %v1915
        %v1942 = vsel %vm720, %v1905, %v1909
        %v1943 = vsel %vm720, %v1907, %v1911
        %v1944 = vsel %vm720, %v1901, %v1905
        %v1945 = vsel %vm720, %v1903, %v1907
        %v1946 = vsel %vm720, %v1929, %v1901
        %v1947 = vsel %vm720, %v1931, %v1903
        %v1948 = vmul.f32 %v1946, %v461
        %v1949 = vmul.f32 %v1944, %v462
        %v1950 = vmul.f32 %v1942, %v463
        %v1951 = vmul.f32 %v1940, %v464
        %v1952 = vmul.f32 %v1938, %v465
        %v1953 = vmul.f32 %v1936, %v466
        %v1954 = vmul.f32 %v1934, %v467
        %v1955 = vmul.f32 %v1932, %v468
        %v1956 = vmul.f32 %v1947, %v461
        %v1957 = vmul.f32 %v1945, %v462
        %v1958 = vmul.f32 %v1943, %v463
        %v1959 = vmul.f32 %v1941, %v464
        %v1960 = vmul.f32 %v1939, %v465
        %v1961 = vmul.f32 %v1937, %v466
        %v1962 = vmul.f32 %v1935, %v467
        %v1963 = vmul.f32 %v1933, %v468
        %1964 = vst [vmem:[#allocation2 + $0x80] sm:$0xff] %v1948
        %1965 = vst [vmem:[#allocation2 + $0x88] sm:$0xff] %v1949
        %1966 = vst [vmem:[#allocation2 + $0x90] sm:$0xff] %v1950
        %1967 = vst [vmem:[#allocation2 + $0x98] sm:$0xff] %v1951
        %1968 = vst [vmem:[#allocation2 + $0xa0] sm:$0xff] %v1952
        %1969 = vst [vmem:[#allocation2 + $0xa8] sm:$0xff] %v1953
        %1970 = vst [vmem:[#allocation2 + $0xb0] sm:$0xff] %v1954
        %1971 = vst [vmem:[#allocation2 + $0xb8] sm:$0xff] %v1955
        %1972 = vst [vmem:[#allocation2 + $0xc0] sm:$0xff] %v1956
        %1973 = vst [vmem:[#allocation2 + $0xc8] sm:$0xff] %v1957
        %1974 = vst [vmem:[#allocation2 + $0xd0] sm:$0xff] %v1958
        %1975 = vst [vmem:[#allocation2 + $0xd8] sm:$0xff] %v1959
        %1976 = vst [vmem:[#allocation2 + $0xe0] sm:$0xff] %v1960
        %1977 = vst [vmem:[#allocation2 + $0xe8] sm:$0xff] %v1961
        %1978 = vst [vmem:[#allocation2 + $0xf0] sm:$0xff] %v1962
        %1979 = vst [vmem:[#allocation2 + $0xf8] sm:$0xff] %v1963
        %1980 = vrot.lane.b32.xlu0 %v1804, 15
        %v1981 = vpop.permute.xlu0 %1980
        %1982 = vrot.lane.b32.xlu0 %v1812, 15
        %v1983 = vpop.permute.xlu0 %1982
        %1984 = vrot.lane.b32.xlu0 %v1805, 15
        %v1985 = vpop.permute.xlu0 %1984
        %1986 = vrot.lane.b32.xlu0 %v1813, 15
        %v1987 = vpop.permute.xlu0 %1986
        %1988 = vrot.lane.b32.xlu0 %v1806, 15
        %v1989 = vpop.permute.xlu0 %1988
        %1990 = vrot.lane.b32.xlu0 %v1814, 15
        %v1991 = vpop.permute.xlu0 %1990
        %1992 = vrot.lane.b32.xlu0 %v1807, 15
        %v1993 = vpop.permute.xlu0 %1992
        %1994 = vrot.lane.b32.xlu0 %v1815, 15
        %v1995 = vpop.permute.xlu0 %1994
        %1996 = vrot.lane.b32.xlu0 %v1808, 15
        %v1997 = vpop.permute.xlu0 %1996
        %1998 = vrot.lane.b32.xlu0 %v1816, 15
        %v1999 = vpop.permute.xlu0 %1998
        %2000 = vrot.lane.b32.xlu0 %v1809, 15
        %v2001 = vpop.permute.xlu0 %2000
        %2002 = vrot.lane.b32.xlu0 %v1817, 15
        %v2003 = vpop.permute.xlu0 %2002
        %2004 = vrot.lane.b32.xlu0 %v1810, 15
        %v2005 = vpop.permute.xlu0 %2004
        %2006 = vrot.lane.b32.xlu0 %v1818, 15
        %v2007 = vpop.permute.xlu0 %2006
        %2008 = vrot.lane.b32.xlu0 %v1811, 15
        %v2009 = vpop.permute.xlu0 %2008
        %2010 = vrot.lane.b32.xlu0 %v1819, 15
        %v2011 = vpop.permute.xlu0 %2010
        %v2012 = vsel %vm801, %v2005, %v2009
        %v2013 = vsel %vm801, %v2007, %v2011
        %v2014 = vsel %vm801, %v2001, %v2005
        %v2015 = vsel %vm801, %v2003, %v2007
        %v2016 = vsel %vm801, %v1997, %v2001
        %v2017 = vsel %vm801, %v1999, %v2003
        %v2018 = vsel %vm801, %v1993, %v1997
        %v2019 = vsel %vm801, %v1995, %v1999
        %v2020 = vsel %vm801, %v1989, %v1993
        %v2021 = vsel %vm801, %v1991, %v1995
        %v2022 = vsel %vm801, %v1985, %v1989
        %v2023 = vsel %vm801, %v1987, %v1991
        %v2024 = vsel %vm801, %v1981, %v1985
        %v2025 = vsel %vm801, %v1983, %v1987
        %v2026 = vsel %vm801, %v2009, %v1981
        %v2027 = vsel %vm801, %v2011, %v1983
        %v2028 = vmul.f32 %v2026, %v493
        %v2029 = vmul.f32 %v2024, %v494
        %v2030 = vmul.f32 %v2022, %v495
        %v2031 = vmul.f32 %v2020, %v496
        %v2032 = vmul.f32 %v2018, %v497
        %v2033 = vmul.f32 %v2016, %v498
        %v2034 = vmul.f32 %v2014, %v499
        %v2035 = vmul.f32 %v2012, %v500
        %v2036 = vmul.f32 %v2027, %v493
        %v2037 = vmul.f32 %v2025, %v494
        %v2038 = vmul.f32 %v2023, %v495
        %v2039 = vmul.f32 %v2021, %v496
        %v2040 = vmul.f32 %v2019, %v497
        %v2041 = vmul.f32 %v2017, %v498
        %v2042 = vmul.f32 %v2015, %v499
        %v2043 = vmul.f32 %v2013, %v500
        %2044 = vst [vmem:[#allocation2 + $0x100] sm:$0xff] %v2028
        %2045 = vst [vmem:[#allocation2 + $0x108] sm:$0xff] %v2029
        %2046 = vst [vmem:[#allocation2 + $0x110] sm:$0xff] %v2030
        %2047 = vst [vmem:[#allocation2 + $0x118] sm:$0xff] %v2031
        %2048 = vst [vmem:[#allocation2 + $0x120] sm:$0xff] %v2032
        %2049 = vst [vmem:[#allocation2 + $0x128] sm:$0xff] %v2033
        %2050 = vst [vmem:[#allocation2 + $0x130] sm:$0xff] %v2034
        %2051 = vst [vmem:[#allocation2 + $0x138] sm:$0xff] %v2035
        %2052 = vst [vmem:[#allocation2 + $0x140] sm:$0xff] %v2036
        %2053 = vst [vmem:[#allocation2 + $0x148] sm:$0xff] %v2037
        %2054 = vst [vmem:[#allocation2 + $0x150] sm:$0xff] %v2038
        %2055 = vst [vmem:[#allocation2 + $0x158] sm:$0xff] %v2039
        %2056 = vst [vmem:[#allocation2 + $0x160] sm:$0xff] %v2040
        %2057 = vst [vmem:[#allocation2 + $0x168] sm:$0xff] %v2041
        %2058 = vst [vmem:[#allocation2 + $0x170] sm:$0xff] %v2042
        %2059 = vst [vmem:[#allocation2 + $0x178] sm:$0xff] %v2043
        %2060 = vrot.lane.b32.xlu0 %v1804, 1
        %v2061 = vpop.permute.xlu0 %2060
        %2062 = vrot.lane.b32.xlu0 %v1812, 1
        %v2063 = vpop.permute.xlu0 %2062
        %2064 = vrot.lane.b32.xlu0 %v1805, 1
        %v2065 = vpop.permute.xlu0 %2064
        %2066 = vrot.lane.b32.xlu0 %v1813, 1
        %v2067 = vpop.permute.xlu0 %2066
        %2068 = vrot.lane.b32.xlu0 %v1806, 1
        %v2069 = vpop.permute.xlu0 %2068
        %2070 = vrot.lane.b32.xlu0 %v1814, 1
        %v2071 = vpop.permute.xlu0 %2070
        %2072 = vrot.lane.b32.xlu0 %v1807, 1
        %v2073 = vpop.permute.xlu0 %2072
        %2074 = vrot.lane.b32.xlu0 %v1815, 1
        %v2075 = vpop.permute.xlu0 %2074
        %2076 = vrot.lane.b32.xlu0 %v1808, 1
        %v2077 = vpop.permute.xlu0 %2076
        %2078 = vrot.lane.b32.xlu0 %v1816, 1
        %v2079 = vpop.permute.xlu0 %2078
        %2080 = vrot.lane.b32.xlu0 %v1809, 1
        %v2081 = vpop.permute.xlu0 %2080
        %2082 = vrot.lane.b32.xlu0 %v1817, 1
        %v2083 = vpop.permute.xlu0 %2082
        %2084 = vrot.lane.b32.xlu0 %v1810, 1
        %v2085 = vpop.permute.xlu0 %2084
        %2086 = vrot.lane.b32.xlu0 %v1818, 1
        %v2087 = vpop.permute.xlu0 %2086
        %2088 = vrot.lane.b32.xlu0 %v1811, 1
        %v2089 = vpop.permute.xlu0 %2088
        %2090 = vrot.lane.b32.xlu0 %v1819, 1
        %v2091 = vpop.permute.xlu0 %2090
        %v2092 = vsel %vm882, %v2085, %v2089
        %v2093 = vsel %vm882, %v2087, %v2091
        %v2094 = vsel %vm882, %v2081, %v2085
        %v2095 = vsel %vm882, %v2083, %v2087
        %v2096 = vsel %vm882, %v2077, %v2081
        %v2097 = vsel %vm882, %v2079, %v2083
        %v2098 = vsel %vm882, %v2073, %v2077
        %v2099 = vsel %vm882, %v2075, %v2079
        %v2100 = vsel %vm882, %v2069, %v2073
        %v2101 = vsel %vm882, %v2071, %v2075
        %v2102 = vsel %vm882, %v2065, %v2069
        %v2103 = vsel %vm882, %v2067, %v2071
        %v2104 = vsel %vm882, %v2061, %v2065
        %v2105 = vsel %vm882, %v2063, %v2067
        %v2106 = vsel %vm882, %v2089, %v2061
        %v2107 = vsel %vm882, %v2091, %v2063
        %v2108 = vmul.f32 %v2106, %v509
        %v2109 = vmul.f32 %v2104, %v510
        %v2110 = vmul.f32 %v2102, %v511
        %v2111 = vmul.f32 %v2100, %v512
        %v2112 = vmul.f32 %v2098, %v513
        %v2113 = vmul.f32 %v2096, %v514
        %v2114 = vmul.f32 %v2094, %v515
        %v2115 = vmul.f32 %v2092, %v516
        %v2116 = vmul.f32 %v2107, %v509
        %v2117 = vmul.f32 %v2105, %v510
        %v2118 = vmul.f32 %v2103, %v511
        %v2119 = vmul.f32 %v2101, %v512
        %v2120 = vmul.f32 %v2099, %v513
        %v2121 = vmul.f32 %v2097, %v514
        %v2122 = vmul.f32 %v2095, %v515
        %v2123 = vmul.f32 %v2093, %v516
        %2124 = vst [vmem:[#allocation2 + $0x180] sm:$0xff] %v2108
        %2125 = vst [vmem:[#allocation2 + $0x188] sm:$0xff] %v2109
        %2126 = vst [vmem:[#allocation2 + $0x190] sm:$0xff] %v2110
        %2127 = vst [vmem:[#allocation2 + $0x198] sm:$0xff] %v2111
        %2128 = vst [vmem:[#allocation2 + $0x1a0] sm:$0xff] %v2112
        %2129 = vst [vmem:[#allocation2 + $0x1a8] sm:$0xff] %v2113
        %2130 = vst [vmem:[#allocation2 + $0x1b0] sm:$0xff] %v2114
        %2131 = vst [vmem:[#allocation2 + $0x1b8] sm:$0xff] %v2115
        %2132 = vst [vmem:[#allocation2 + $0x1c0] sm:$0xff] %v2116
        %2133 = vst [vmem:[#allocation2 + $0x1c8] sm:$0xff] %v2117
        %2134 = vst [vmem:[#allocation2 + $0x1d0] sm:$0xff] %v2118
        %2135 = vst [vmem:[#allocation2 + $0x1d8] sm:$0xff] %v2119
        %2136 = vst [vmem:[#allocation2 + $0x1e0] sm:$0xff] %v2120
        %2137 = vst [vmem:[#allocation2 + $0x1e8] sm:$0xff] %v2121
        %2138 = vst [vmem:[#allocation2 + $0x1f0] sm:$0xff] %v2122
        %2139 = vst [vmem:[#allocation2 + $0x1f8] sm:$0xff] %v2123
        %2140 = vst [vmem:[#allocation2 + $0x200] sm:$0xff] %v1804
        %2141 = vst [vmem:[#allocation2 + $0x208] sm:$0xff] %v1805
        %2142 = vst [vmem:[#allocation2 + $0x210] sm:$0xff] %v1806
        %2143 = vst [vmem:[#allocation2 + $0x218] sm:$0xff] %v1807
        %2144 = vst [vmem:[#allocation2 + $0x220] sm:$0xff] %v1808
        %2145 = vst [vmem:[#allocation2 + $0x228] sm:$0xff] %v1809
        %2146 = vst [vmem:[#allocation2 + $0x230] sm:$0xff] %v1810
        %2147 = vst [vmem:[#allocation2 + $0x238] sm:$0xff] %v1811
        %2148 = vst [vmem:[#allocation2 + $0x240] sm:$0xff] %v1812
        %2149 = vst [vmem:[#allocation2 + $0x248] sm:$0xff] %v1813
        %2150 = vst [vmem:[#allocation2 + $0x250] sm:$0xff] %v1814
        %2151 = vst [vmem:[#allocation2 + $0x258] sm:$0xff] %v1815
        %2152 = vst [vmem:[#allocation2 + $0x260] sm:$0xff] %v1816
        %2153 = vst [vmem:[#allocation2 + $0x268] sm:$0xff] %v1817
        %2154 = vst [vmem:[#allocation2 + $0x270] sm:$0xff] %v1818
        %2155 = vst [vmem:[#allocation2 + $0x278] sm:$0xff] %v1819
        %2156 = vrot.lane.b32.xlu0 %v1804, 127
        %v2157 = vpop.permute.xlu0 %2156
        %2158 = vrot.lane.b32.xlu0 %v1812, 127
        %v2159 = vpop.permute.xlu0 %2158
        %2160 = vrot.lane.b32.xlu0 %v1805, 127
        %v2161 = vpop.permute.xlu0 %2160
        %2162 = vrot.lane.b32.xlu0 %v1813, 127
        %v2163 = vpop.permute.xlu0 %2162
        %2164 = vrot.lane.b32.xlu0 %v1806, 127
        %v2165 = vpop.permute.xlu0 %2164
        %2166 = vrot.lane.b32.xlu0 %v1814, 127
        %v2167 = vpop.permute.xlu0 %2166
        %2168 = vrot.lane.b32.xlu0 %v1807, 127
        %v2169 = vpop.permute.xlu0 %2168
        %2170 = vrot.lane.b32.xlu0 %v1815, 127
        %v2171 = vpop.permute.xlu0 %2170
        %2172 = vrot.lane.b32.xlu0 %v1808, 127
        %v2173 = vpop.permute.xlu0 %2172
        %2174 = vrot.lane.b32.xlu0 %v1816, 127
        %v2175 = vpop.permute.xlu0 %2174
        %2176 = vrot.lane.b32.xlu0 %v1809, 127
        %v2177 = vpop.permute.xlu0 %2176
        %2178 = vrot.lane.b32.xlu0 %v1817, 127
        %v2179 = vpop.permute.xlu0 %2178
        %2180 = vrot.lane.b32.xlu0 %v1810, 127
        %v2181 = vpop.permute.xlu0 %2180
        %2182 = vrot.lane.b32.xlu0 %v1818, 127
        %v2183 = vpop.permute.xlu0 %2182
        %2184 = vrot.lane.b32.xlu0 %v1811, 127
        %v2185 = vpop.permute.xlu0 %2184
        %2186 = vrot.lane.b32.xlu0 %v1819, 127
        %v2187 = vpop.permute.xlu0 %2186
        %v2188 = vsel %vm979, %v2181, %v2185
        %v2189 = vsel %vm979, %v2183, %v2187
        %v2190 = vsel %vm979, %v2177, %v2181
        %v2191 = vsel %vm979, %v2179, %v2183
        %v2192 = vsel %vm979, %v2173, %v2177
        %v2193 = vsel %vm979, %v2175, %v2179
        %v2194 = vsel %vm979, %v2169, %v2173
        %v2195 = vsel %vm979, %v2171, %v2175
        %v2196 = vsel %vm979, %v2165, %v2169
        %v2197 = vsel %vm979, %v2167, %v2171
        %v2198 = vsel %vm979, %v2161, %v2165
        %v2199 = vsel %vm979, %v2163, %v2167
        %v2200 = vsel %vm979, %v2157, %v2161
        %v2201 = vsel %vm979, %v2159, %v2163
        %v2202 = vsel %vm979, %v2185, %v2157
        %v2203 = vsel %vm979, %v2187, %v2159
        %v2204 = vmul.f32 %v2200, %v525
        %v2205 = vmul.f32 %v2198, %v526
        %v2206 = vmul.f32 %v2196, %v527
        %v2207 = vmul.f32 %v2194, %v528
        %v2208 = vmul.f32 %v2192, %v529
        %v2209 = vmul.f32 %v2190, %v530
        %v2210 = vmul.f32 %v2188, %v531
        %v2211 = vmul.f32 %v2202, %v532
        %v2212 = vmul.f32 %v2201, %v525
        %v2213 = vmul.f32 %v2199, %v526
        %v2214 = vmul.f32 %v2197, %v527
        %v2215 = vmul.f32 %v2195, %v528
        %v2216 = vmul.f32 %v2193, %v529
        %v2217 = vmul.f32 %v2191, %v530
        %v2218 = vmul.f32 %v2189, %v531
        %v2219 = vmul.f32 %v2203, %v532
        %2220 = vst [vmem:[#allocation2 + $0x280] sm:$0xff] %v2204
        %2221 = vst [vmem:[#allocation2 + $0x288] sm:$0xff] %v2205
        %2222 = vst [vmem:[#allocation2 + $0x290] sm:$0xff] %v2206
        %2223 = vst [vmem:[#allocation2 + $0x298] sm:$0xff] %v2207
        %2224 = vst [vmem:[#allocation2 + $0x2a0] sm:$0xff] %v2208
        %2225 = vst [vmem:[#allocation2 + $0x2a8] sm:$0xff] %v2209
        %2226 = vst [vmem:[#allocation2 + $0x2b0] sm:$0xff] %v2210
        %2227 = vst [vmem:[#allocation2 + $0x2b8] sm:$0xff] %v2211
        %2228 = vst [vmem:[#allocation2 + $0x2c0] sm:$0xff] %v2212
        %2229 = vst [vmem:[#allocation2 + $0x2c8] sm:$0xff] %v2213
        %2230 = vst [vmem:[#allocation2 + $0x2d0] sm:$0xff] %v2214
        %2231 = vst [vmem:[#allocation2 + $0x2d8] sm:$0xff] %v2215
        %2232 = vst [vmem:[#allocation2 + $0x2e0] sm:$0xff] %v2216
        %2233 = vst [vmem:[#allocation2 + $0x2e8] sm:$0xff] %v2217
        %2234 = vst [vmem:[#allocation2 + $0x2f0] sm:$0xff] %v2218
        %2235 = vst [vmem:[#allocation2 + $0x2f8] sm:$0xff] %v2219
        %2236 = vrot.lane.b32.xlu0 %v1804, 113
        %v2237 = vpop.permute.xlu0 %2236
        %2238 = vrot.lane.b32.xlu0 %v1812, 113
        %v2239 = vpop.permute.xlu0 %2238
        %2240 = vrot.lane.b32.xlu0 %v1805, 113
        %v2241 = vpop.permute.xlu0 %2240
        %2242 = vrot.lane.b32.xlu0 %v1813, 113
        %v2243 = vpop.permute.xlu0 %2242
        %2244 = vrot.lane.b32.xlu0 %v1806, 113
        %v2245 = vpop.permute.xlu0 %2244
        %2246 = vrot.lane.b32.xlu0 %v1814, 113
        %v2247 = vpop.permute.xlu0 %2246
        %2248 = vrot.lane.b32.xlu0 %v1807, 113
        %v2249 = vpop.permute.xlu0 %2248
        %2250 = vrot.lane.b32.xlu0 %v1815, 113
        %v2251 = vpop.permute.xlu0 %2250
        %2252 = vrot.lane.b32.xlu0 %v1808, 113
        %v2253 = vpop.permute.xlu0 %2252
        %2254 = vrot.lane.b32.xlu0 %v1816, 113
        %v2255 = vpop.permute.xlu0 %2254
        %2256 = vrot.lane.b32.xlu0 %v1809, 113
        %v2257 = vpop.permute.xlu0 %2256
        %2258 = vrot.lane.b32.xlu0 %v1817, 113
        %v2259 = vpop.permute.xlu0 %2258
        %2260 = vrot.lane.b32.xlu0 %v1810, 113
        %v2261 = vpop.permute.xlu0 %2260
        %2262 = vrot.lane.b32.xlu0 %v1818, 113
        %v2263 = vpop.permute.xlu0 %2262
        %2264 = vrot.lane.b32.xlu0 %v1811, 113
        %v2265 = vpop.permute.xlu0 %2264
        %2266 = vrot.lane.b32.xlu0 %v1819, 113
        %v2267 = vpop.permute.xlu0 %2266
        %v2268 = vsel %vm1060, %v2261, %v2265
        %v2269 = vsel %vm1060, %v2263, %v2267
        %v2270 = vsel %vm1060, %v2257, %v2261
        %v2271 = vsel %vm1060, %v2259, %v2263
        %v2272 = vsel %vm1060, %v2253, %v2257
        %v2273 = vsel %vm1060, %v2255, %v2259
        %v2274 = vsel %vm1060, %v2249, %v2253
        %v2275 = vsel %vm1060, %v2251, %v2255
        %v2276 = vsel %vm1060, %v2245, %v2249
        %v2277 = vsel %vm1060, %v2247, %v2251
        %v2278 = vsel %vm1060, %v2241, %v2245
        %v2279 = vsel %vm1060, %v2243, %v2247
        %v2280 = vsel %vm1060, %v2237, %v2241
        %v2281 = vsel %vm1060, %v2239, %v2243
        %v2282 = vsel %vm1060, %v2265, %v2237
        %v2283 = vsel %vm1060, %v2267, %v2239
        %v2284 = vmul.f32 %v2280, %v557
        %v2285 = vmul.f32 %v2278, %v558
        %v2286 = vmul.f32 %v2276, %v559
        %v2287 = vmul.f32 %v2274, %v560
        %v2288 = vmul.f32 %v2272, %v561
        %v2289 = vmul.f32 %v2270, %v562
        %v2290 = vmul.f32 %v2268, %v563
        %v2291 = vmul.f32 %v2282, %v564
        %v2292 = vmul.f32 %v2281, %v557
        %v2293 = vmul.f32 %v2279, %v558
        %v2294 = vmul.f32 %v2277, %v559
        %v2295 = vmul.f32 %v2275, %v560
        %v2296 = vmul.f32 %v2273, %v561
        %v2297 = vmul.f32 %v2271, %v562
        %v2298 = vmul.f32 %v2269, %v563
        %v2299 = vmul.f32 %v2283, %v564
        %2300 = vst [vmem:[#allocation2 + $0x300] sm:$0xff] %v2284
        %2301 = vst [vmem:[#allocation2 + $0x308] sm:$0xff] %v2285
        %2302 = vst [vmem:[#allocation2 + $0x310] sm:$0xff] %v2286
        %2303 = vst [vmem:[#allocation2 + $0x318] sm:$0xff] %v2287
        %2304 = vst [vmem:[#allocation2 + $0x320] sm:$0xff] %v2288
        %2305 = vst [vmem:[#allocation2 + $0x328] sm:$0xff] %v2289
        %2306 = vst [vmem:[#allocation2 + $0x330] sm:$0xff] %v2290
        %2307 = vst [vmem:[#allocation2 + $0x338] sm:$0xff] %v2291
        %2308 = vst [vmem:[#allocation2 + $0x340] sm:$0xff] %v2292
        %2309 = vst [vmem:[#allocation2 + $0x348] sm:$0xff] %v2293
        %2310 = vst [vmem:[#allocation2 + $0x350] sm:$0xff] %v2294
        %2311 = vst [vmem:[#allocation2 + $0x358] sm:$0xff] %v2295
        %2312 = vst [vmem:[#allocation2 + $0x360] sm:$0xff] %v2296
        %2313 = vst [vmem:[#allocation2 + $0x368] sm:$0xff] %v2297
        %2314 = vst [vmem:[#allocation2 + $0x370] sm:$0xff] %v2298
        %2315 = vst [vmem:[#allocation2 + $0x378] sm:$0xff] %v2299
        %2316 = vrot.lane.b32.xlu0 %v1804, 112
        %v2317 = vpop.permute.xlu0 %2316
        %2318 = vrot.lane.b32.xlu0 %v1812, 112
        %v2319 = vpop.permute.xlu0 %2318
        %2320 = vrot.lane.b32.xlu0 %v1805, 112
        %v2321 = vpop.permute.xlu0 %2320
        %2322 = vrot.lane.b32.xlu0 %v1813, 112
        %v2323 = vpop.permute.xlu0 %2322
        %2324 = vrot.lane.b32.xlu0 %v1806, 112
        %v2325 = vpop.permute.xlu0 %2324
        %2326 = vrot.lane.b32.xlu0 %v1814, 112
        %v2327 = vpop.permute.xlu0 %2326
        %2328 = vrot.lane.b32.xlu0 %v1807, 112
        %v2329 = vpop.permute.xlu0 %2328
        %2330 = vrot.lane.b32.xlu0 %v1815, 112
        %v2331 = vpop.permute.xlu0 %2330
        %2332 = vrot.lane.b32.xlu0 %v1808, 112
        %v2333 = vpop.permute.xlu0 %2332
        %2334 = vrot.lane.b32.xlu0 %v1816, 112
        %v2335 = vpop.permute.xlu0 %2334
        %2336 = vrot.lane.b32.xlu0 %v1809, 112
        %v2337 = vpop.permute.xlu0 %2336
        %2338 = vrot.lane.b32.xlu0 %v1817, 112
        %v2339 = vpop.permute.xlu0 %2338
        %2340 = vrot.lane.b32.xlu0 %v1810, 112
        %v2341 = vpop.permute.xlu0 %2340
        %2342 = vrot.lane.b32.xlu0 %v1818, 112
        %v2343 = vpop.permute.xlu0 %2342
        %2344 = vrot.lane.b32.xlu0 %v1811, 112
        %v2345 = vpop.permute.xlu0 %2344
        %2346 = vrot.lane.b32.xlu0 %v1819, 112
        %v2347 = vpop.permute.xlu0 %2346
        %v2348 = vsel %vm1141, %v2341, %v2345
        %v2349 = vsel %vm1141, %v2343, %v2347
        %v2350 = vsel %vm1141, %v2337, %v2341
        %v2351 = vsel %vm1141, %v2339, %v2343
        %v2352 = vsel %vm1141, %v2333, %v2337
        %v2353 = vsel %vm1141, %v2335, %v2339
        %v2354 = vsel %vm1141, %v2329, %v2333
        %v2355 = vsel %vm1141, %v2331, %v2335
        %v2356 = vsel %vm1141, %v2325, %v2329
        %v2357 = vsel %vm1141, %v2327, %v2331
        %v2358 = vsel %vm1141, %v2321, %v2325
        %v2359 = vsel %vm1141, %v2323, %v2327
        %v2360 = vsel %vm1141, %v2317, %v2321
        %v2361 = vsel %vm1141, %v2319, %v2323
        %v2362 = vsel %vm1141, %v2345, %v2317
        %v2363 = vsel %vm1141, %v2347, %v2319
        %v2364 = vmul.f32 %v2360, %v573
        %v2365 = vmul.f32 %v2358, %v574
        %v2366 = vmul.f32 %v2356, %v575
        %v2367 = vmul.f32 %v2354, %v576
        %v2368 = vmul.f32 %v2352, %v577
        %v2369 = vmul.f32 %v2350, %v578
        %v2370 = vmul.f32 %v2348, %v579
        %v2371 = vmul.f32 %v2362, %v580
        %v2372 = vmul.f32 %v2361, %v573
        %v2373 = vmul.f32 %v2359, %v574
        %v2374 = vmul.f32 %v2357, %v575
        %v2375 = vmul.f32 %v2355, %v576
        %v2376 = vmul.f32 %v2353, %v577
        %v2377 = vmul.f32 %v2351, %v578
        %v2378 = vmul.f32 %v2349, %v579
        %v2379 = vmul.f32 %v2363, %v580
        %2380 = vst [vmem:[#allocation2 + $0x380] sm:$0xff] %v2364
        %2381 = vst [vmem:[#allocation2 + $0x388] sm:$0xff] %v2365
        %2382 = vst [vmem:[#allocation2 + $0x390] sm:$0xff] %v2366
        %2383 = vst [vmem:[#allocation2 + $0x398] sm:$0xff] %v2367
        %2384 = vst [vmem:[#allocation2 + $0x3a0] sm:$0xff] %v2368
        %2385 = vst [vmem:[#allocation2 + $0x3a8] sm:$0xff] %v2369
        %2386 = vst [vmem:[#allocation2 + $0x3b0] sm:$0xff] %v2370
        %2387 = vst [vmem:[#allocation2 + $0x3b8] sm:$0xff] %v2371
        %2388 = vst [vmem:[#allocation2 + $0x3c0] sm:$0xff] %v2372
        %2389 = vst [vmem:[#allocation2 + $0x3c8] sm:$0xff] %v2373
        %2390 = vst [vmem:[#allocation2 + $0x3d0] sm:$0xff] %v2374
        %2391 = vst [vmem:[#allocation2 + $0x3d8] sm:$0xff] %v2375
        %2392 = vst [vmem:[#allocation2 + $0x3e0] sm:$0xff] %v2376
        %2393 = vst [vmem:[#allocation2 + $0x3e8] sm:$0xff] %v2377
        %2394 = vst [vmem:[#allocation2 + $0x3f0] sm:$0xff] %v2378
        %2395 = vst [vmem:[#allocation2 + $0x3f8] sm:$0xff] %v2379
        %2396 = vrot.lane.b32.xlu0 %v1804, 111
        %v2397 = vpop.permute.xlu0 %2396
        %2398 = vrot.lane.b32.xlu0 %v1812, 111
        %v2399 = vpop.permute.xlu0 %2398
        %2400 = vrot.lane.b32.xlu0 %v1805, 111
        %v2401 = vpop.permute.xlu0 %2400
        %2402 = vrot.lane.b32.xlu0 %v1813, 111
        %v2403 = vpop.permute.xlu0 %2402
        %2404 = vrot.lane.b32.xlu0 %v1806, 111
        %v2405 = vpop.permute.xlu0 %2404
        %2406 = vrot.lane.b32.xlu0 %v1814, 111
        %v2407 = vpop.permute.xlu0 %2406
        %2408 = vrot.lane.b32.xlu0 %v1807, 111
        %v2409 = vpop.permute.xlu0 %2408
        %2410 = vrot.lane.b32.xlu0 %v1815, 111
        %v2411 = vpop.permute.xlu0 %2410
        %2412 = vrot.lane.b32.xlu0 %v1808, 111
        %v2413 = vpop.permute.xlu0 %2412
        %2414 = vrot.lane.b32.xlu0 %v1816, 111
        %v2415 = vpop.permute.xlu0 %2414
        %2416 = vrot.lane.b32.xlu0 %v1809, 111
        %v2417 = vpop.permute.xlu0 %2416
        %2418 = vrot.lane.b32.xlu0 %v1817, 111
        %v2419 = vpop.permute.xlu0 %2418
        %2420 = vrot.lane.b32.xlu0 %v1810, 111
        %v2421 = vpop.permute.xlu0 %2420
        %2422 = vrot.lane.b32.xlu0 %v1818, 111
        %v2423 = vpop.permute.xlu0 %2422
        %2424 = vrot.lane.b32.xlu0 %v1811, 111
        %v2425 = vpop.permute.xlu0 %2424
        %2426 = vrot.lane.b32.xlu0 %v1819, 111
        %v2427 = vpop.permute.xlu0 %2426
        %v2428 = vsel %vm1222, %v2421, %v2425
        %v2429 = vsel %vm1222, %v2423, %v2427
        %v2430 = vsel %vm1222, %v2417, %v2421
        %v2431 = vsel %vm1222, %v2419, %v2423
        %v2432 = vsel %vm1222, %v2413, %v2417
        %v2433 = vsel %vm1222, %v2415, %v2419
        %v2434 = vsel %vm1222, %v2409, %v2413
        %v2435 = vsel %vm1222, %v2411, %v2415
        %v2436 = vsel %vm1222, %v2405, %v2409
        %v2437 = vsel %vm1222, %v2407, %v2411
        %v2438 = vsel %vm1222, %v2401, %v2405
        %v2439 = vsel %vm1222, %v2403, %v2407
        %v2440 = vsel %vm1222, %v2397, %v2401
        %v2441 = vsel %vm1222, %v2399, %v2403
        %v2442 = vsel %vm1222, %v2425, %v2397
        %v2443 = vsel %vm1222, %v2427, %v2399
        %v2444 = vmul.f32 %v2440, %v597
        %v2445 = vmul.f32 %v2438, %v598
        %v2446 = vmul.f32 %v2436, %v599
        %v2447 = vmul.f32 %v2434, %v600
        %v2448 = vmul.f32 %v2432, %v601
        %v2449 = vmul.f32 %v2430, %v602
        %v2450 = vmul.f32 %v2428, %v603
        %v2451 = vmul.f32 %v2442, %v604
        %v2452 = vmul.f32 %v2441, %v597
        %v2453 = vmul.f32 %v2439, %v598
        %v2454 = vmul.f32 %v2437, %v599
        %v2455 = vmul.f32 %v2435, %v600
        %v2456 = vmul.f32 %v2433, %v601
        %v2457 = vmul.f32 %v2431, %v602
        %v2458 = vmul.f32 %v2429, %v603
        %v2459 = vmul.f32 %v2443, %v604
        %2460 = vst [vmem:[#allocation2 + $0x400] sm:$0xff] %v2444
        %2461 = vst [vmem:[#allocation2 + $0x408] sm:$0xff] %v2445
        %2462 = vst [vmem:[#allocation2 + $0x410] sm:$0xff] %v2446
        %2463 = vst [vmem:[#allocation2 + $0x418] sm:$0xff] %v2447
        %2464 = vst [vmem:[#allocation2 + $0x420] sm:$0xff] %v2448
        %2465 = vst [vmem:[#allocation2 + $0x428] sm:$0xff] %v2449
        %2466 = vst [vmem:[#allocation2 + $0x430] sm:$0xff] %v2450
        %2467 = vst [vmem:[#allocation2 + $0x438] sm:$0xff] %v2451
        %2468 = vst [vmem:[#allocation2 + $0x440] sm:$0xff] %v2452
        %2469 = vst [vmem:[#allocation2 + $0x448] sm:$0xff] %v2453
        %2470 = vst [vmem:[#allocation2 + $0x450] sm:$0xff] %v2454
        %2471 = vst [vmem:[#allocation2 + $0x458] sm:$0xff] %v2455
        %2472 = vst [vmem:[#allocation2 + $0x460] sm:$0xff] %v2456
        %2473 = vst [vmem:[#allocation2 + $0x468] sm:$0xff] %v2457
        %2474 = vst [vmem:[#allocation2 + $0x470] sm:$0xff] %v2458
        %2475 = vst [vmem:[#allocation2 + $0x478] sm:$0xff] %v2459
        %v2476 = vld [vmem:[#allocation6] sm:$0xff]
        %v2477 = vld [vmem:[#allocation6 + $0x8] sm:$0xff]
        %v2478 = vld [vmem:[#allocation6 + $0x10] sm:$0xff]
        %v2479 = vld [vmem:[#allocation6 + $0x18] sm:$0xff]
        %v2480 = vld [vmem:[#allocation2] sm:$0xff]
        %v2481 = vld [vmem:[#allocation2 + $0x8] sm:$0xff]
        %v2482 = vld [vmem:[#allocation2 + $0x10] sm:$0xff]
        %v2483 = vld [vmem:[#allocation2 + $0x18] sm:$0xff]
        %v2484 = vld [vmem:[#allocation2 + $0x20] sm:$0xff]
        %v2485 = vld [vmem:[#allocation2 + $0x28] sm:$0xff]
        %v2486 = vld [vmem:[#allocation2 + $0x30] sm:$0xff]
        %v2487 = vld [vmem:[#allocation2 + $0x38] sm:$0xff]
        %v2488 = vld [vmem:[#allocation2 + $0x40] sm:$0xff]
        %v2489 = vld [vmem:[#allocation2 + $0x48] sm:$0xff]
        %v2490 = vld [vmem:[#allocation2 + $0x50] sm:$0xff]
        %v2491 = vld [vmem:[#allocation2 + $0x58] sm:$0xff]
        %v2492 = vld [vmem:[#allocation2 + $0x60] sm:$0xff]
        %v2493 = vld [vmem:[#allocation2 + $0x68] sm:$0xff]
        %v2494 = vld [vmem:[#allocation2 + $0x70] sm:$0xff]
        %v2495 = vld [vmem:[#allocation2 + $0x78] sm:$0xff]
        %v2496 = vld [vmem:[#allocation2 + $0x80] sm:$0xff]
        %v2497 = vld [vmem:[#allocation2 + $0x88] sm:$0xff]
        %v2498 = vld [vmem:[#allocation2 + $0x90] sm:$0xff]
        %v2499 = vld [vmem:[#allocation2 + $0x98] sm:$0xff]
        %v2500 = vld [vmem:[#allocation2 + $0xa0] sm:$0xff]
        %v2501 = vld [vmem:[#allocation2 + $0xa8] sm:$0xff]
        %v2502 = vld [vmem:[#allocation2 + $0xb0] sm:$0xff]
        %v2503 = vld [vmem:[#allocation2 + $0xb8] sm:$0xff]
        %v2504 = vld [vmem:[#allocation2 + $0xc0] sm:$0xff]
        %v2505 = vld [vmem:[#allocation2 + $0xc8] sm:$0xff]
        %v2506 = vld [vmem:[#allocation2 + $0xd0] sm:$0xff]
        %v2507 = vld [vmem:[#allocation2 + $0xd8] sm:$0xff]
        %v2508 = vld [vmem:[#allocation2 + $0xe0] sm:$0xff]
        %v2509 = vld [vmem:[#allocation2 + $0xe8] sm:$0xff]
        %v2510 = vld [vmem:[#allocation2 + $0xf0] sm:$0xff]
        %v2511 = vld [vmem:[#allocation2 + $0xf8] sm:$0xff]
        %v2512 = vld [vmem:[#allocation2 + $0x100] sm:$0xff]
        %v2513 = vld [vmem:[#allocation2 + $0x108] sm:$0xff]
        %v2514 = vld [vmem:[#allocation2 + $0x110] sm:$0xff]
        %v2515 = vld [vmem:[#allocation2 + $0x118] sm:$0xff]
        %v2516 = vld [vmem:[#allocation2 + $0x120] sm:$0xff]
        %v2517 = vld [vmem:[#allocation2 + $0x128] sm:$0xff]
        %v2518 = vld [vmem:[#allocation2 + $0x130] sm:$0xff]
        %v2519 = vld [vmem:[#allocation2 + $0x138] sm:$0xff]
        %v2520 = vld [vmem:[#allocation2 + $0x140] sm:$0xff]
        %v2521 = vld [vmem:[#allocation2 + $0x148] sm:$0xff]
        %v2522 = vld [vmem:[#allocation2 + $0x150] sm:$0xff]
        %v2523 = vld [vmem:[#allocation2 + $0x158] sm:$0xff]
        %v2524 = vld [vmem:[#allocation2 + $0x160] sm:$0xff]
        %v2525 = vld [vmem:[#allocation2 + $0x168] sm:$0xff]
        %v2526 = vld [vmem:[#allocation2 + $0x170] sm:$0xff]
        %v2527 = vld [vmem:[#allocation2 + $0x178] sm:$0xff]
        %v2528 = vld [vmem:[#allocation2 + $0x180] sm:$0xff]
        %v2529 = vld [vmem:[#allocation2 + $0x188] sm:$0xff]
        %v2530 = vld [vmem:[#allocation2 + $0x190] sm:$0xff]
        %v2531 = vld [vmem:[#allocation2 + $0x198] sm:$0xff]
        %v2532 = vld [vmem:[#allocation2 + $0x1a0] sm:$0xff]
        %v2533 = vld [vmem:[#allocation2 + $0x1a8] sm:$0xff]
        %v2534 = vld [vmem:[#allocation2 + $0x1b0] sm:$0xff]
        %v2535 = vld [vmem:[#allocation2 + $0x1b8] sm:$0xff]
        %v2536 = vld [vmem:[#allocation2 + $0x1c0] sm:$0xff]
        %v2537 = vld [vmem:[#allocation2 + $0x1c8] sm:$0xff]
        %v2538 = vld [vmem:[#allocation2 + $0x1d0] sm:$0xff]
        %v2539 = vld [vmem:[#allocation2 + $0x1d8] sm:$0xff]
        %v2540 = vld [vmem:[#allocation2 + $0x1e0] sm:$0xff]
        %v2541 = vld [vmem:[#allocation2 + $0x1e8] sm:$0xff]
        %v2542 = vld [vmem:[#allocation2 + $0x1f0] sm:$0xff]
        %v2543 = vld [vmem:[#allocation2 + $0x1f8] sm:$0xff]
        %v2544 = vld [vmem:[#allocation2 + $0x200] sm:$0xff]
        %v2545 = vld [vmem:[#allocation2 + $0x208] sm:$0xff]
        %v2546 = vld [vmem:[#allocation2 + $0x210] sm:$0xff]
        %v2547 = vld [vmem:[#allocation2 + $0x218] sm:$0xff]
        %v2548 = vld [vmem:[#allocation2 + $0x220] sm:$0xff]
        %v2549 = vld [vmem:[#allocation2 + $0x228] sm:$0xff]
        %v2550 = vld [vmem:[#allocation2 + $0x230] sm:$0xff]
        %v2551 = vld [vmem:[#allocation2 + $0x238] sm:$0xff]
        %v2552 = vld [vmem:[#allocation2 + $0x240] sm:$0xff]
        %v2553 = vld [vmem:[#allocation2 + $0x248] sm:$0xff]
        %v2554 = vld [vmem:[#allocation2 + $0x250] sm:$0xff]
        %v2555 = vld [vmem:[#allocation2 + $0x258] sm:$0xff]
        %v2556 = vld [vmem:[#allocation2 + $0x260] sm:$0xff]
        %v2557 = vld [vmem:[#allocation2 + $0x268] sm:$0xff]
        %v2558 = vld [vmem:[#allocation2 + $0x270] sm:$0xff]
        %v2559 = vld [vmem:[#allocation2 + $0x278] sm:$0xff]
        %v2560 = vld [vmem:[#allocation2 + $0x280] sm:$0xff]
        %v2561 = vld [vmem:[#allocation2 + $0x288] sm:$0xff]
        %v2562 = vld [vmem:[#allocation2 + $0x290] sm:$0xff]
        %v2563 = vld [vmem:[#allocation2 + $0x298] sm:$0xff]
        %v2564 = vld [vmem:[#allocation2 + $0x2a0] sm:$0xff]
        %v2565 = vld [vmem:[#allocation2 + $0x2a8] sm:$0xff]
        %v2566 = vld [vmem:[#allocation2 + $0x2b0] sm:$0xff]
        %v2567 = vld [vmem:[#allocation2 + $0x2b8] sm:$0xff]
        %v2568 = vld [vmem:[#allocation2 + $0x2c0] sm:$0xff]
        %v2569 = vld [vmem:[#allocation2 + $0x2c8] sm:$0xff]
        %v2570 = vld [vmem:[#allocation2 + $0x2d0] sm:$0xff]
        %v2571 = vld [vmem:[#allocation2 + $0x2d8] sm:$0xff]
        %v2572 = vld [vmem:[#allocation2 + $0x2e0] sm:$0xff]
        %v2573 = vld [vmem:[#allocation2 + $0x2e8] sm:$0xff]
        %v2574 = vld [vmem:[#allocation2 + $0x2f0] sm:$0xff]
        %v2575 = vld [vmem:[#allocation2 + $0x2f8] sm:$0xff]
        %v2576 = vld [vmem:[#allocation2 + $0x300] sm:$0xff]
        %v2577 = vld [vmem:[#allocation2 + $0x308] sm:$0xff]
        %v2578 = vld [vmem:[#allocation2 + $0x310] sm:$0xff]
        %v2579 = vld [vmem:[#allocation2 + $0x318] sm:$0xff]
        %v2580 = vld [vmem:[#allocation2 + $0x320] sm:$0xff]
        %v2581 = vld [vmem:[#allocation2 + $0x328] sm:$0xff]
        %v2582 = vld [vmem:[#allocation2 + $0x330] sm:$0xff]
        %v2583 = vld [vmem:[#allocation2 + $0x338] sm:$0xff]
        %v2584 = vld [vmem:[#allocation2 + $0x340] sm:$0xff]
        %v2585 = vld [vmem:[#allocation2 + $0x348] sm:$0xff]
        %v2586 = vld [vmem:[#allocation2 + $0x350] sm:$0xff]
        %v2587 = vld [vmem:[#allocation2 + $0x358] sm:$0xff]
        %v2588 = vld [vmem:[#allocation2 + $0x360] sm:$0xff]
        %v2589 = vld [vmem:[#allocation2 + $0x368] sm:$0xff]
        %v2590 = vld [vmem:[#allocation2 + $0x370] sm:$0xff]
        %v2591 = vld [vmem:[#allocation2 + $0x378] sm:$0xff]
        %v2592 = vld [vmem:[#allocation2 + $0x380] sm:$0xff]
        %v2593 = vld [vmem:[#allocation2 + $0x388] sm:$0xff]
        %v2594 = vld [vmem:[#allocation2 + $0x390] sm:$0xff]
        %v2595 = vld [vmem:[#allocation2 + $0x398] sm:$0xff]
        %v2596 = vld [vmem:[#allocation2 + $0x3a0] sm:$0xff]
        %v2597 = vld [vmem:[#allocation2 + $0x3a8] sm:$0xff]
        %v2598 = vld [vmem:[#allocation2 + $0x3b0] sm:$0xff]
        %v2599 = vld [vmem:[#allocation2 + $0x3b8] sm:$0xff]
        %v2600 = vld [vmem:[#allocation2 + $0x3c0] sm:$0xff]
        %v2601 = vld [vmem:[#allocation2 + $0x3c8] sm:$0xff]
        %v2602 = vld [vmem:[#allocation2 + $0x3d0] sm:$0xff]
        %v2603 = vld [vmem:[#allocation2 + $0x3d8] sm:$0xff]
        %v2604 = vld [vmem:[#allocation2 + $0x3e0] sm:$0xff]
        %v2605 = vld [vmem:[#allocation2 + $0x3e8] sm:$0xff]
        %v2606 = vld [vmem:[#allocation2 + $0x3f0] sm:$0xff]
        %v2607 = vld [vmem:[#allocation2 + $0x3f8] sm:$0xff]
        %v2608 = vld [vmem:[#allocation2 + $0x400] sm:$0xff]
        %v2609 = vld [vmem:[#allocation2 + $0x408] sm:$0xff]
        %v2610 = vld [vmem:[#allocation2 + $0x410] sm:$0xff]
        %v2611 = vld [vmem:[#allocation2 + $0x418] sm:$0xff]
        %v2612 = vld [vmem:[#allocation2 + $0x420] sm:$0xff]
        %v2613 = vld [vmem:[#allocation2 + $0x428] sm:$0xff]
        %v2614 = vld [vmem:[#allocation2 + $0x430] sm:$0xff]
        %v2615 = vld [vmem:[#allocation2 + $0x438] sm:$0xff]
        %v2616 = vld [vmem:[#allocation2 + $0x440] sm:$0xff]
        %v2617 = vld [vmem:[#allocation2 + $0x448] sm:$0xff]
        %v2618 = vld [vmem:[#allocation2 + $0x450] sm:$0xff]
        %v2619 = vld [vmem:[#allocation2 + $0x458] sm:$0xff]
        %v2620 = vld [vmem:[#allocation2 + $0x460] sm:$0xff]
        %v2621 = vld [vmem:[#allocation2 + $0x468] sm:$0xff]
        %v2622 = vld [vmem:[#allocation2 + $0x470] sm:$0xff]
        %v2623 = vld [vmem:[#allocation2 + $0x478] sm:$0xff]
        %2624 = vset.pattern.permute.xlu0 1
        %2625 = vperm.xlu0 %2624, %v605
        %v2626 = vpop.permute.xlu0 %2625
        %2628 = vset.pattern.permute.xlu0 1
        %2629 = vperm.xlu0 %2628, %v606
        %v2630 = vpop.permute.xlu0 %2629
        %v2633 = vsel %vm1429, %v2477, 0
        %v2636 = vsel %vm1429, %v2479, 0
        %2638 = vmatpush.msra.mxu0 %v2600
        %2639 = vmatpush.msra.mxu0 %v2592
        %2640 = vmatpush.msra.mxu0 %v2584
        %2641 = vmatpush.msra.mxu0 %v2576
        %2642 = vmatpush.msra.mxu0 %v2568
        %2643 = vmatpush.msra.mxu0 %v2560
        %2644 = vmatpush.msra.mxu0 %v2552
        %2645 = vmatpush.msra.mxu0 %v2544
        %2646 = vmatpush.msra.mxu0 %v2536
        %2647 = vmatpush.msra.mxu0 %v2528
        %2648 = vmatpush.msra.mxu0 %v2520
        %2649 = vmatpush.msra.mxu0 %v2512
        %2650 = vmatpush.msra.mxu0 %v2504
        %2651 = vmatpush.msra.mxu0 %v2496
        %2652 = vmatpush.msra.mxu0 %v2488
        %2653 = vmatpush.msra.mxu0 %v2480
        %2654 = vmatmul.f32.gmra.mxu0 %v2476
        %v2655 = vpop.f32.mrf.mxu0
        %v2656 = vadd.f32 %v2626, %v2655
        %2657 = vmatmul.f32.gmra.mxu0 %v2478
        %v2658 = vpop.f32.mrf.mxu0
        %v2659 = vadd.f32 %v2630, %v2658
        %2660 = vdwg.mxu0
        %2661 = vmatpush.msra.mxu0 0.0
        %2662 = vmatpush.msra.mxu0 0.0
        %2663 = vmatpush.msra.mxu0 0.0
        %2664 = vmatpush.msra.mxu0 0.0
        %2665 = vmatpush.msra.mxu0 0.0
        %2666 = vmatpush.msra.mxu0 0.0
        %2667 = vmatpush.msra.mxu0 0.0
        %2668 = vmatpush.msra.mxu0 0.0
        %2669 = vmatpush.msra.mxu0 0.0
        %2670 = vmatpush.msra.mxu0 0.0
        %2671 = vmatpush.msra.mxu0 0.0
        %2672 = vmatpush.msra.mxu0 0.0
        %2673 = vmatpush.msra.mxu0 0.0
        %2674 = vmatpush.msra.mxu0 0.0
        %2675 = vmatpush.msra.mxu0 %v2616
        %2676 = vmatpush.msra.mxu0 %v2608
        %2677 = vmatmul.f32.gmra.mxu0 %v2633
        %v2678 = vpop.f32.mrf.mxu0
        %v2679 = vadd.f32 %v2656, %v2678
        %2680 = vmatmul.f32.gmra.mxu0 %v2636
        %v2681 = vpop.f32.mrf.mxu0
        %v2682 = vadd.f32 %v2659, %v2681
        %2683 = vdwg.mxu0
        %2684 = vmatpush.msra.mxu0 %v2601
        %2685 = vmatpush.msra.mxu0 %v2593
        %2686 = vmatpush.msra.mxu0 %v2585
        %2687 = vmatpush.msra.mxu0 %v2577
        %2688 = vmatpush.msra.mxu0 %v2569
        %2689 = vmatpush.msra.mxu0 %v2561
        %2690 = vmatpush.msra.mxu0 %v2553
        %2691 = vmatpush.msra.mxu0 %v2545
        %2692 = vmatpush.msra.mxu0 %v2537
        %2693 = vmatpush.msra.mxu0 %v2529
        %2694 = vmatpush.msra.mxu0 %v2521
        %2695 = vmatpush.msra.mxu0 %v2513
        %2696 = vmatpush.msra.mxu0 %v2505
        %2697 = vmatpush.msra.mxu0 %v2497
        %2698 = vmatpush.msra.mxu0 %v2489
        %2699 = vmatpush.msra.mxu0 %v2481
        %2700 = vmatmul.f32.gmra.mxu0 %v2476
        %v2701 = vpop.f32.mrf.mxu0
        %v2702 = vadd.f32 %v2626, %v2701
        %2703 = vmatmul.f32.gmra.mxu0 %v2478
        %v2704 = vpop.f32.mrf.mxu0
        %v2705 = vadd.f32 %v2630, %v2704
        %2706 = vdwg.mxu0
        %2707 = vmatpush.msra.mxu0 0.0
        %2708 = vmatpush.msra.mxu0 0.0
        %2709 = vmatpush.msra.mxu0 0.0
        %2710 = vmatpush.msra.mxu0 0.0
        %2711 = vmatpush.msra.mxu0 0.0
        %2712 = vmatpush.msra.mxu0 0.0
        %2713 = vmatpush.msra.mxu0 0.0
        %2714 = vmatpush.msra.mxu0 0.0
        %2715 = vmatpush.msra.mxu0 0.0
        %2716 = vmatpush.msra.mxu0 0.0
        %2717 = vmatpush.msra.mxu0 0.0
        %2718 = vmatpush.msra.mxu0 0.0
        %2719 = vmatpush.msra.mxu0 0.0
        %2720 = vmatpush.msra.mxu0 0.0
        %2721 = vmatpush.msra.mxu0 %v2617
        %2722 = vmatpush.msra.mxu0 %v2609
        %2723 = vmatmul.f32.gmra.mxu0 %v2633
        %v2724 = vpop.f32.mrf.mxu0
        %v2725 = vadd.f32 %v2702, %v2724
        %2726 = vmatmul.f32.gmra.mxu0 %v2636
        %v2727 = vpop.f32.mrf.mxu0
        %v2728 = vadd.f32 %v2705, %v2727
        %2729 = vdwg.mxu0
        %2730 = vmatpush.msra.mxu0 %v2602
        %2731 = vmatpush.msra.mxu0 %v2594
        %2732 = vmatpush.msra.mxu0 %v2586
        %2733 = vmatpush.msra.mxu0 %v2578
        %2734 = vmatpush.msra.mxu0 %v2570
        %2735 = vmatpush.msra.mxu0 %v2562
        %2736 = vmatpush.msra.mxu0 %v2554
        %2737 = vmatpush.msra.mxu0 %v2546
        %2738 = vmatpush.msra.mxu0 %v2538
        %2739 = vmatpush.msra.mxu0 %v2530
        %2740 = vmatpush.msra.mxu0 %v2522
        %2741 = vmatpush.msra.mxu0 %v2514
        %2742 = vmatpush.msra.mxu0 %v2506
        %2743 = vmatpush.msra.mxu0 %v2498
        %2744 = vmatpush.msra.mxu0 %v2490
        %2745 = vmatpush.msra.mxu0 %v2482
        %2746 = vmatmul.f32.gmra.mxu0 %v2476
        %v2747 = vpop.f32.mrf.mxu0
        %v2748 = vadd.f32 %v2626, %v2747
        %2749 = vmatmul.f32.gmra.mxu0 %v2478
        %v2750 = vpop.f32.mrf.mxu0
        %v2751 = vadd.f32 %v2630, %v2750
        %2752 = vdwg.mxu0
        %2753 = vmatpush.msra.mxu0 0.0
        %2754 = vmatpush.msra.mxu0 0.0
        %2755 = vmatpush.msra.mxu0 0.0
        %2756 = vmatpush.msra.mxu0 0.0
        %2757 = vmatpush.msra.mxu0 0.0
        %2758 = vmatpush.msra.mxu0 0.0
        %2759 = vmatpush.msra.mxu0 0.0
        %2760 = vmatpush.msra.mxu0 0.0
        %2761 = vmatpush.msra.mxu0 0.0
        %2762 = vmatpush.msra.mxu0 0.0
        %2763 = vmatpush.msra.mxu0 0.0
        %2764 = vmatpush.msra.mxu0 0.0
        %2765 = vmatpush.msra.mxu0 0.0
        %2766 = vmatpush.msra.mxu0 0.0
        %2767 = vmatpush.msra.mxu0 %v2618
        %2768 = vmatpush.msra.mxu0 %v2610
        %2769 = vmatmul.f32.gmra.mxu0 %v2633
        %v2770 = vpop.f32.mrf.mxu0
        %v2771 = vadd.f32 %v2748, %v2770
        %2772 = vmatmul.f32.gmra.mxu0 %v2636
        %v2773 = vpop.f32.mrf.mxu0
        %v2774 = vadd.f32 %v2751, %v2773
        %2775 = vdwg.mxu0
        %2776 = vmatpush.msra.mxu0 %v2603
        %2777 = vmatpush.msra.mxu0 %v2595
        %2778 = vmatpush.msra.mxu0 %v2587
        %2779 = vmatpush.msra.mxu0 %v2579
        %2780 = vmatpush.msra.mxu0 %v2571
        %2781 = vmatpush.msra.mxu0 %v2563
        %2782 = vmatpush.msra.mxu0 %v2555
        %2783 = vmatpush.msra.mxu0 %v2547
        %2784 = vmatpush.msra.mxu0 %v2539
        %2785 = vmatpush.msra.mxu0 %v2531
        %2786 = vmatpush.msra.mxu0 %v2523
        %2787 = vmatpush.msra.mxu0 %v2515
        %2788 = vmatpush.msra.mxu0 %v2507
        %2789 = vmatpush.msra.mxu0 %v2499
        %2790 = vmatpush.msra.mxu0 %v2491
        %2791 = vmatpush.msra.mxu0 %v2483
        %2792 = vmatmul.f32.gmra.mxu0 %v2476
        %v2793 = vpop.f32.mrf.mxu0
        %v2794 = vadd.f32 %v2626, %v2793
        %2795 = vmatmul.f32.gmra.mxu0 %v2478
        %v2796 = vpop.f32.mrf.mxu0
        %v2797 = vadd.f32 %v2630, %v2796
        %2798 = vdwg.mxu0
        %2799 = vmatpush.msra.mxu0 0.0
        %2800 = vmatpush.msra.mxu0 0.0
        %2801 = vmatpush.msra.mxu0 0.0
        %2802 = vmatpush.msra.mxu0 0.0
        %2803 = vmatpush.msra.mxu0 0.0
        %2804 = vmatpush.msra.mxu0 0.0
        %2805 = vmatpush.msra.mxu0 0.0
        %2806 = vmatpush.msra.mxu0 0.0
        %2807 = vmatpush.msra.mxu0 0.0
        %2808 = vmatpush.msra.mxu0 0.0
        %2809 = vmatpush.msra.mxu0 0.0
        %2810 = vmatpush.msra.mxu0 0.0
        %2811 = vmatpush.msra.mxu0 0.0
        %2812 = vmatpush.msra.mxu0 0.0
        %2813 = vmatpush.msra.mxu0 %v2619
        %2814 = vmatpush.msra.mxu0 %v2611
        %2815 = vmatmul.f32.gmra.mxu0 %v2633
        %v2816 = vpop.f32.mrf.mxu0
        %v2817 = vadd.f32 %v2794, %v2816
        %2818 = vmatmul.f32.gmra.mxu0 %v2636
        %v2819 = vpop.f32.mrf.mxu0
        %v2820 = vadd.f32 %v2797, %v2819
        %2821 = vdwg.mxu0
        %2822 = vmatpush.msra.mxu0 %v2604
        %2823 = vmatpush.msra.mxu0 %v2596
        %2824 = vmatpush.msra.mxu0 %v2588
        %2825 = vmatpush.msra.mxu0 %v2580
        %2826 = vmatpush.msra.mxu0 %v2572
        %2827 = vmatpush.msra.mxu0 %v2564
        %2828 = vmatpush.msra.mxu0 %v2556
        %2829 = vmatpush.msra.mxu0 %v2548
        %2830 = vmatpush.msra.mxu0 %v2540
        %2831 = vmatpush.msra.mxu0 %v2532
        %2832 = vmatpush.msra.mxu0 %v2524
        %2833 = vmatpush.msra.mxu0 %v2516
        %2834 = vmatpush.msra.mxu0 %v2508
        %2835 = vmatpush.msra.mxu0 %v2500
        %2836 = vmatpush.msra.mxu0 %v2492
        %2837 = vmatpush.msra.mxu0 %v2484
        %2838 = vmatmul.f32.gmra.mxu0 %v2476
        %v2839 = vpop.f32.mrf.mxu0
        %v2840 = vadd.f32 %v2626, %v2839
        %2841 = vmatmul.f32.gmra.mxu0 %v2478
        %v2842 = vpop.f32.mrf.mxu0
        %v2843 = vadd.f32 %v2630, %v2842
        %2844 = vdwg.mxu0
        %2845 = vmatpush.msra.mxu0 0.0
        %2846 = vmatpush.msra.mxu0 0.0
        %2847 = vmatpush.msra.mxu0 0.0
        %2848 = vmatpush.msra.mxu0 0.0
        %2849 = vmatpush.msra.mxu0 0.0
        %2850 = vmatpush.msra.mxu0 0.0
        %2851 = vmatpush.msra.mxu0 0.0
        %2852 = vmatpush.msra.mxu0 0.0
        %2853 = vmatpush.msra.mxu0 0.0
        %2854 = vmatpush.msra.mxu0 0.0
        %2855 = vmatpush.msra.mxu0 0.0
        %2856 = vmatpush.msra.mxu0 0.0
        %2857 = vmatpush.msra.mxu0 0.0
        %2858 = vmatpush.msra.mxu0 0.0
        %2859 = vmatpush.msra.mxu0 %v2620
        %2860 = vmatpush.msra.mxu0 %v2612
        %2861 = vmatmul.f32.gmra.mxu0 %v2633
        %v2862 = vpop.f32.mrf.mxu0
        %v2863 = vadd.f32 %v2840, %v2862
        %2864 = vmatmul.f32.gmra.mxu0 %v2636
        %v2865 = vpop.f32.mrf.mxu0
        %v2866 = vadd.f32 %v2843, %v2865
        %2867 = vdwg.mxu0
        %2868 = vmatpush.msra.mxu0 %v2605
        %2869 = vmatpush.msra.mxu0 %v2597
        %2870 = vmatpush.msra.mxu0 %v2589
        %2871 = vmatpush.msra.mxu0 %v2581
        %2872 = vmatpush.msra.mxu0 %v2573
        %2873 = vmatpush.msra.mxu0 %v2565
        %2874 = vmatpush.msra.mxu0 %v2557
        %2875 = vmatpush.msra.mxu0 %v2549
        %2876 = vmatpush.msra.mxu0 %v2541
        %2877 = vmatpush.msra.mxu0 %v2533
        %2878 = vmatpush.msra.mxu0 %v2525
        %2879 = vmatpush.msra.mxu0 %v2517
        %2880 = vmatpush.msra.mxu0 %v2509
        %2881 = vmatpush.msra.mxu0 %v2501
        %2882 = vmatpush.msra.mxu0 %v2493
        %2883 = vmatpush.msra.mxu0 %v2485
        %2884 = vmatmul.f32.gmra.mxu0 %v2476
        %v2885 = vpop.f32.mrf.mxu0
        %v2886 = vadd.f32 %v2626, %v2885
        %2887 = vmatmul.f32.gmra.mxu0 %v2478
        %v2888 = vpop.f32.mrf.mxu0
        %v2889 = vadd.f32 %v2630, %v2888
        %2890 = vdwg.mxu0
        %2891 = vmatpush.msra.mxu0 0.0
        %2892 = vmatpush.msra.mxu0 0.0
        %2893 = vmatpush.msra.mxu0 0.0
        %2894 = vmatpush.msra.mxu0 0.0
        %2895 = vmatpush.msra.mxu0 0.0
        %2896 = vmatpush.msra.mxu0 0.0
        %2897 = vmatpush.msra.mxu0 0.0
        %2898 = vmatpush.msra.mxu0 0.0
        %2899 = vmatpush.msra.mxu0 0.0
        %2900 = vmatpush.msra.mxu0 0.0
        %2901 = vmatpush.msra.mxu0 0.0
        %2902 = vmatpush.msra.mxu0 0.0
        %2903 = vmatpush.msra.mxu0 0.0
        %2904 = vmatpush.msra.mxu0 0.0
        %2905 = vmatpush.msra.mxu0 %v2621
        %2906 = vmatpush.msra.mxu0 %v2613
        %2907 = vmatmul.f32.gmra.mxu0 %v2633
        %v2908 = vpop.f32.mrf.mxu0
        %v2909 = vadd.f32 %v2886, %v2908
        %2910 = vmatmul.f32.gmra.mxu0 %v2636
        %v2911 = vpop.f32.mrf.mxu0
        %v2912 = vadd.f32 %v2889, %v2911
        %2913 = vdwg.mxu0
        %2914 = vmatpush.msra.mxu0 %v2606
        %2915 = vmatpush.msra.mxu0 %v2598
        %2916 = vmatpush.msra.mxu0 %v2590
        %2917 = vmatpush.msra.mxu0 %v2582
        %2918 = vmatpush.msra.mxu0 %v2574
        %2919 = vmatpush.msra.mxu0 %v2566
        %2920 = vmatpush.msra.mxu0 %v2558
        %2921 = vmatpush.msra.mxu0 %v2550
        %2922 = vmatpush.msra.mxu0 %v2542
        %2923 = vmatpush.msra.mxu0 %v2534
        %2924 = vmatpush.msra.mxu0 %v2526
        %2925 = vmatpush.msra.mxu0 %v2518
        %2926 = vmatpush.msra.mxu0 %v2510
        %2927 = vmatpush.msra.mxu0 %v2502
        %2928 = vmatpush.msra.mxu0 %v2494
        %2929 = vmatpush.msra.mxu0 %v2486
        %2930 = vmatmul.f32.gmra.mxu0 %v2476
        %v2931 = vpop.f32.mrf.mxu0
        %v2932 = vadd.f32 %v2626, %v2931
        %2933 = vmatmul.f32.gmra.mxu0 %v2478
        %v2934 = vpop.f32.mrf.mxu0
        %v2935 = vadd.f32 %v2630, %v2934
        %2936 = vdwg.mxu0
        %2937 = vmatpush.msra.mxu0 0.0
        %2938 = vmatpush.msra.mxu0 0.0
        %2939 = vmatpush.msra.mxu0 0.0
        %2940 = vmatpush.msra.mxu0 0.0
        %2941 = vmatpush.msra.mxu0 0.0
        %2942 = vmatpush.msra.mxu0 0.0
        %2943 = vmatpush.msra.mxu0 0.0
        %2944 = vmatpush.msra.mxu0 0.0
        %2945 = vmatpush.msra.mxu0 0.0
        %2946 = vmatpush.msra.mxu0 0.0
        %2947 = vmatpush.msra.mxu0 0.0
        %2948 = vmatpush.msra.mxu0 0.0
        %2949 = vmatpush.msra.mxu0 0.0
        %2950 = vmatpush.msra.mxu0 0.0
        %2951 = vmatpush.msra.mxu0 %v2622
        %2952 = vmatpush.msra.mxu0 %v2614
        %2953 = vmatmul.f32.gmra.mxu0 %v2633
        %v2954 = vpop.f32.mrf.mxu0
        %v2955 = vadd.f32 %v2932, %v2954
        %2956 = vmatmul.f32.gmra.mxu0 %v2636
        %v2957 = vpop.f32.mrf.mxu0
        %v2958 = vadd.f32 %v2935, %v2957
        %2959 = vdwg.mxu0
        %2960 = vmatpush.msra.mxu0 %v2607
        %2961 = vmatpush.msra.mxu0 %v2599
        %2962 = vmatpush.msra.mxu0 %v2591
        %2963 = vmatpush.msra.mxu0 %v2583
        %2964 = vmatpush.msra.mxu0 %v2575
        %2965 = vmatpush.msra.mxu0 %v2567
        %2966 = vmatpush.msra.mxu0 %v2559
        %2967 = vmatpush.msra.mxu0 %v2551
        %2968 = vmatpush.msra.mxu0 %v2543
        %2969 = vmatpush.msra.mxu0 %v2535
        %2970 = vmatpush.msra.mxu0 %v2527
        %2971 = vmatpush.msra.mxu0 %v2519
        %2972 = vmatpush.msra.mxu0 %v2511
        %2973 = vmatpush.msra.mxu0 %v2503
        %2974 = vmatpush.msra.mxu0 %v2495
        %2975 = vmatpush.msra.mxu0 %v2487
        %2976 = vmatmul.f32.gmra.mxu0 %v2476
        %v2977 = vpop.f32.mrf.mxu0
        %v2978 = vadd.f32 %v2626, %v2977
        %2979 = vmatmul.f32.gmra.mxu0 %v2478
        %v2980 = vpop.f32.mrf.mxu0
        %v2981 = vadd.f32 %v2630, %v2980
        %2982 = vdwg.mxu0
        %2983 = vmatpush.msra.mxu0 0.0
        %2984 = vmatpush.msra.mxu0 0.0
        %2985 = vmatpush.msra.mxu0 0.0
        %2986 = vmatpush.msra.mxu0 0.0
        %2987 = vmatpush.msra.mxu0 0.0
        %2988 = vmatpush.msra.mxu0 0.0
        %2989 = vmatpush.msra.mxu0 0.0
        %2990 = vmatpush.msra.mxu0 0.0
        %2991 = vmatpush.msra.mxu0 0.0
        %2992 = vmatpush.msra.mxu0 0.0
        %2993 = vmatpush.msra.mxu0 0.0
        %2994 = vmatpush.msra.mxu0 0.0
        %2995 = vmatpush.msra.mxu0 0.0
        %2996 = vmatpush.msra.mxu0 0.0
        %2997 = vmatpush.msra.mxu0 %v2623
        %2998 = vmatpush.msra.mxu0 %v2615
        %2999 = vmatmul.f32.gmra.mxu0 %v2633
        %v3000 = vpop.f32.mrf.mxu0
        %v3001 = vadd.f32 %v2978, %v3000
        %3002 = vmatmul.f32.gmra.mxu0 %v2636
        %v3003 = vpop.f32.mrf.mxu0
        %v3004 = vadd.f32 %v2981, %v3003
        %3005 = vdwg.mxu0
        %v3006 = vadd.f32 %v2679, %v2725
        %3007 = vadd.xlane.f32.xlu0 %v3006
        %v3008 = vpop.xlane.xlu0 %3007
        %v3009 = vadd.f32 %v2682, %v2728
        %3010 = vadd.xlane.f32.xlu0 %v3009
        %v3011 = vpop.xlane.xlu0 %3010
        %v3012 = vrcp.pop 256.0
        %v3013 = vmul.f32 256.0, %v3012
        %v3014 = vsub.f32 1.0, %v3013
        %v3015 = vmul.f32 %v3012, %v3014
        %v3016 = vadd.f32 %v3012, %v3015
        %vm3017 = vweird.f32 %v3012
        %v3018 = vsel %vm3017, %v3012, %v3016
        %v3019 = vmul.f32 %v3008, %v3018
        %v3020 = vmul.f32 %v3011, %v3018
        %v3021 = vadd.f32 %v2771, %v2817
        %3022 = vadd.xlane.f32.xlu0 %v3021
        %v3023 = vpop.xlane.xlu0 %3022
        %v3024 = vadd.f32 %v2774, %v2820
        %3025 = vadd.xlane.f32.xlu0 %v3024
        %v3026 = vpop.xlane.xlu0 %3025
        %v3027 = vmul.f32 %v3023, %v3018
        %v3028 = vmul.f32 %v3026, %v3018
        %v3029 = vadd.f32 %v2863, %v2909
        %3030 = vadd.xlane.f32.xlu0 %v3029
        %v3031 = vpop.xlane.xlu0 %3030
        %v3032 = vadd.f32 %v2866, %v2912
        %3033 = vadd.xlane.f32.xlu0 %v3032
        %v3034 = vpop.xlane.xlu0 %3033
        %v3035 = vmul.f32 %v3031, %v3018
        %v3036 = vmul.f32 %v3034, %v3018
        %v3037 = vadd.f32 %v2955, %v3001
        %3038 = vadd.xlane.f32.xlu0 %v3037
        %v3039 = vpop.xlane.xlu0 %3038
        %v3040 = vadd.f32 %v2958, %v3004
        %3041 = vadd.xlane.f32.xlu0 %v3040
        %v3042 = vpop.xlane.xlu0 %3041
        %v3043 = vmul.f32 %v3039, %v3018
        %v3044 = vmul.f32 %v3042, %v3018
        %v3045 = vmax.f32 %v2679, %v2725
        %3046 = vmax.xlane.f32.xlu0 %v3045
        %v3047 = vpop.xlane.xlu0 %3046
        %v3048 = vmax.f32 %v2682, %v2728
        %3049 = vmax.xlane.f32.xlu0 %v3048
        %v3050 = vpop.xlane.xlu0 %3049
        %v3051 = vmax.f32 %v2771, %v2817
        %3052 = vmax.xlane.f32.xlu0 %v3051
        %v3053 = vpop.xlane.xlu0 %3052
        %v3054 = vmax.f32 %v2774, %v2820
        %3055 = vmax.xlane.f32.xlu0 %v3054
        %v3056 = vpop.xlane.xlu0 %3055
        %v3057 = vmax.f32 %v2863, %v2909
        %3058 = vmax.xlane.f32.xlu0 %v3057
        %v3059 = vpop.xlane.xlu0 %3058
        %v3060 = vmax.f32 %v2866, %v2912
        %3061 = vmax.xlane.f32.xlu0 %v3060
        %v3062 = vpop.xlane.xlu0 %3061
        %v3063 = vmax.f32 %v2955, %v3001
        %3064 = vmax.xlane.f32.xlu0 %v3063
        %v3065 = vpop.xlane.xlu0 %3064
        %v3066 = vmax.f32 %v2958, %v3004
        %3067 = vmax.xlane.f32.xlu0 %v3066
        %v3068 = vpop.xlane.xlu0 %3067
        %vm3069 = vcmask 7168
        %v3070 = vsel %vm3069, %v3019, %v3027
        %v3071 = vsel %vm3069, %v3020, %v3028
        %vm3072 = vcmask 15360
        %v3073 = vsel %vm3072, %v3070, %v3035
        %v3074 = vsel %vm3072, %v3071, %v3036
        %vm3075 = vcmask 23552
        %v3076 = vsel %vm3075, %v3073, %v3043
        %v3077 = vsel %vm3075, %v3074, %v3044
        %vm3078 = vcmask 31744
        %v3079 = vsel %vm3078, %v3076, %v3047
        %v3080 = vsel %vm3078, %v3077, %v3050
        %vm3081 = vcmask 39936
        %v3082 = vsel %vm3081, %v3079, %v3053
        %v3083 = vsel %vm3081, %v3080, %v3056
        %vm3084 = vcmask 48128
        %v3085 = vsel %vm3084, %v3082, %v3059
        %v3086 = vsel %vm3084, %v3083, %v3062
        %vm3087 = vcmask 56320
        %v3088 = vsel %vm3087, %v3085, %v3065
        %v3089 = vsel %vm3087, %v3086, %v3068
        %v3090 = vld [vmem:[%s4] sm:$0x3]
        %v3091 = vld [vmem:[%s5] sm:$0x3]
        %3093 = vset.pattern.permute.xlu0 0
        %3094 = vperm.xlu0 %3093, %v3091
        %v3095 = vpop.permute.xlu0 %3094
        %v3098 = vsel %vm1429, %v3090, 0
        %3100 = vmatpush.msra.mxu0 0.0
        %3101 = vmatpush.msra.mxu0 0.0
        %3102 = vmatpush.msra.mxu0 0.0
        %3103 = vmatpush.msra.mxu0 0.0
        %3104 = vmatpush.msra.mxu0 0.0
        %3105 = vmatpush.msra.mxu0 0.0
        %3106 = vmatpush.msra.mxu0 0.0
        %3107 = vmatpush.msra.mxu0 0.0
        %3108 = vmatpush.msra.mxu0 0.0
        %3109 = vmatpush.msra.mxu0 0.0
        %3110 = vmatpush.msra.mxu0 0.0
        %3111 = vmatpush.msra.mxu0 0.0
        %3112 = vmatpush.msra.mxu0 0.0
        %3113 = vmatpush.msra.mxu0 0.0
        %3114 = vmatpush.msra.mxu0 %v3089
        %3115 = vmatpush.msra.mxu0 %v3088
        %3116 = vmatmul.f32.gmra.mxu0 %v3098
        %v3117 = vpop.f32.mrf.mxu0
        %v3118 = vadd.f32 %v3095, %v3117
        %3119 = vdwg.mxu0
        %v3120 = vmax.f32 %v3118, 0.0
        %v3121 = vld [vmem:[%s6] sm:$0xff]
        %v3122 = vld [vmem:[%s6 + $0x8] sm:$0xff]
        %v3123 = vld [vmem:[%s7] sm:$0xff]
        %v3124 = vld [vmem:[%s7 + $0x8] sm:$0xff]
        %3126 = vset.pattern.permute.xlu0 0
        %3127 = vperm.xlu0 %3126, %v3123
        %v3128 = vpop.permute.xlu0 %3127
        %3131 = vset.pattern.permute.xlu0 0
        %3132 = vperm.xlu0 %3131, %v3124
        %v3133 = vpop.permute.xlu0 %3132
        %v3136 = vsel %vm3072, %v3121, 0
        %v3139 = vsel %vm3072, %v3122, 0
        %vm3141 = vcmask 1041408
        %v3143 = vsel %vm3141, %v3120, 0
        %3145 = vmatpush.msra.mxu0 0.0
        %3146 = vmatpush.msra.mxu0 0.0
        %3147 = vmatpush.msra.mxu0 0.0
        %3148 = vmatpush.msra.mxu0 0.0
        %3149 = vmatpush.msra.mxu0 0.0
        %3150 = vmatpush.msra.mxu0 0.0
        %3151 = vmatpush.msra.mxu0 0.0
        %3152 = vmatpush.msra.mxu0 0.0
        %3153 = vmatpush.msra.mxu0 0.0
        %3154 = vmatpush.msra.mxu0 0.0
        %3155 = vmatpush.msra.mxu0 0.0
        %3156 = vmatpush.msra.mxu0 0.0
        %3157 = vmatpush.msra.mxu0 0.0
        %3158 = vmatpush.msra.mxu0 0.0
        %3159 = vmatpush.msra.mxu0 0.0
        %3160 = vmatpush.msra.mxu0 %v3143
        %3161 = vmatmul.f32.gmra.mxu0 %v3136
        %v3162 = vpop.f32.mrf.mxu0
        %v3163 = vadd.f32 %v3128, %v3162
        %3164 = vmatmul.f32.gmra.mxu0 %v3139
        %v3165 = vpop.f32.mrf.mxu0
        %v3166 = vadd.f32 %v3133, %v3165
        %3167 = vdwg.mxu0
        %v3168 = vxor.u32 %v3163, 2147483648
        %v3169 = vxor.u32 %v3166, 2147483648
        %v3170 = vmul.f32 %v3168, 1.442695
        %v3171 = vpow.pop %v3170
        %v3172 = vmul.f32 %v3169, 1.442695
        %v3173 = vpow.pop %v3172
        %v3174 = vadd.f32 %v3171, 1.0
        %v3175 = vadd.f32 %v3173, 1.0
        %v3176 = vrcp.pop %v3174
        %v3177 = vmul.f32 %v3174, %v3176
        %v3178 = vsub.f32 1.0, %v3177
        %v3179 = vmul.f32 %v3176, %v3178
        %v3180 = vadd.f32 %v3176, %v3179
        %vm3181 = vweird.f32 %v3174
        %vm3182 = vweird.f32 %v3176
        %vm3183 = vmor %vm3181, %vm3182
        %v3184 = vsel %vm3183, %v3176, %v3180
        %v3185 = vand.u32 2147483647, %v3174
        %vm3186 = vcmp.eq.f32.partialorder %v3185, 8.507059e+37
        %v3187 = vand.u32 %v3174, 2147483648
        %v3188 = vor.u32 1.1754944e-38, %v3187
        %v3189 = vsel %vm3186, %v3188, %v3184
        %v3190 = vmul.f32 1.0, %v3189
        %v3191 = vrcp.pop %v3175
        %v3192 = vmul.f32 %v3175, %v3191
        %v3193 = vsub.f32 1.0, %v3192
        %v3194 = vmul.f32 %v3191, %v3193
        %v3195 = vadd.f32 %v3191, %v3194
        %vm3196 = vweird.f32 %v3175
        %vm3197 = vweird.f32 %v3191
        %vm3198 = vmor %vm3196, %vm3197
        %v3199 = vsel %vm3198, %v3191, %v3195
        %v3200 = vand.u32 2147483647, %v3175
        %vm3201 = vcmp.eq.f32.partialorder %v3200, 8.507059e+37
        %v3202 = vand.u32 %v3175, 2147483648
        %v3203 = vor.u32 1.1754944e-38, %v3202
        %v3204 = vsel %vm3201, %v3203, %v3199
        %v3205 = vmul.f32 1.0, %v3204
        %3208 = vrot.lane.b32.xlu0 %v3190, 124
        %v3209 = vpop.permute.xlu0 %3208
        %3210 = vrot.lane.b32.xlu0 %v3205, 124
        %v3211 = vpop.permute.xlu0 %3210
        %v3214 = vadd.f32 %v3190, %v3209
        %v3215 = vadd.f32 %v3205, %v3211
        %v3216 = vxor.u32 %v3214, 2147483648
        %v3217 = vxor.u32 %v3215, 2147483648
        %v3218 = vmul.f32 %v3216, 1.442695
        %v3219 = vpow.pop %v3218
        %v3220 = vmul.f32 %v3217, 1.442695
        %v3221 = vpow.pop %v3220
        %v3222 = vadd.f32 %v3219, 1.0
        %v3223 = vadd.f32 %v3221, 1.0
        %v3224 = vrcp.pop %v3222
        %v3225 = vmul.f32 %v3222, %v3224
        %v3226 = vsub.f32 1.0, %v3225
        %v3227 = vmul.f32 %v3224, %v3226
        %v3228 = vadd.f32 %v3224, %v3227
        %vm3229 = vweird.f32 %v3222
        %vm3230 = vweird.f32 %v3224
        %vm3231 = vmor %vm3229, %vm3230
        %v3232 = vsel %vm3231, %v3224, %v3228
        %v3233 = vand.u32 2147483647, %v3222
        %vm3234 = vcmp.eq.f32.partialorder %v3233, 8.507059e+37
        %v3235 = vand.u32 %v3222, 2147483648
        %v3236 = vor.u32 1.1754944e-38, %v3235
        %v3237 = vsel %vm3234, %v3236, %v3232
        %v3238 = vmul.f32 1.0, %v3237
        %v3239 = vrcp.pop %v3223
        %v3240 = vmul.f32 %v3223, %v3239
        %v3241 = vsub.f32 1.0, %v3240
        %v3242 = vmul.f32 %v3239, %v3241
        %v3243 = vadd.f32 %v3239, %v3242
        %vm3244 = vweird.f32 %v3223
        %vm3245 = vweird.f32 %v3239
        %vm3246 = vmor %vm3244, %vm3245
        %v3247 = vsel %vm3246, %v3239, %v3243
        %v3248 = vand.u32 2147483647, %v3223
        %vm3249 = vcmp.eq.f32.partialorder %v3248, 8.507059e+37
        %v3250 = vand.u32 %v3223, 2147483648
        %v3251 = vor.u32 1.1754944e-38, %v3250
        %v3252 = vsel %vm3249, %v3251, %v3247
        %v3253 = vmul.f32 1.0, %v3252
        %vm3254 = vcmp.ge.s32.totalorder %v389, 0
        %vm3255 = vcmp.ge.s32.totalorder %v390, 0
        %vm3256 = vcmp.ge.s32.totalorder %v391, 0
        %vm3257 = vcmp.ge.s32.totalorder %v392, 0
        %vm3258 = vcmp.ge.s32.totalorder %v393, 0
        %vm3259 = vcmp.ge.s32.totalorder %v394, 0
        %vm3260 = vcmp.ge.s32.totalorder %v395, 0
        %vm3261 = vcmp.ge.s32.totalorder %v396, 0
        %vm3262 = vcmp.lt.s32.totalorder %v389, 256
        %vm3263 = vcmp.lt.s32.totalorder %v390, 256
        %vm3264 = vcmp.lt.s32.totalorder %v391, 256
        %vm3265 = vcmp.lt.s32.totalorder %v392, 256
        %vm3266 = vcmp.lt.s32.totalorder %v393, 256
        %vm3267 = vcmp.lt.s32.totalorder %v394, 256
        %vm3268 = vcmp.lt.s32.totalorder %v395, 256
        %vm3269 = vcmp.lt.s32.totalorder %v396, 256
        %vm3270 = vmand %vm3254, %vm3262
        %vm3271 = vmand %vm3255, %vm3263
        %vm3272 = vmand %vm3256, %vm3264
        %vm3273 = vmand %vm3257, %vm3265
        %vm3274 = vmand %vm3258, %vm3266
        %vm3275 = vmand %vm3259, %vm3267
        %vm3276 = vmand %vm3260, %vm3268
        %vm3277 = vmand %vm3261, %vm3269
        %v3278 = vsel %vm3270, 1, 0
        %v3279 = vsel %vm3271, 1, 0
        %v3280 = vsel %vm3272, 1, 0
        %v3281 = vsel %vm3273, 1, 0
        %v3282 = vsel %vm3274, 1, 0
        %v3283 = vsel %vm3275, 1, 0
        %v3284 = vsel %vm3276, 1, 0
        %v3285 = vsel %vm3277, 1, 0
        %v3286 = vcvt.s32.f32 %v3278
        %v3287 = vcvt.s32.f32 %v3279
        %v3288 = vcvt.s32.f32 %v3280
        %v3289 = vcvt.s32.f32 %v3281
        %v3290 = vcvt.s32.f32 %v3282
        %v3291 = vcvt.s32.f32 %v3283
        %v3292 = vcvt.s32.f32 %v3284
        %v3293 = vcvt.s32.f32 %v3285
        %3295 = vset.pattern.permute.xlu0 0
        %3296 = vperm.xlu0 %3295, %v3238
        %v3297 = vpop.permute.xlu0 %3296
        %3300 = vset.pattern.permute.xlu0 0
        %3301 = vperm.xlu0 %3300, %v3253
        %v3302 = vpop.permute.xlu0 %3301
        %v3304 = vmul.f32 %v3286, %v3297
        %v3305 = vmul.f32 %v3287, %v3297
        %v3306 = vmul.f32 %v3288, %v3297
        %v3307 = vmul.f32 %v3289, %v3297
        %v3308 = vmul.f32 %v3290, %v3297
        %v3309 = vmul.f32 %v3291, %v3297
        %v3310 = vmul.f32 %v3292, %v3297
        %v3311 = vmul.f32 %v3293, %v3297
        %v3312 = vmul.f32 %v3286, %v3302
        %v3313 = vmul.f32 %v3287, %v3302
        %v3314 = vmul.f32 %v3288, %v3302
        %v3315 = vmul.f32 %v3289, %v3302
        %v3316 = vmul.f32 %v3290, %v3302
        %v3317 = vmul.f32 %v3291, %v3302
        %v3318 = vmul.f32 %v3292, %v3302
        %v3319 = vmul.f32 %v3293, %v3302
        %v3320 = vadd.f32 %v3304, 0.0
        %v3321 = vadd.f32 %v3305, 0.0
        %v3322 = vadd.f32 %v3306, 0.0
        %v3323 = vadd.f32 %v3307, 0.0
        %v3324 = vadd.f32 %v3308, 0.0
        %v3325 = vadd.f32 %v3309, 0.0
        %v3326 = vadd.f32 %v3310, 0.0
        %v3327 = vadd.f32 %v3311, 0.0
        %v3328 = vadd.f32 %v3312, 0.0
        %v3329 = vadd.f32 %v3313, 0.0
        %v3330 = vadd.f32 %v3314, 0.0
        %v3331 = vadd.f32 %v3315, 0.0
        %v3332 = vadd.f32 %v3316, 0.0
        %v3333 = vadd.f32 %v3317, 0.0
        %v3334 = vadd.f32 %v3318, 0.0
        %v3335 = vadd.f32 %v3319, 0.0
        %vm3336 = vcmp.ge.s32.totalorder %v389, 256
        %vm3337 = vcmp.ge.s32.totalorder %v390, 256
        %vm3338 = vcmp.ge.s32.totalorder %v391, 256
        %vm3339 = vcmp.ge.s32.totalorder %v392, 256
        %vm3340 = vcmp.ge.s32.totalorder %v393, 256
        %vm3341 = vcmp.ge.s32.totalorder %v394, 256
        %vm3342 = vcmp.ge.s32.totalorder %v395, 256
        %vm3343 = vcmp.ge.s32.totalorder %v396, 256
        %vm3344 = vcmp.lt.s32.totalorder %v389, 512
        %vm3345 = vcmp.lt.s32.totalorder %v390, 512
        %vm3346 = vcmp.lt.s32.totalorder %v391, 512
        %vm3347 = vcmp.lt.s32.totalorder %v392, 512
        %vm3348 = vcmp.lt.s32.totalorder %v393, 512
        %vm3349 = vcmp.lt.s32.totalorder %v394, 512
        %vm3350 = vcmp.lt.s32.totalorder %v395, 512
        %vm3351 = vcmp.lt.s32.totalorder %v396, 512
        %vm3352 = vmand %vm3336, %vm3344
        %vm3353 = vmand %vm3337, %vm3345
        %vm3354 = vmand %vm3338, %vm3346
        %vm3355 = vmand %vm3339, %vm3347
        %vm3356 = vmand %vm3340, %vm3348
        %vm3357 = vmand %vm3341, %vm3349
        %vm3358 = vmand %vm3342, %vm3350
        %vm3359 = vmand %vm3343, %vm3351
        %v3360 = vsel %vm3352, 1, 0
        %v3361 = vsel %vm3353, 1, 0
        %v3362 = vsel %vm3354, 1, 0
        %v3363 = vsel %vm3355, 1, 0
        %v3364 = vsel %vm3356, 1, 0
        %v3365 = vsel %vm3357, 1, 0
        %v3366 = vsel %vm3358, 1, 0
        %v3367 = vsel %vm3359, 1, 0
        %v3368 = vcvt.s32.f32 %v3360
        %v3369 = vcvt.s32.f32 %v3361
        %v3370 = vcvt.s32.f32 %v3362
        %v3371 = vcvt.s32.f32 %v3363
        %v3372 = vcvt.s32.f32 %v3364
        %v3373 = vcvt.s32.f32 %v3365
        %v3374 = vcvt.s32.f32 %v3366
        %v3375 = vcvt.s32.f32 %v3367
        %3376 = vset.pattern.permute.xlu0 1
        %3377 = vperm.xlu0 %3376, %v3238
        %v3378 = vpop.permute.xlu0 %3377
        %3380 = vset.pattern.permute.xlu0 1
        %3381 = vperm.xlu0 %3380, %v3253
        %v3382 = vpop.permute.xlu0 %3381
        %v3384 = vmul.f32 %v3368, %v3378
        %v3385 = vmul.f32 %v3369, %v3378
        %v3386 = vmul.f32 %v3370, %v3378
        %v3387 = vmul.f32 %v3371, %v3378
        %v3388 = vmul.f32 %v3372, %v3378
        %v3389 = vmul.f32 %v3373, %v3378
        %v3390 = vmul.f32 %v3374, %v3378
        %v3391 = vmul.f32 %v3375, %v3378
        %v3392 = vmul.f32 %v3368, %v3382
        %v3393 = vmul.f32 %v3369, %v3382
        %v3394 = vmul.f32 %v3370, %v3382
        %v3395 = vmul.f32 %v3371, %v3382
        %v3396 = vmul.f32 %v3372, %v3382
        %v3397 = vmul.f32 %v3373, %v3382
        %v3398 = vmul.f32 %v3374, %v3382
        %v3399 = vmul.f32 %v3375, %v3382
        %v3400 = vadd.f32 %v3320, %v3384
        %v3401 = vadd.f32 %v3321, %v3385
        %v3402 = vadd.f32 %v3322, %v3386
        %v3403 = vadd.f32 %v3323, %v3387
        %v3404 = vadd.f32 %v3324, %v3388
        %v3405 = vadd.f32 %v3325, %v3389
        %v3406 = vadd.f32 %v3326, %v3390
        %v3407 = vadd.f32 %v3327, %v3391
        %v3408 = vadd.f32 %v3328, %v3392
        %v3409 = vadd.f32 %v3329, %v3393
        %v3410 = vadd.f32 %v3330, %v3394
        %v3411 = vadd.f32 %v3331, %v3395
        %v3412 = vadd.f32 %v3332, %v3396
        %v3413 = vadd.f32 %v3333, %v3397
        %v3414 = vadd.f32 %v3334, %v3398
        %v3415 = vadd.f32 %v3335, %v3399
        %vm3416 = vcmp.ge.s32.totalorder %v389, 512
        %vm3417 = vcmp.ge.s32.totalorder %v390, 512
        %vm3418 = vcmp.ge.s32.totalorder %v391, 512
        %vm3419 = vcmp.ge.s32.totalorder %v392, 512
        %vm3420 = vcmp.ge.s32.totalorder %v393, 512
        %vm3421 = vcmp.ge.s32.totalorder %v394, 512
        %vm3422 = vcmp.ge.s32.totalorder %v395, 512
        %vm3423 = vcmp.ge.s32.totalorder %v396, 512
        %vm3424 = vcmp.lt.s32.totalorder %v389, 768
        %vm3425 = vcmp.lt.s32.totalorder %v390, 768
        %vm3426 = vcmp.lt.s32.totalorder %v391, 768
        %vm3427 = vcmp.lt.s32.totalorder %v392, 768
        %vm3428 = vcmp.lt.s32.totalorder %v393, 768
        %vm3429 = vcmp.lt.s32.totalorder %v394, 768
        %vm3430 = vcmp.lt.s32.totalorder %v395, 768
        %vm3431 = vcmp.lt.s32.totalorder %v396, 768
        %vm3432 = vmand %vm3416, %vm3424
        %vm3433 = vmand %vm3417, %vm3425
        %vm3434 = vmand %vm3418, %vm3426
        %vm3435 = vmand %vm3419, %vm3427
        %vm3436 = vmand %vm3420, %vm3428
        %vm3437 = vmand %vm3421, %vm3429
        %vm3438 = vmand %vm3422, %vm3430
        %vm3439 = vmand %vm3423, %vm3431
        %v3440 = vsel %vm3432, 1, 0
        %v3441 = vsel %vm3433, 1, 0
        %v3442 = vsel %vm3434, 1, 0
        %v3443 = vsel %vm3435, 1, 0
        %v3444 = vsel %vm3436, 1, 0
        %v3445 = vsel %vm3437, 1, 0
        %v3446 = vsel %vm3438, 1, 0
        %v3447 = vsel %vm3439, 1, 0
        %v3448 = vcvt.s32.f32 %v3440
        %v3449 = vcvt.s32.f32 %v3441
        %v3450 = vcvt.s32.f32 %v3442
        %v3451 = vcvt.s32.f32 %v3443
        %v3452 = vcvt.s32.f32 %v3444
        %v3453 = vcvt.s32.f32 %v3445
        %v3454 = vcvt.s32.f32 %v3446
        %v3455 = vcvt.s32.f32 %v3447
        %3456 = vset.pattern.permute.xlu0 2
        %3457 = vperm.xlu0 %3456, %v3238
        %v3458 = vpop.permute.xlu0 %3457
        %3460 = vset.pattern.permute.xlu0 2
        %3461 = vperm.xlu0 %3460, %v3253
        %v3462 = vpop.permute.xlu0 %3461
        %v3464 = vmul.f32 %v3448, %v3458
        %v3465 = vmul.f32 %v3449, %v3458
        %v3466 = vmul.f32 %v3450, %v3458
        %v3467 = vmul.f32 %v3451, %v3458
        %v3468 = vmul.f32 %v3452, %v3458
        %v3469 = vmul.f32 %v3453, %v3458
        %v3470 = vmul.f32 %v3454, %v3458
        %v3471 = vmul.f32 %v3455, %v3458
        %v3472 = vmul.f32 %v3448, %v3462
        %v3473 = vmul.f32 %v3449, %v3462
        %v3474 = vmul.f32 %v3450, %v3462
        %v3475 = vmul.f32 %v3451, %v3462
        %v3476 = vmul.f32 %v3452, %v3462
        %v3477 = vmul.f32 %v3453, %v3462
        %v3478 = vmul.f32 %v3454, %v3462
        %v3479 = vmul.f32 %v3455, %v3462
        %v3480 = vadd.f32 %v3400, %v3464
        %v3481 = vadd.f32 %v3401, %v3465
        %v3482 = vadd.f32 %v3402, %v3466
        %v3483 = vadd.f32 %v3403, %v3467
        %v3484 = vadd.f32 %v3404, %v3468
        %v3485 = vadd.f32 %v3405, %v3469
        %v3486 = vadd.f32 %v3406, %v3470
        %v3487 = vadd.f32 %v3407, %v3471
        %v3488 = vadd.f32 %v3408, %v3472
        %v3489 = vadd.f32 %v3409, %v3473
        %v3490 = vadd.f32 %v3410, %v3474
        %v3491 = vadd.f32 %v3411, %v3475
        %v3492 = vadd.f32 %v3412, %v3476
        %v3493 = vadd.f32 %v3413, %v3477
        %v3494 = vadd.f32 %v3414, %v3478
        %v3495 = vadd.f32 %v3415, %v3479
        %vm3496 = vcmp.ge.s32.totalorder %v389, 768
        %vm3497 = vcmp.ge.s32.totalorder %v390, 768
        %vm3498 = vcmp.ge.s32.totalorder %v391, 768
        %vm3499 = vcmp.ge.s32.totalorder %v392, 768
        %vm3500 = vcmp.ge.s32.totalorder %v393, 768
        %vm3501 = vcmp.ge.s32.totalorder %v394, 768
        %vm3502 = vcmp.ge.s32.totalorder %v395, 768
        %vm3503 = vcmp.ge.s32.totalorder %v396, 768
        %vm3504 = vcmp.lt.s32.totalorder %v389, 1024
        %vm3505 = vcmp.lt.s32.totalorder %v390, 1024
        %vm3506 = vcmp.lt.s32.totalorder %v391, 1024
        %vm3507 = vcmp.lt.s32.totalorder %v392, 1024
        %vm3508 = vcmp.lt.s32.totalorder %v393, 1024
        %vm3509 = vcmp.lt.s32.totalorder %v394, 1024
        %vm3510 = vcmp.lt.s32.totalorder %v395, 1024
        %vm3511 = vcmp.lt.s32.totalorder %v396, 1024
        %vm3512 = vmand %vm3496, %vm3504
        %vm3513 = vmand %vm3497, %vm3505
        %vm3514 = vmand %vm3498, %vm3506
        %vm3515 = vmand %vm3499, %vm3507
        %vm3516 = vmand %vm3500, %vm3508
        %vm3517 = vmand %vm3501, %vm3509
        %vm3518 = vmand %vm3502, %vm3510
        %vm3519 = vmand %vm3503, %vm3511
        %v3520 = vsel %vm3512, 1, 0
        %v3521 = vsel %vm3513, 1, 0
        %v3522 = vsel %vm3514, 1, 0
        %v3523 = vsel %vm3515, 1, 0
        %v3524 = vsel %vm3516, 1, 0
        %v3525 = vsel %vm3517, 1, 0
        %v3526 = vsel %vm3518, 1, 0
        %v3527 = vsel %vm3519, 1, 0
        %v3528 = vcvt.s32.f32 %v3520
        %v3529 = vcvt.s32.f32 %v3521
        %v3530 = vcvt.s32.f32 %v3522
        %v3531 = vcvt.s32.f32 %v3523
        %v3532 = vcvt.s32.f32 %v3524
        %v3533 = vcvt.s32.f32 %v3525
        %v3534 = vcvt.s32.f32 %v3526
        %v3535 = vcvt.s32.f32 %v3527
        %3536 = vset.pattern.permute.xlu0 3
        %3537 = vperm.xlu0 %3536, %v3238
        %v3538 = vpop.permute.xlu0 %3537
        %3540 = vset.pattern.permute.xlu0 3
        %3541 = vperm.xlu0 %3540, %v3253
        %v3542 = vpop.permute.xlu0 %3541
        %v3544 = vmul.f32 %v3528, %v3538
        %v3545 = vmul.f32 %v3529, %v3538
        %v3546 = vmul.f32 %v3530, %v3538
        %v3547 = vmul.f32 %v3531, %v3538
        %v3548 = vmul.f32 %v3532, %v3538
        %v3549 = vmul.f32 %v3533, %v3538
        %v3550 = vmul.f32 %v3534, %v3538
        %v3551 = vmul.f32 %v3535, %v3538
        %v3552 = vmul.f32 %v3528, %v3542
        %v3553 = vmul.f32 %v3529, %v3542
        %v3554 = vmul.f32 %v3530, %v3542
        %v3555 = vmul.f32 %v3531, %v3542
        %v3556 = vmul.f32 %v3532, %v3542
        %v3557 = vmul.f32 %v3533, %v3542
        %v3558 = vmul.f32 %v3534, %v3542
        %v3559 = vmul.f32 %v3535, %v3542
        %v3560 = vadd.f32 %v3480, %v3544
        %v3561 = vadd.f32 %v3481, %v3545
        %v3562 = vadd.f32 %v3482, %v3546
        %v3563 = vadd.f32 %v3483, %v3547
        %v3564 = vadd.f32 %v3484, %v3548
        %v3565 = vadd.f32 %v3485, %v3549
        %v3566 = vadd.f32 %v3486, %v3550
        %v3567 = vadd.f32 %v3487, %v3551
        %v3568 = vadd.f32 %v3488, %v3552
        %v3569 = vadd.f32 %v3489, %v3553
        %v3570 = vadd.f32 %v3490, %v3554
        %v3571 = vadd.f32 %v3491, %v3555
        %v3572 = vadd.f32 %v3492, %v3556
        %v3573 = vadd.f32 %v3493, %v3557
        %v3574 = vadd.f32 %v3494, %v3558
        %v3575 = vadd.f32 %v3495, %v3559
        %v3576 = vmul.f32 %v2679, %v3560
        %v3577 = vmul.f32 %v2725, %v3561
        %v3578 = vmul.f32 %v2771, %v3562
        %v3579 = vmul.f32 %v2817, %v3563
        %v3580 = vmul.f32 %v2863, %v3564
        %v3581 = vmul.f32 %v2909, %v3565
        %v3582 = vmul.f32 %v2955, %v3566
        %v3583 = vmul.f32 %v3001, %v3567
        %v3584 = vmul.f32 %v2682, %v3568
        %v3585 = vmul.f32 %v2728, %v3569
        %v3586 = vmul.f32 %v2774, %v3570
        %v3587 = vmul.f32 %v2820, %v3571
        %v3588 = vmul.f32 %v2866, %v3572
        %v3589 = vmul.f32 %v2912, %v3573
        %v3590 = vmul.f32 %v2958, %v3574
        %v3591 = vmul.f32 %v3004, %v3575
        %v3592 = vadd.f32 %v3576, %v3584
        %v3593 = vrot.slane %v3592, 4
        %v3594 = vadd.f32 %v3592, %v3593
        %v3595 = vrot.slane %v3594, 2
        %v3596 = vadd.f32 %v3594, %v3595
        %v3597 = vrot.slane %v3596, 1
        %v3598 = vadd.f32 %v3596, %v3597
        %v3599 = vadd.f32 %v3577, %v3585
        %v3600 = vrot.slane %v3599, 4
        %v3601 = vadd.f32 %v3599, %v3600
        %v3602 = vrot.slane %v3601, 2
        %v3603 = vadd.f32 %v3601, %v3602
        %v3604 = vrot.slane %v3603, 1
        %v3605 = vadd.f32 %v3603, %v3604
        %v3606 = vadd.f32 %v3578, %v3586
        %v3607 = vrot.slane %v3606, 4
        %v3608 = vadd.f32 %v3606, %v3607
        %v3609 = vrot.slane %v3608, 2
        %v3610 = vadd.f32 %v3608, %v3609
        %v3611 = vrot.slane %v3610, 1
        %v3612 = vadd.f32 %v3610, %v3611
        %v3613 = vadd.f32 %v3579, %v3587
        %v3614 = vrot.slane %v3613, 4
        %v3615 = vadd.f32 %v3613, %v3614
        %v3616 = vrot.slane %v3615, 2
        %v3617 = vadd.f32 %v3615, %v3616
        %v3618 = vrot.slane %v3617, 1
        %v3619 = vadd.f32 %v3617, %v3618
        %v3620 = vadd.f32 %v3580, %v3588
        %v3621 = vrot.slane %v3620, 4
        %v3622 = vadd.f32 %v3620, %v3621
        %v3623 = vrot.slane %v3622, 2
        %v3624 = vadd.f32 %v3622, %v3623
        %v3625 = vrot.slane %v3624, 1
        %v3626 = vadd.f32 %v3624, %v3625
        %v3627 = vadd.f32 %v3581, %v3589
        %v3628 = vrot.slane %v3627, 4
        %v3629 = vadd.f32 %v3627, %v3628
        %v3630 = vrot.slane %v3629, 2
        %v3631 = vadd.f32 %v3629, %v3630
        %v3632 = vrot.slane %v3631, 1
        %v3633 = vadd.f32 %v3631, %v3632
        %v3634 = vadd.f32 %v3582, %v3590
        %v3635 = vrot.slane %v3634, 4
        %v3636 = vadd.f32 %v3634, %v3635
        %v3637 = vrot.slane %v3636, 2
        %v3638 = vadd.f32 %v3636, %v3637
        %v3639 = vrot.slane %v3638, 1
        %v3640 = vadd.f32 %v3638, %v3639
        %v3641 = vadd.f32 %v3583, %v3591
        %v3642 = vrot.slane %v3641, 4
        %v3643 = vadd.f32 %v3641, %v3642
        %v3644 = vrot.slane %v3643, 2
        %v3645 = vadd.f32 %v3643, %v3644
        %v3646 = vrot.slane %v3645, 1
        %v3647 = vadd.f32 %v3645, %v3646
        %v3648 = vrcp.pop 16.0
        %v3649 = vmul.f32 16.0, %v3648
        %v3650 = vsub.f32 1.0, %v3649
        %v3651 = vmul.f32 %v3648, %v3650
        %v3652 = vadd.f32 %v3648, %v3651
        %vm3653 = vweird.f32 %v3648
        %v3654 = vsel %vm3653, %v3648, %v3652
        %v3655 = vmul.f32 %v3598, %v3654
        %v3656 = vmul.f32 %v3605, %v3654
        %v3657 = vmul.f32 %v3612, %v3654
        %v3658 = vmul.f32 %v3619, %v3654
        %v3659 = vmul.f32 %v3626, %v3654
        %v3660 = vmul.f32 %v3633, %v3654
        %v3661 = vmul.f32 %v3640, %v3654
        %v3662 = vmul.f32 %v3647, %v3654
        %v3663 = vmax.f32 %v3576, %v3584
        %v3664 = vrot.slane %v3663, 4
        %v3665 = vmax.f32 %v3663, %v3664
        %v3666 = vrot.slane %v3665, 2
        %v3667 = vmax.f32 %v3665, %v3666
        %v3668 = vrot.slane %v3667, 1
        %v3669 = vmax.f32 %v3667, %v3668
        %v3670 = vmax.f32 %v3577, %v3585
        %v3671 = vrot.slane %v3670, 4
        %v3672 = vmax.f32 %v3670, %v3671
        %v3673 = vrot.slane %v3672, 2
        %v3674 = vmax.f32 %v3672, %v3673
        %v3675 = vrot.slane %v3674, 1
        %v3676 = vmax.f32 %v3674, %v3675
        %v3677 = vmax.f32 %v3578, %v3586
        %v3678 = vrot.slane %v3677, 4
        %v3679 = vmax.f32 %v3677, %v3678
        %v3680 = vrot.slane %v3679, 2
        %v3681 = vmax.f32 %v3679, %v3680
        %v3682 = vrot.slane %v3681, 1
        %v3683 = vmax.f32 %v3681, %v3682
        %v3684 = vmax.f32 %v3579, %v3587
        %v3685 = vrot.slane %v3684, 4
        %v3686 = vmax.f32 %v3684, %v3685
        %v3687 = vrot.slane %v3686, 2
        %v3688 = vmax.f32 %v3686, %v3687
        %v3689 = vrot.slane %v3688, 1
        %v3690 = vmax.f32 %v3688, %v3689
        %v3691 = vmax.f32 %v3580, %v3588
        %v3692 = vrot.slane %v3691, 4
        %v3693 = vmax.f32 %v3691, %v3692
        %v3694 = vrot.slane %v3693, 2
        %v3695 = vmax.f32 %v3693, %v3694
        %v3696 = vrot.slane %v3695, 1
        %v3697 = vmax.f32 %v3695, %v3696
        %v3698 = vmax.f32 %v3581, %v3589
        %v3699 = vrot.slane %v3698, 4
        %v3700 = vmax.f32 %v3698, %v3699
        %v3701 = vrot.slane %v3700, 2
        %v3702 = vmax.f32 %v3700, %v3701
        %v3703 = vrot.slane %v3702, 1
        %v3704 = vmax.f32 %v3702, %v3703
        %v3705 = vmax.f32 %v3582, %v3590
        %v3706 = vrot.slane %v3705, 4
        %v3707 = vmax.f32 %v3705, %v3706
        %v3708 = vrot.slane %v3707, 2
        %v3709 = vmax.f32 %v3707, %v3708
        %v3710 = vrot.slane %v3709, 1
        %v3711 = vmax.f32 %v3709, %v3710
        %v3712 = vmax.f32 %v3583, %v3591
        %v3713 = vrot.slane %v3712, 4
        %v3714 = vmax.f32 %v3712, %v3713
        %v3715 = vrot.slane %v3714, 2
        %v3716 = vmax.f32 %v3714, %v3715
        %v3717 = vrot.slane %v3716, 1
        %v3718 = vmax.f32 %v3716, %v3717
        %v3719 = vlaneseq
        %v3720 = vshrl.u32 %v3719, 7
        %vm3721 = vcmp.eq.s32.totalorder %v3720, 0
        %v3722 = vsel %vm3721, %v3655, %v3669
        %v3723 = vsel %vm3721, %v3656, %v3676
        %v3724 = vsel %vm3721, %v3657, %v3683
        %v3725 = vsel %vm3721, %v3658, %v3690
        %v3726 = vsel %vm3721, %v3659, %v3697
        %v3727 = vsel %vm3721, %v3660, %v3704
        %v3728 = vsel %vm3721, %v3661, %v3711
        %v3729 = vsel %vm3721, %v3662, %v3718
        %v3730 = vld [vmem:[%s8] sm:$0x3]
        %3731 = vrot.lane.b32.xlu0 %v3722, 17
        %v3732 = vpop.permute.xlu0 %3731
        %3733 = vrot.lane.b32.xlu0 %v3723, 17
        %v3734 = vpop.permute.xlu0 %3733
        %3735 = vrot.lane.b32.xlu0 %v3724, 17
        %v3736 = vpop.permute.xlu0 %3735
        %3737 = vrot.lane.b32.xlu0 %v3725, 17
        %v3738 = vpop.permute.xlu0 %3737
        %3739 = vrot.lane.b32.xlu0 %v3726, 17
        %v3740 = vpop.permute.xlu0 %3739
        %3741 = vrot.lane.b32.xlu0 %v3727, 17
        %v3742 = vpop.permute.xlu0 %3741
        %3743 = vrot.lane.b32.xlu0 %v3728, 17
        %v3744 = vpop.permute.xlu0 %3743
        %3745 = vrot.lane.b32.xlu0 %v3729, 17
        %v3746 = vpop.permute.xlu0 %3745
        %v3747 = vsel %vm639, %v3744, %v3746
        %v3748 = vsel %vm639, %v3742, %v3744
        %v3749 = vsel %vm639, %v3740, %v3742
        %v3750 = vsel %vm639, %v3738, %v3740
        %v3751 = vsel %vm639, %v3736, %v3738
        %v3752 = vsel %vm639, %v3734, %v3736
        %v3753 = vsel %vm639, %v3732, %v3734
        %v3754 = vsel %vm639, %v3746, %v3732
        %v3755 = vmul.f32 %v3754, %v445
        %v3756 = vmul.f32 %v3753, %v446
        %v3757 = vmul.f32 %v3752, %v447
        %v3758 = vmul.f32 %v3751, %v448
        %v3759 = vmul.f32 %v3750, %v449
        %v3760 = vmul.f32 %v3749, %v450
        %v3761 = vmul.f32 %v3748, %v451
        %v3762 = vmul.f32 %v3747, %v452
        %3764 = vset.pattern.permute.xlu0 0
        %3765 = vperm.xlu0 %3764, %v3730
        %v3766 = vpop.permute.xlu0 %3765
        %v3768 = vmul.f32 %v3766, %v3755
        %v3769 = vmul.f32 %v3766, %v3756
        %v3770 = vmul.f32 %v3766, %v3757
        %v3771 = vmul.f32 %v3766, %v3758
        %v3772 = vmul.f32 %v3766, %v3759
        %v3773 = vmul.f32 %v3766, %v3760
        %v3774 = vmul.f32 %v3766, %v3761
        %v3775 = vmul.f32 %v3766, %v3762
        %v3776 = vadd.f32 %v3768, 0.0
        %v3777 = vadd.f32 %v3769, 0.0
        %v3778 = vadd.f32 %v3770, 0.0
        %v3779 = vadd.f32 %v3771, 0.0
        %v3780 = vadd.f32 %v3772, 0.0
        %v3781 = vadd.f32 %v3773, 0.0
        %v3782 = vadd.f32 %v3774, 0.0
        %v3783 = vadd.f32 %v3775, 0.0
        %3784 = vrot.lane.b32.xlu0 %v3722, 16
        %v3785 = vpop.permute.xlu0 %3784
        %3786 = vrot.lane.b32.xlu0 %v3723, 16
        %v3787 = vpop.permute.xlu0 %3786
        %3788 = vrot.lane.b32.xlu0 %v3724, 16
        %v3789 = vpop.permute.xlu0 %3788
        %3790 = vrot.lane.b32.xlu0 %v3725, 16
        %v3791 = vpop.permute.xlu0 %3790
        %3792 = vrot.lane.b32.xlu0 %v3726, 16
        %v3793 = vpop.permute.xlu0 %3792
        %3794 = vrot.lane.b32.xlu0 %v3727, 16
        %v3795 = vpop.permute.xlu0 %3794
        %3796 = vrot.lane.b32.xlu0 %v3728, 16
        %v3797 = vpop.permute.xlu0 %3796
        %3798 = vrot.lane.b32.xlu0 %v3729, 16
        %v3799 = vpop.permute.xlu0 %3798
        %v3800 = vsel %vm720, %v3797, %v3799
        %v3801 = vsel %vm720, %v3795, %v3797
        %v3802 = vsel %vm720, %v3793, %v3795
        %v3803 = vsel %vm720, %v3791, %v3793
        %v3804 = vsel %vm720, %v3789, %v3791
        %v3805 = vsel %vm720, %v3787, %v3789
        %v3806 = vsel %vm720, %v3785, %v3787
        %v3807 = vsel %vm720, %v3799, %v3785
        %v3808 = vmul.f32 %v3807, %v461
        %v3809 = vmul.f32 %v3806, %v462
        %v3810 = vmul.f32 %v3805, %v463
        %v3811 = vmul.f32 %v3804, %v464
        %v3812 = vmul.f32 %v3803, %v465
        %v3813 = vmul.f32 %v3802, %v466
        %v3814 = vmul.f32 %v3801, %v467
        %v3815 = vmul.f32 %v3800, %v468
        %3816 = vset.pattern.permute.xlu0 1
        %3817 = vperm.xlu0 %3816, %v3730
        %v3818 = vpop.permute.xlu0 %3817
        %v3820 = vmul.f32 %v3818, %v3808
        %v3821 = vmul.f32 %v3818, %v3809
        %v3822 = vmul.f32 %v3818, %v3810
        %v3823 = vmul.f32 %v3818, %v3811
        %v3824 = vmul.f32 %v3818, %v3812
        %v3825 = vmul.f32 %v3818, %v3813
        %v3826 = vmul.f32 %v3818, %v3814
        %v3827 = vmul.f32 %v3818, %v3815
        %v3828 = vadd.f32 %v3776, %v3820
        %v3829 = vadd.f32 %v3777, %v3821
        %v3830 = vadd.f32 %v3778, %v3822
        %v3831 = vadd.f32 %v3779, %v3823
        %v3832 = vadd.f32 %v3780, %v3824
        %v3833 = vadd.f32 %v3781, %v3825
        %v3834 = vadd.f32 %v3782, %v3826
        %v3835 = vadd.f32 %v3783, %v3827
        %3836 = vrot.lane.b32.xlu0 %v3722, 15
        %v3837 = vpop.permute.xlu0 %3836
        %3838 = vrot.lane.b32.xlu0 %v3723, 15
        %v3839 = vpop.permute.xlu0 %3838
        %3840 = vrot.lane.b32.xlu0 %v3724, 15
        %v3841 = vpop.permute.xlu0 %3840
        %3842 = vrot.lane.b32.xlu0 %v3725, 15
        %v3843 = vpop.permute.xlu0 %3842
        %3844 = vrot.lane.b32.xlu0 %v3726, 15
        %v3845 = vpop.permute.xlu0 %3844
        %3846 = vrot.lane.b32.xlu0 %v3727, 15
        %v3847 = vpop.permute.xlu0 %3846
        %3848 = vrot.lane.b32.xlu0 %v3728, 15
        %v3849 = vpop.permute.xlu0 %3848
        %3850 = vrot.lane.b32.xlu0 %v3729, 15
        %v3851 = vpop.permute.xlu0 %3850
        %v3852 = vsel %vm801, %v3849, %v3851
        %v3853 = vsel %vm801, %v3847, %v3849
        %v3854 = vsel %vm801, %v3845, %v3847
        %v3855 = vsel %vm801, %v3843, %v3845
        %v3856 = vsel %vm801, %v3841, %v3843
        %v3857 = vsel %vm801, %v3839, %v3841
        %v3858 = vsel %vm801, %v3837, %v3839
        %v3859 = vsel %vm801, %v3851, %v3837
        %v3860 = vmul.f32 %v3859, %v493
        %v3861 = vmul.f32 %v3858, %v494
        %v3862 = vmul.f32 %v3857, %v495
        %v3863 = vmul.f32 %v3856, %v496
        %v3864 = vmul.f32 %v3855, %v497
        %v3865 = vmul.f32 %v3854, %v498
        %v3866 = vmul.f32 %v3853, %v499
        %v3867 = vmul.f32 %v3852, %v500
        %3868 = vset.pattern.permute.xlu0 2
        %3869 = vperm.xlu0 %3868, %v3730
        %v3870 = vpop.permute.xlu0 %3869
        %v3872 = vmul.f32 %v3870, %v3860
        %v3873 = vmul.f32 %v3870, %v3861
        %v3874 = vmul.f32 %v3870, %v3862
        %v3875 = vmul.f32 %v3870, %v3863
        %v3876 = vmul.f32 %v3870, %v3864
        %v3877 = vmul.f32 %v3870, %v3865
        %v3878 = vmul.f32 %v3870, %v3866
        %v3879 = vmul.f32 %v3870, %v3867
        %v3880 = vadd.f32 %v3828, %v3872
        %v3881 = vadd.f32 %v3829, %v3873
        %v3882 = vadd.f32 %v3830, %v3874
        %v3883 = vadd.f32 %v3831, %v3875
        %v3884 = vadd.f32 %v3832, %v3876
        %v3885 = vadd.f32 %v3833, %v3877
        %v3886 = vadd.f32 %v3834, %v3878
        %v3887 = vadd.f32 %v3835, %v3879
        %3888 = vrot.lane.b32.xlu0 %v3722, 1
        %v3889 = vpop.permute.xlu0 %3888
        %3890 = vrot.lane.b32.xlu0 %v3723, 1
        %v3891 = vpop.permute.xlu0 %3890
        %3892 = vrot.lane.b32.xlu0 %v3724, 1
        %v3893 = vpop.permute.xlu0 %3892
        %3894 = vrot.lane.b32.xlu0 %v3725, 1
        %v3895 = vpop.permute.xlu0 %3894
        %3896 = vrot.lane.b32.xlu0 %v3726, 1
        %v3897 = vpop.permute.xlu0 %3896
        %3898 = vrot.lane.b32.xlu0 %v3727, 1
        %v3899 = vpop.permute.xlu0 %3898
        %3900 = vrot.lane.b32.xlu0 %v3728, 1
        %v3901 = vpop.permute.xlu0 %3900
        %3902 = vrot.lane.b32.xlu0 %v3729, 1
        %v3903 = vpop.permute.xlu0 %3902
        %v3904 = vsel %vm882, %v3901, %v3903
        %v3905 = vsel %vm882, %v3899, %v3901
        %v3906 = vsel %vm882, %v3897, %v3899
        %v3907 = vsel %vm882, %v3895, %v3897
        %v3908 = vsel %vm882, %v3893, %v3895
        %v3909 = vsel %vm882, %v3891, %v3893
        %v3910 = vsel %vm882, %v3889, %v3891
        %v3911 = vsel %vm882, %v3903, %v3889
        %v3912 = vmul.f32 %v3911, %v509
        %v3913 = vmul.f32 %v3910, %v510
        %v3914 = vmul.f32 %v3909, %v511
        %v3915 = vmul.f32 %v3908, %v512
        %v3916 = vmul.f32 %v3907, %v513
        %v3917 = vmul.f32 %v3906, %v514
        %v3918 = vmul.f32 %v3905, %v515
        %v3919 = vmul.f32 %v3904, %v516
        %3920 = vset.pattern.permute.xlu0 3
        %3921 = vperm.xlu0 %3920, %v3730
        %v3922 = vpop.permute.xlu0 %3921
        %v3924 = vmul.f32 %v3922, %v3912
        %v3925 = vmul.f32 %v3922, %v3913
        %v3926 = vmul.f32 %v3922, %v3914
        %v3927 = vmul.f32 %v3922, %v3915
        %v3928 = vmul.f32 %v3922, %v3916
        %v3929 = vmul.f32 %v3922, %v3917
        %v3930 = vmul.f32 %v3922, %v3918
        %v3931 = vmul.f32 %v3922, %v3919
        %v3932 = vadd.f32 %v3880, %v3924
        %v3933 = vadd.f32 %v3881, %v3925
        %v3934 = vadd.f32 %v3882, %v3926
        %v3935 = vadd.f32 %v3883, %v3927
        %v3936 = vadd.f32 %v3884, %v3928
        %v3937 = vadd.f32 %v3885, %v3929
        %v3938 = vadd.f32 %v3886, %v3930
        %v3939 = vadd.f32 %v3887, %v3931
        %3940 = vset.pattern.permute.xlu0 4
        %3941 = vperm.xlu0 %3940, %v3730
        %v3942 = vpop.permute.xlu0 %3941
        %v3944 = vmul.f32 %v3942, %v3722
        %v3945 = vmul.f32 %v3942, %v3723
        %v3946 = vmul.f32 %v3942, %v3724
        %v3947 = vmul.f32 %v3942, %v3725
        %v3948 = vmul.f32 %v3942, %v3726
        %v3949 = vmul.f32 %v3942, %v3727
        %v3950 = vmul.f32 %v3942, %v3728
        %v3951 = vmul.f32 %v3942, %v3729
        %v3952 = vadd.f32 %v3932, %v3944
        %v3953 = vadd.f32 %v3933, %v3945
        %v3954 = vadd.f32 %v3934, %v3946
        %v3955 = vadd.f32 %v3935, %v3947
        %v3956 = vadd.f32 %v3936, %v3948
        %v3957 = vadd.f32 %v3937, %v3949
        %v3958 = vadd.f32 %v3938, %v3950
        %v3959 = vadd.f32 %v3939, %v3951
        %3960 = vrot.lane.b32.xlu0 %v3722, 127
        %v3961 = vpop.permute.xlu0 %3960
        %3962 = vrot.lane.b32.xlu0 %v3723, 127
        %v3963 = vpop.permute.xlu0 %3962
        %3964 = vrot.lane.b32.xlu0 %v3724, 127
        %v3965 = vpop.permute.xlu0 %3964
        %3966 = vrot.lane.b32.xlu0 %v3725, 127
        %v3967 = vpop.permute.xlu0 %3966
        %3968 = vrot.lane.b32.xlu0 %v3726, 127
        %v3969 = vpop.permute.xlu0 %3968
        %3970 = vrot.lane.b32.xlu0 %v3727, 127
        %v3971 = vpop.permute.xlu0 %3970
        %3972 = vrot.lane.b32.xlu0 %v3728, 127
        %v3973 = vpop.permute.xlu0 %3972
        %3974 = vrot.lane.b32.xlu0 %v3729, 127
        %v3975 = vpop.permute.xlu0 %3974
        %v3976 = vsel %vm979, %v3973, %v3975
        %v3977 = vsel %vm979, %v3971, %v3973
        %v3978 = vsel %vm979, %v3969, %v3971
        %v3979 = vsel %vm979, %v3967, %v3969
        %v3980 = vsel %vm979, %v3965, %v3967
        %v3981 = vsel %vm979, %v3963, %v3965
        %v3982 = vsel %vm979, %v3961, %v3963
        %v3983 = vsel %vm979, %v3975, %v3961
        %v3984 = vmul.f32 %v3982, %v525
        %v3985 = vmul.f32 %v3981, %v526
        %v3986 = vmul.f32 %v3980, %v527
        %v3987 = vmul.f32 %v3979, %v528
        %v3988 = vmul.f32 %v3978, %v529
        %v3989 = vmul.f32 %v3977, %v530
        %v3990 = vmul.f32 %v3976, %v531
        %v3991 = vmul.f32 %v3983, %v532
        %3992 = vset.pattern.permute.xlu0 5
        %3993 = vperm.xlu0 %3992, %v3730
        %v3994 = vpop.permute.xlu0 %3993
        %v3996 = vmul.f32 %v3994, %v3984
        %v3997 = vmul.f32 %v3994, %v3985
        %v3998 = vmul.f32 %v3994, %v3986
        %v3999 = vmul.f32 %v3994, %v3987
        %v4000 = vmul.f32 %v3994, %v3988
        %v4001 = vmul.f32 %v3994, %v3989
        %v4002 = vmul.f32 %v3994, %v3990
        %v4003 = vmul.f32 %v3994, %v3991
        %v4004 = vadd.f32 %v3952, %v3996
        %v4005 = vadd.f32 %v3953, %v3997
        %v4006 = vadd.f32 %v3954, %v3998
        %v4007 = vadd.f32 %v3955, %v3999
        %v4008 = vadd.f32 %v3956, %v4000
        %v4009 = vadd.f32 %v3957, %v4001
        %v4010 = vadd.f32 %v3958, %v4002
        %v4011 = vadd.f32 %v3959, %v4003
        %4012 = vrot.lane.b32.xlu0 %v3722, 113
        %v4013 = vpop.permute.xlu0 %4012
        %4014 = vrot.lane.b32.xlu0 %v3723, 113
        %v4015 = vpop.permute.xlu0 %4014
        %4016 = vrot.lane.b32.xlu0 %v3724, 113
        %v4017 = vpop.permute.xlu0 %4016
        %4018 = vrot.lane.b32.xlu0 %v3725, 113
        %v4019 = vpop.permute.xlu0 %4018
        %4020 = vrot.lane.b32.xlu0 %v3726, 113
        %v4021 = vpop.permute.xlu0 %4020
        %4022 = vrot.lane.b32.xlu0 %v3727, 113
        %v4023 = vpop.permute.xlu0 %4022
        %4024 = vrot.lane.b32.xlu0 %v3728, 113
        %v4025 = vpop.permute.xlu0 %4024
        %4026 = vrot.lane.b32.xlu0 %v3729, 113
        %v4027 = vpop.permute.xlu0 %4026
        %v4028 = vsel %vm1060, %v4025, %v4027
        %v4029 = vsel %vm1060, %v4023, %v4025
        %v4030 = vsel %vm1060, %v4021, %v4023
        %v4031 = vsel %vm1060, %v4019, %v4021
        %v4032 = vsel %vm1060, %v4017, %v4019
        %v4033 = vsel %vm1060, %v4015, %v4017
        %v4034 = vsel %vm1060, %v4013, %v4015
        %v4035 = vsel %vm1060, %v4027, %v4013
        %v4036 = vmul.f32 %v4034, %v557
        %v4037 = vmul.f32 %v4033, %v558
        %v4038 = vmul.f32 %v4032, %v559
        %v4039 = vmul.f32 %v4031, %v560
        %v4040 = vmul.f32 %v4030, %v561
        %v4041 = vmul.f32 %v4029, %v562
        %v4042 = vmul.f32 %v4028, %v563
        %v4043 = vmul.f32 %v4035, %v564
        %4044 = vset.pattern.permute.xlu0 6
        %4045 = vperm.xlu0 %4044, %v3730
        %v4046 = vpop.permute.xlu0 %4045
        %v4048 = vmul.f32 %v4046, %v4036
        %v4049 = vmul.f32 %v4046, %v4037
        %v4050 = vmul.f32 %v4046, %v4038
        %v4051 = vmul.f32 %v4046, %v4039
        %v4052 = vmul.f32 %v4046, %v4040
        %v4053 = vmul.f32 %v4046, %v4041
        %v4054 = vmul.f32 %v4046, %v4042
        %v4055 = vmul.f32 %v4046, %v4043
        %v4056 = vadd.f32 %v4004, %v4048
        %v4057 = vadd.f32 %v4005, %v4049
        %v4058 = vadd.f32 %v4006, %v4050
        %v4059 = vadd.f32 %v4007, %v4051
        %v4060 = vadd.f32 %v4008, %v4052
        %v4061 = vadd.f32 %v4009, %v4053
        %v4062 = vadd.f32 %v4010, %v4054
        %v4063 = vadd.f32 %v4011, %v4055
        %4064 = vrot.lane.b32.xlu0 %v3722, 112
        %v4065 = vpop.permute.xlu0 %4064
        %4066 = vrot.lane.b32.xlu0 %v3723, 112
        %v4067 = vpop.permute.xlu0 %4066
        %4068 = vrot.lane.b32.xlu0 %v3724, 112
        %v4069 = vpop.permute.xlu0 %4068
        %4070 = vrot.lane.b32.xlu0 %v3725, 112
        %v4071 = vpop.permute.xlu0 %4070
        %4072 = vrot.lane.b32.xlu0 %v3726, 112
        %v4073 = vpop.permute.xlu0 %4072
        %4074 = vrot.lane.b32.xlu0 %v3727, 112
        %v4075 = vpop.permute.xlu0 %4074
        %4076 = vrot.lane.b32.xlu0 %v3728, 112
        %v4077 = vpop.permute.xlu0 %4076
        %4078 = vrot.lane.b32.xlu0 %v3729, 112
        %v4079 = vpop.permute.xlu0 %4078
        %v4080 = vsel %vm1141, %v4077, %v4079
        %v4081 = vsel %vm1141, %v4075, %v4077
        %v4082 = vsel %vm1141, %v4073, %v4075
        %v4083 = vsel %vm1141, %v4071, %v4073
        %v4084 = vsel %vm1141, %v4069, %v4071
        %v4085 = vsel %vm1141, %v4067, %v4069
        %v4086 = vsel %vm1141, %v4065, %v4067
        %v4087 = vsel %vm1141, %v4079, %v4065
        %v4088 = vmul.f32 %v4086, %v573
        %v4089 = vmul.f32 %v4085, %v574
        %v4090 = vmul.f32 %v4084, %v575
        %v4091 = vmul.f32 %v4083, %v576
        %v4092 = vmul.f32 %v4082, %v577
        %v4093 = vmul.f32 %v4081, %v578
        %v4094 = vmul.f32 %v4080, %v579
        %v4095 = vmul.f32 %v4087, %v580
        %4096 = vset.pattern.permute.xlu0 7
        %4097 = vperm.xlu0 %4096, %v3730
        %v4098 = vpop.permute.xlu0 %4097
        %v4100 = vmul.f32 %v4098, %v4088
        %v4101 = vmul.f32 %v4098, %v4089
        %v4102 = vmul.f32 %v4098, %v4090
        %v4103 = vmul.f32 %v4098, %v4091
        %v4104 = vmul.f32 %v4098, %v4092
        %v4105 = vmul.f32 %v4098, %v4093
        %v4106 = vmul.f32 %v4098, %v4094
        %v4107 = vmul.f32 %v4098, %v4095
        %v4108 = vadd.f32 %v4056, %v4100
        %v4109 = vadd.f32 %v4057, %v4101
        %v4110 = vadd.f32 %v4058, %v4102
        %v4111 = vadd.f32 %v4059, %v4103
        %v4112 = vadd.f32 %v4060, %v4104
        %v4113 = vadd.f32 %v4061, %v4105
        %v4114 = vadd.f32 %v4062, %v4106
        %v4115 = vadd.f32 %v4063, %v4107
        %4116 = vrot.lane.b32.xlu0 %v3722, 111
        %v4117 = vpop.permute.xlu0 %4116
        %4118 = vrot.lane.b32.xlu0 %v3723, 111
        %v4119 = vpop.permute.xlu0 %4118
        %4120 = vrot.lane.b32.xlu0 %v3724, 111
        %v4121 = vpop.permute.xlu0 %4120
        %4122 = vrot.lane.b32.xlu0 %v3725, 111
        %v4123 = vpop.permute.xlu0 %4122
        %4124 = vrot.lane.b32.xlu0 %v3726, 111
        %v4125 = vpop.permute.xlu0 %4124
        %4126 = vrot.lane.b32.xlu0 %v3727, 111
        %v4127 = vpop.permute.xlu0 %4126
        %4128 = vrot.lane.b32.xlu0 %v3728, 111
        %v4129 = vpop.permute.xlu0 %4128
        %4130 = vrot.lane.b32.xlu0 %v3729, 111
        %v4131 = vpop.permute.xlu0 %4130
        %v4132 = vsel %vm1222, %v4129, %v4131
        %v4133 = vsel %vm1222, %v4127, %v4129
        %v4134 = vsel %vm1222, %v4125, %v4127
        %v4135 = vsel %vm1222, %v4123, %v4125
        %v4136 = vsel %vm1222, %v4121, %v4123
        %v4137 = vsel %vm1222, %v4119, %v4121
        %v4138 = vsel %vm1222, %v4117, %v4119
        %v4139 = vsel %vm1222, %v4131, %v4117
        %v4140 = vmul.f32 %v4138, %v597
        %v4141 = vmul.f32 %v4137, %v598
        %v4142 = vmul.f32 %v4136, %v599
        %v4143 = vmul.f32 %v4135, %v600
        %v4144 = vmul.f32 %v4134, %v601
        %v4145 = vmul.f32 %v4133, %v602
        %v4146 = vmul.f32 %v4132, %v603
        %v4147 = vmul.f32 %v4139, %v604
        %4148 = vset.pattern.permute.xlu0 8
        %4149 = vperm.xlu0 %4148, %v3730
        %v4150 = vpop.permute.xlu0 %4149
        %v4152 = vmul.f32 %v4150, %v4140
        %v4153 = vmul.f32 %v4150, %v4141
        %v4154 = vmul.f32 %v4150, %v4142
        %v4155 = vmul.f32 %v4150, %v4143
        %v4156 = vmul.f32 %v4150, %v4144
        %v4157 = vmul.f32 %v4150, %v4145
        %v4158 = vmul.f32 %v4150, %v4146
        %v4159 = vmul.f32 %v4150, %v4147
        %v4160 = vadd.f32 %v4108, %v4152
        %v4161 = vadd.f32 %v4109, %v4153
        %v4162 = vadd.f32 %v4110, %v4154
        %v4163 = vadd.f32 %v4111, %v4155
        %v4164 = vadd.f32 %v4112, %v4156
        %v4165 = vadd.f32 %v4113, %v4157
        %v4166 = vadd.f32 %v4114, %v4158
        %v4167 = vadd.f32 %v4115, %v4159
        %v4168 = vsel %vm3141, %v4160, 0.0
        %v4169 = vrot.slane %v4168, 4
        %v4170 = vadd.f32 %v4168, %v4169
        %v4171 = vrot.slane %v4170, 2
        %v4172 = vadd.f32 %v4170, %v4171
        %v4173 = vrot.slane %v4172, 1
        %v4174 = vadd.f32 %v4172, %v4173
        %v4175 = vsel %vm3141, %v4161, 0.0
        %v4176 = vrot.slane %v4175, 4
        %v4177 = vadd.f32 %v4175, %v4176
        %v4178 = vrot.slane %v4177, 2
        %v4179 = vadd.f32 %v4177, %v4178
        %v4180 = vrot.slane %v4179, 1
        %v4181 = vadd.f32 %v4179, %v4180
        %v4182 = vsel %vm3141, %v4162, 0.0
        %v4183 = vrot.slane %v4182, 4
        %v4184 = vadd.f32 %v4182, %v4183
        %v4185 = vrot.slane %v4184, 2
        %v4186 = vadd.f32 %v4184, %v4185
        %v4187 = vrot.slane %v4186, 1
        %v4188 = vadd.f32 %v4186, %v4187
        %v4189 = vsel %vm3141, %v4163, 0.0
        %v4190 = vrot.slane %v4189, 4
        %v4191 = vadd.f32 %v4189, %v4190
        %v4192 = vrot.slane %v4191, 2
        %v4193 = vadd.f32 %v4191, %v4192
        %v4194 = vrot.slane %v4193, 1
        %v4195 = vadd.f32 %v4193, %v4194
        %v4196 = vsel %vm3141, %v4164, 0.0
        %v4197 = vrot.slane %v4196, 4
        %v4198 = vadd.f32 %v4196, %v4197
        %v4199 = vrot.slane %v4198, 2
        %v4200 = vadd.f32 %v4198, %v4199
        %v4201 = vrot.slane %v4200, 1
        %v4202 = vadd.f32 %v4200, %v4201
        %v4203 = vsel %vm3141, %v4165, 0.0
        %v4204 = vrot.slane %v4203, 4
        %v4205 = vadd.f32 %v4203, %v4204
        %v4206 = vrot.slane %v4205, 2
        %v4207 = vadd.f32 %v4205, %v4206
        %v4208 = vrot.slane %v4207, 1
        %v4209 = vadd.f32 %v4207, %v4208
        %v4210 = vsel %vm3141, %v4166, 0.0
        %v4211 = vrot.slane %v4210, 4
        %v4212 = vadd.f32 %v4210, %v4211
        %v4213 = vrot.slane %v4212, 2
        %v4214 = vadd.f32 %v4212, %v4213
        %v4215 = vrot.slane %v4214, 1
        %v4216 = vadd.f32 %v4214, %v4215
        %v4217 = vsel %vm3141, %v4167, 0.0
        %v4218 = vrot.slane %v4217, 4
        %v4219 = vadd.f32 %v4217, %v4218
        %v4220 = vrot.slane %v4219, 2
        %v4221 = vadd.f32 %v4219, %v4220
        %v4222 = vrot.slane %v4221, 1
        %v4223 = vadd.f32 %v4221, %v4222
        %4224 = vset.pattern.permute.xlu0 9
        %4225 = vperm.xlu0 %4224, %v3730
        %v4226 = vpop.permute.xlu0 %4225
        %v4228 = vadd.f32 %v4174, %v4226
        %v4229 = vadd.f32 %v4181, %v4226
        %v4230 = vadd.f32 %v4188, %v4226
        %v4231 = vadd.f32 %v4195, %v4226
        %v4232 = vadd.f32 %v4202, %v4226
        %v4233 = vadd.f32 %v4209, %v4226
        %v4234 = vadd.f32 %v4216, %v4226
        %v4235 = vadd.f32 %v4223, %v4226
        %v4236 = vxor.u32 %v4228, 2147483648
        %v4237 = vxor.u32 %v4229, 2147483648
        %v4238 = vxor.u32 %v4230, 2147483648
        %v4239 = vxor.u32 %v4231, 2147483648
        %v4240 = vxor.u32 %v4232, 2147483648
        %v4241 = vxor.u32 %v4233, 2147483648
        %v4242 = vxor.u32 %v4234, 2147483648
        %v4243 = vxor.u32 %v4235, 2147483648
        %v4244 = vmul.f32 %v4236, 1.442695
        %v4245 = vpow.pop %v4244
        %v4246 = vmul.f32 %v4237, 1.442695
        %v4247 = vpow.pop %v4246
        %v4248 = vmul.f32 %v4238, 1.442695
        %v4249 = vpow.pop %v4248
        %v4250 = vmul.f32 %v4239, 1.442695
        %v4251 = vpow.pop %v4250
        %v4252 = vmul.f32 %v4240, 1.442695
        %v4253 = vpow.pop %v4252
        %v4254 = vmul.f32 %v4241, 1.442695
        %v4255 = vpow.pop %v4254
        %v4256 = vmul.f32 %v4242, 1.442695
        %v4257 = vpow.pop %v4256
        %v4258 = vmul.f32 %v4243, 1.442695
        %v4259 = vpow.pop %v4258
        %v4260 = vadd.f32 %v4245, 1.0
        %v4261 = vadd.f32 %v4247, 1.0
        %v4262 = vadd.f32 %v4249, 1.0
        %v4263 = vadd.f32 %v4251, 1.0
        %v4264 = vadd.f32 %v4253, 1.0
        %v4265 = vadd.f32 %v4255, 1.0
        %v4266 = vadd.f32 %v4257, 1.0
        %v4267 = vadd.f32 %v4259, 1.0
        %v4268 = vrcp.pop %v4260
        %v4269 = vmul.f32 %v4260, %v4268
        %v4270 = vsub.f32 1.0, %v4269
        %v4271 = vmul.f32 %v4268, %v4270
        %v4272 = vadd.f32 %v4268, %v4271
        %vm4273 = vweird.f32 %v4260
        %vm4274 = vweird.f32 %v4268
        %vm4275 = vmor %vm4273, %vm4274
        %v4276 = vsel %vm4275, %v4268, %v4272
        %v4277 = vand.u32 2147483647, %v4260
        %vm4278 = vcmp.eq.f32.partialorder %v4277, 8.507059e+37
        %v4279 = vand.u32 %v4260, 2147483648
        %v4280 = vor.u32 1.1754944e-38, %v4279
        %v4281 = vsel %vm4278, %v4280, %v4276
        %v4282 = vmul.f32 1.0, %v4281
        %v4283 = vrcp.pop %v4261
        %v4284 = vmul.f32 %v4261, %v4283
        %v4285 = vsub.f32 1.0, %v4284
        %v4286 = vmul.f32 %v4283, %v4285
        %v4287 = vadd.f32 %v4283, %v4286
        %vm4288 = vweird.f32 %v4261
        %vm4289 = vweird.f32 %v4283
        %vm4290 = vmor %vm4288, %vm4289
        %v4291 = vsel %vm4290, %v4283, %v4287
        %v4292 = vand.u32 2147483647, %v4261
        %vm4293 = vcmp.eq.f32.partialorder %v4292, 8.507059e+37
        %v4294 = vand.u32 %v4261, 2147483648
        %v4295 = vor.u32 1.1754944e-38, %v4294
        %v4296 = vsel %vm4293, %v4295, %v4291
        %v4297 = vmul.f32 1.0, %v4296
        %v4298 = vrcp.pop %v4262
        %v4299 = vmul.f32 %v4262, %v4298
        %v4300 = vsub.f32 1.0, %v4299
        %v4301 = vmul.f32 %v4298, %v4300
        %v4302 = vadd.f32 %v4298, %v4301
        %vm4303 = vweird.f32 %v4262
        %vm4304 = vweird.f32 %v4298
        %vm4305 = vmor %vm4303, %vm4304
        %v4306 = vsel %vm4305, %v4298, %v4302
        %v4307 = vand.u32 2147483647, %v4262
        %vm4308 = vcmp.eq.f32.partialorder %v4307, 8.507059e+37
        %v4309 = vand.u32 %v4262, 2147483648
        %v4310 = vor.u32 1.1754944e-38, %v4309
        %v4311 = vsel %vm4308, %v4310, %v4306
        %v4312 = vmul.f32 1.0, %v4311
        %v4313 = vrcp.pop %v4263
        %v4314 = vmul.f32 %v4263, %v4313
        %v4315 = vsub.f32 1.0, %v4314
        %v4316 = vmul.f32 %v4313, %v4315
        %v4317 = vadd.f32 %v4313, %v4316
        %vm4318 = vweird.f32 %v4263
        %vm4319 = vweird.f32 %v4313
        %vm4320 = vmor %vm4318, %vm4319
        %v4321 = vsel %vm4320, %v4313, %v4317
        %v4322 = vand.u32 2147483647, %v4263
        %vm4323 = vcmp.eq.f32.partialorder %v4322, 8.507059e+37
        %v4324 = vand.u32 %v4263, 2147483648
        %v4325 = vor.u32 1.1754944e-38, %v4324
        %v4326 = vsel %vm4323, %v4325, %v4321
        %v4327 = vmul.f32 1.0, %v4326
        %v4328 = vrcp.pop %v4264
        %v4329 = vmul.f32 %v4264, %v4328
        %v4330 = vsub.f32 1.0, %v4329
        %v4331 = vmul.f32 %v4328, %v4330
        %v4332 = vadd.f32 %v4328, %v4331
        %vm4333 = vweird.f32 %v4264
        %vm4334 = vweird.f32 %v4328
        %vm4335 = vmor %vm4333, %vm4334
        %v4336 = vsel %vm4335, %v4328, %v4332
        %v4337 = vand.u32 2147483647, %v4264
        %vm4338 = vcmp.eq.f32.partialorder %v4337, 8.507059e+37
        %v4339 = vand.u32 %v4264, 2147483648
        %v4340 = vor.u32 1.1754944e-38, %v4339
        %v4341 = vsel %vm4338, %v4340, %v4336
        %v4342 = vmul.f32 1.0, %v4341
        %v4343 = vrcp.pop %v4265
        %v4344 = vmul.f32 %v4265, %v4343
        %v4345 = vsub.f32 1.0, %v4344
        %v4346 = vmul.f32 %v4343, %v4345
        %v4347 = vadd.f32 %v4343, %v4346
        %vm4348 = vweird.f32 %v4265
        %vm4349 = vweird.f32 %v4343
        %vm4350 = vmor %vm4348, %vm4349
        %v4351 = vsel %vm4350, %v4343, %v4347
        %v4352 = vand.u32 2147483647, %v4265
        %vm4353 = vcmp.eq.f32.partialorder %v4352, 8.507059e+37
        %v4354 = vand.u32 %v4265, 2147483648
        %v4355 = vor.u32 1.1754944e-38, %v4354
        %v4356 = vsel %vm4353, %v4355, %v4351
        %v4357 = vmul.f32 1.0, %v4356
        %v4358 = vrcp.pop %v4266
        %v4359 = vmul.f32 %v4266, %v4358
        %v4360 = vsub.f32 1.0, %v4359
        %v4361 = vmul.f32 %v4358, %v4360
        %v4362 = vadd.f32 %v4358, %v4361
        %vm4363 = vweird.f32 %v4266
        %vm4364 = vweird.f32 %v4358
        %vm4365 = vmor %vm4363, %vm4364
        %v4366 = vsel %vm4365, %v4358, %v4362
        %v4367 = vand.u32 2147483647, %v4266
        %vm4368 = vcmp.eq.f32.partialorder %v4367, 8.507059e+37
        %v4369 = vand.u32 %v4266, 2147483648
        %v4370 = vor.u32 1.1754944e-38, %v4369
        %v4371 = vsel %vm4368, %v4370, %v4366
        %v4372 = vmul.f32 1.0, %v4371
        %v4373 = vrcp.pop %v4267
        %v4374 = vmul.f32 %v4267, %v4373
        %v4375 = vsub.f32 1.0, %v4374
        %v4376 = vmul.f32 %v4373, %v4375
        %v4377 = vadd.f32 %v4373, %v4376
        %vm4378 = vweird.f32 %v4267
        %vm4379 = vweird.f32 %v4373
        %vm4380 = vmor %vm4378, %vm4379
        %v4381 = vsel %vm4380, %v4373, %v4377
        %v4382 = vand.u32 2147483647, %v4267
        %vm4383 = vcmp.eq.f32.partialorder %v4382, 8.507059e+37
        %v4384 = vand.u32 %v4267, 2147483648
        %v4385 = vor.u32 1.1754944e-38, %v4384
        %v4386 = vsel %vm4383, %v4385, %v4381
        %v4387 = vmul.f32 1.0, %v4386
        %v4388 = vperm.slane %v4282, 0
        %v4389 = vperm.slane %v4297, 0
        %v4390 = vperm.slane %v4312, 0
        %v4391 = vperm.slane %v4327, 0
        %v4392 = vperm.slane %v4342, 0
        %v4393 = vperm.slane %v4357, 0
        %v4394 = vperm.slane %v4372, 0
        %v4395 = vperm.slane %v4387, 0
        %v4396 = vmul.f32 %v3576, %v4388
        %v4397 = vmul.f32 %v3577, %v4389
        %v4398 = vmul.f32 %v3578, %v4390
        %v4399 = vmul.f32 %v3579, %v4391
        %v4400 = vmul.f32 %v3580, %v4392
        %v4401 = vmul.f32 %v3581, %v4393
        %v4402 = vmul.f32 %v3582, %v4394
        %v4403 = vmul.f32 %v3583, %v4395
        %v4404 = vmul.f32 %v3584, %v4388
        %v4405 = vmul.f32 %v3585, %v4389
        %v4406 = vmul.f32 %v3586, %v4390
        %v4407 = vmul.f32 %v3587, %v4391
        %v4408 = vmul.f32 %v3588, %v4392
        %v4409 = vmul.f32 %v3589, %v4393
        %v4410 = vmul.f32 %v3590, %v4394
        %v4411 = vmul.f32 %v3591, %v4395
        %v4412 = vmul.f32 %v4396, %v2679
        %v4413 = vmul.f32 %v4397, %v2725
        %v4414 = vmul.f32 %v4398, %v2771
        %v4415 = vmul.f32 %v4399, %v2817
        %v4416 = vmul.f32 %v4400, %v2863
        %v4417 = vmul.f32 %v4401, %v2909
        %v4418 = vmul.f32 %v4402, %v2955
        %v4419 = vmul.f32 %v4403, %v3001
        %v4420 = vmul.f32 %v4404, %v2682
        %v4421 = vmul.f32 %v4405, %v2728
        %v4422 = vmul.f32 %v4406, %v2774
        %v4423 = vmul.f32 %v4407, %v2820
        %v4424 = vmul.f32 %v4408, %v2866
        %v4425 = vmul.f32 %v4409, %v2912
        %v4426 = vmul.f32 %v4410, %v2958
        %v4427 = vmul.f32 %v4411, %v3004
        %v4428 = vadd.f32 %v4412, %v372
        %v4429 = vadd.f32 %v4413, %v373
        %v4430 = vadd.f32 %v4414, %v374
        %v4431 = vadd.f32 %v4415, %v375
        %v4432 = vadd.f32 %v4416, %v376
        %v4433 = vadd.f32 %v4417, %v377
        %v4434 = vadd.f32 %v4418, %v378
        %v4435 = vadd.f32 %v4419, %v379
        %v4436 = vadd.f32 %v4420, %v380
        %v4437 = vadd.f32 %v4421, %v381
        %v4438 = vadd.f32 %v4422, %v382
        %v4439 = vadd.f32 %v4423, %v383
        %v4440 = vadd.f32 %v4424, %v384
        %v4441 = vadd.f32 %v4425, %v385
        %v4442 = vadd.f32 %v4426, %v386
        %v4443 = vadd.f32 %v4427, %v387
        %v4444 = vmax.f32 %v4428, 0.0
        %v4445 = vmax.f32 %v4429, 0.0
        %v4446 = vmax.f32 %v4430, 0.0
        %v4447 = vmax.f32 %v4431, 0.0
        %v4448 = vmax.f32 %v4432, 0.0
        %v4449 = vmax.f32 %v4433, 0.0
        %v4450 = vmax.f32 %v4434, 0.0
        %v4451 = vmax.f32 %v4435, 0.0
        %v4452 = vmax.f32 %v4436, 0.0
        %v4453 = vmax.f32 %v4437, 0.0
        %v4454 = vmax.f32 %v4438, 0.0
        %v4455 = vmax.f32 %v4439, 0.0
        %v4456 = vmax.f32 %v4440, 0.0
        %v4457 = vmax.f32 %v4441, 0.0
        %v4458 = vmax.f32 %v4442, 0.0
        %v4459 = vmax.f32 %v4443, 0.0
        %4460 = vst [vmem:[%s369] sm:$0xff] %v4444
        %4461 = vst [vmem:[%s369 + $0x8] sm:$0xff] %v4445
        %4462 = vst [vmem:[%s369 + $0x10] sm:$0xff] %v4446
        %4463 = vst [vmem:[%s369 + $0x18] sm:$0xff] %v4447
        %4464 = vst [vmem:[%s369 + $0x20] sm:$0xff] %v4448
        %4465 = vst [vmem:[%s369 + $0x28] sm:$0xff] %v4449
        %4466 = vst [vmem:[%s369 + $0x30] sm:$0xff] %v4450
        %4467 = vst [vmem:[%s369 + $0x38] sm:$0xff] %v4451
        %4468 = vst [vmem:[%s369 + $0x40] sm:$0xff] %v4452
        %4469 = vst [vmem:[%s369 + $0x48] sm:$0xff] %v4453
        %4470 = vst [vmem:[%s369 + $0x50] sm:$0xff] %v4454
        %4471 = vst [vmem:[%s369 + $0x58] sm:$0xff] %v4455
        %4472 = vst [vmem:[%s369 + $0x60] sm:$0xff] %v4456
        %4473 = vst [vmem:[%s369 + $0x68] sm:$0xff] %v4457
        %4474 = vst [vmem:[%s369 + $0x70] sm:$0xff] %v4458
        %4475 = vst [vmem:[%s369 + $0x78] sm:$0xff] %v4459
        %s4476 = sand.u32 %s229, 1
        %s4477 = scalar_lea.sflag [#allocation5], %s4476
        %s4478 = sand.u32 %s229, 1
        %s4479 = smul.addr %s4478, 128
        %s4480 = scalar_lea.vmem [#allocation8], %s4479
        // Predicated region
        $region65: #{tpu_custom_call.1} parent=55 // pred_check
          %p4481 = pneg %p239
        $region66: #{tpu_custom_call.1} parent=55 // pred_check_branch
          %4483 = sbr.rel (%p4481) target = $region68
        $region67: #{tpu_custom_call.1} parent=55 // pred_region
          %s4484 = smul.u32 8, %s27
          %4486 = vsyncadd %s4477, 0
          %s4487 = smul.addr %s4484, 8
          %s4488 = scalar_lea.hbm %s9, %s4487
          %s4489 = sshll.u32 %s4480, 4
          %s4490 = int_to_ptr.vmem [resolvable:$true] %s4489
          %s4491 = sshll.u32 %s4488, 4
          %s4492 = int_to_ptr.hbm [resolvable:$true] %s4491
          %4497 = dma.vmem_to_hbm [thread:$0]  %s4490, 2048, %s4492, %s4477, 1024, 2048, 64
        $region68: #{tpu_custom_call.1} parent=55 // pred_fallthru
          _
      $region56: #{tpu_custom_call.1} parent=5 // pred_fallthru
        _
      %p4498 = scmp.le.s32.totalorder 2, %s22
      // Predicated region
      $region69: #{tpu_custom_call.1} parent=5 // pred_check
        %p4499 = pneg %p4498
      $region70: #{tpu_custom_call.1} parent=5 // pred_check_branch
        %4501 = sbr.rel (%p4499) target = $region72
      $region71: #{tpu_custom_call.1} parent=5 // pred_region
        %s4502 = ssub.s32 %s22, 2
        // Predicated region
        $region73: #{tpu_custom_call.1} parent=71 // pred_check
          %p4503 = pneg %p245
        $region74: #{tpu_custom_call.1} parent=71 // pred_check_branch
          %4505 = sbr.rel (%p4503) target = $region76
        $region75: #{tpu_custom_call.1} parent=71 // pred_region
          %s4506 = sand.u32 %s230, 1
          %s4507 = scalar_lea.sflag [#allocation5], %s4506
          %s4508 = sand.u32 %s230, 1
          %s4509 = smul.addr %s4508, 128
          %s4510 = scalar_lea.vmem [#allocation8], %s4509
          %4512 = dma.done %s4507, 2048
        $region76: #{tpu_custom_call.1} parent=71 // pred_fallthru
          _
      $region72: #{tpu_custom_call.1} parent=5 // pred_fallthru
        _
    $region6: #{tpu_custom_call.1} parent=1 // loop_footer
      %s26 = sadd.s32 1, %s22
    $region7: #{tpu_custom_call.1} parent=1 // loop_footer_branch
      %21 = sbr.rel target = $region3
    $region8: #{tpu_custom_call.1} parent=1 // loop_exit
      _
    %4513 = vsyncpa [#allocation4], 1
    %s4514 = scalar_lea.sflag [#allocation4], 1
    %4515 = vsyncpa %s4514, 1
    %4516 = vsyncpa [#allocation7], 1
    %4517 = vsyncpa [#allocation5], 1
    %s4518 = scalar_lea.sflag [#allocation5], 1
    %4519 = vsyncpa %s4518, 1

</llo_original>
